<compile_context>
chip_gen: v5e
topology: v5e:2x2
jax: 0.10.0
libtpu: 0.0.40
codegen_flags: <defaults>
</compile_context>

<pallas_src>
import jax
import jax.numpy as jnp
from jax import lax
from jax.experimental import pallas as pl
from jax.experimental.pallas import tpu as pltpu

LRELU = 0.1


def _erb_kernel(x_mid_ref, x_top_ref, x_bot_ref,
                w1_ref, b1_ref, w2_ref, b2_ref,
                out_ref, xs_ref, ys_ref):
    # x_mid_ref : (1, TH, W, C)   unpadded input rows of this row tile (f32)
    # x_top_ref : (1, 2,  W, C)   2 halo rows above (junk on the first tile)
    # x_bot_ref : (1, 2,  W, C)   2 halo rows below (junk on the last tile)
    # w*_ref    : (9, C, Cp)      per-tap conv weights, tap index = kh*3 + kw
    # b*_ref    : (1, Cp)         biases zero-padded to Cp (f32)
    # out_ref   : (1, TH, W, C)   C-wide output tile (f32)
    # xs_ref    : (TH+4, W, C)    staged input rows + halos (compute dtype)
    # ys_ref    : (TH+2, W, C)    intermediate conv1 rows   (compute dtype)
    _, TH, W, C = x_mid_ref.shape
    HP1 = TH + 2                       # conv1 rows (recomputed 1-row halo/side)
    cdt = xs_ref.dtype

    i = pl.program_id(1)
    last = pl.num_programs(1) - 1

    # ---- stage the input rows (+ 2-row halos) into the cdt scratch ----------
    xs_ref[0:2] = x_top_ref[0].astype(cdt)
    xs_ref[2:TH + 2] = x_mid_ref[0].astype(cdt)
    xs_ref[TH + 2:TH + 4] = x_bot_ref[0].astype(cdt)

    @pl.when(i == 0)                   # top halo rows lie outside the image
    def _():
        xs_ref[0:2] = jnp.zeros((2, W, C), cdt)

    @pl.when(i == last)                # bottom halo rows lie outside the image
    def _():
        xs_ref[TH + 2:TH + 4] = jnp.zeros((2, W, C), cdt)

    def conv3x3(src_ref, rows_out, w_ref):
        """3x3 SAME conv as 9 accumulated K=C MXU matmuls -> (rows_out*W, Cp) f32.

        The kh taps are aligned row-plane slices of the flattened tile; the kw
        +-1 column shifts are applied to the per-kw f32 accumulators with a
        sublane pltpu.roll + image-edge mask (no shifted input copies).
        """
        R, Wl, Cl = src_ref.shape
        x2d = src_ref[...].reshape(R * Wl, Cl)
        lhs = [x2d[kh * Wl:(kh + rows_out) * Wl] for kh in range(3)]

        q = []                                        # one accumulator per kw
        for kw in range(3):
            acc = None
            for kh in range(3):
                part = jnp.dot(lhs[kh], w_ref[kh * 3 + kw],
                               preferred_element_type=jnp.float32)
                acc = part if acc is None else acc + part
            q.append(acc)

        M = rows_out * Wl
        col = lax.broadcasted_iota(jnp.int32, (rows_out, Wl, 1), 1).reshape(M, 1)
        # kw=0 needs input column w-1  -> roll(+1), zero at the left image edge.
        left = jnp.where(col > 0, pltpu.roll(q[0], shift=1, axis=0), 0.0)
        # kw=2 needs input column w+1  -> roll(-1) == roll(M-1), zero at the
        # right image edge.
        right = jnp.where(col < Wl - 1, pltpu.roll(q[2], shift=M - 1, axis=0), 0.0)
        return q[1] + left + right

    # ---- conv1 over TH+2 rows (recomputed 1-row halo), bias + LeakyReLU -----
    y = conv3x3(xs_ref, HP1, w1_ref) + b1_ref[...]          # (HP1*W, Cp) f32
    y = jnp.where(y >= 0, y, LRELU * y)
    ys_ref[...] = y[:, :C].reshape(HP1, W, C).astype(cdt)

    # Intermediate halo rows outside the image are SAME-padding zeros for
    # conv2 (not lrelu(bias)); fix exactly those rows with tiny guarded stores.
    @pl.when(i == 0)
    def _():
        ys_ref[0:1] = jnp.zeros((1, W, C), cdt)

    @pl.when(i == last)
    def _():
        ys_ref[HP1 - 1:HP1] = jnp.zeros((1, W, C), cdt)

    # ---- conv2 over the TH output rows, bias, C-wide store ------------------
    out = conv3x3(ys_ref, TH, w2_ref) + b2_ref[...]          # (TH*W, Cp) f32
    out_ref[0] = out[:, :C].reshape(TH, W, C).astype(out_ref.dtype)


def _pick_row_tile(H, N, row_tile):
    """Largest even divisor of H <= row_tile, with >= 2 total grid steps when
    possible (keeps both v7x TensorCores busy even at batch 1)."""
    divs = sorted((t for t in range(2, H + 1, 2) if H % t == 0), reverse=True)
    if not divs:
        return H
    fit = [t for t in divs if t <= row_tile]
    th = fit[0] if fit else divs[-1]
    if N * (H // th) < 2:
        for t in divs:
            if N * (H // t) >= 2:
                th = t
                break
    return th


def erb_forward(x_nchw, w1, b1, w2, b2, *, row_tile=16,
                compute_dtype=jnp.bfloat16,
                vmem_limit_bytes=56 * 1024 * 1024):
    """ERB forward: conv3x3 -> LeakyReLU(0.1) -> conv3x3 (SAME, with bias).

    x_nchw : (N, C, H, W) f32 (PyTorch layout); w1, w2: (3,3,C,C) HWIO;
    b1, b2 : (C,).  compute_dtype controls the MXU-operand / scratch dtype
    (bf16 is the fast path on every TPU generation; accumulation, bias and
    LeakyReLU always stay f32).  For good utilisation C should be >= ~64.
    """
    N, C, H, W = x_nchw.shape
    if W % 8 != 0:
        raise ValueError("erb_forward requires W % 8 == 0 (sublane alignment)")
    if H % 2 != 0:
        raise ValueError("erb_forward requires even H (2-row halo blocks)")
    Cp = 128 * ((C + 127) // 128)          # lane-dense accumulator channels

    TH = _pick_row_tile(H, N, row_tile)
    n_tiles = H // TH

    # Layout plumbing only (keep the surrounding model NHWC to drop these).
    x_nhwc = jnp.transpose(x_nchw, (0, 2, 3, 1)).astype(jnp.float32)

    def pack_w(w):                         # (3,3,Cin,Cout) HWIO -> (9, C, Cp)
        wp = jnp.zeros((3, 3, C, Cp), jnp.float32).at[..., :C].set(
            w.astype(jnp.float32))
        return wp.reshape(9, C, Cp).astype(compute_dtype)

    def pack_b(b):                         # (C,) -> (1, Cp) f32
        return jnp.zeros((1, Cp), jnp.float32).at[0, :C].set(
            b.astype(jnp.float32))

    w1p, b1p = pack_w(w1), pack_b(b1)
    w2p, b2p = pack_w(w2), pack_b(b2)

    hb = TH // 2                           # halo blocks are 2 rows tall
    last_hblk = H // 2 - 1

    def mid_map(n, i):
        return (n, i, 0, 0)

    def top_map(n, i):                     # rows [i*TH-2, i*TH) (clamped/masked)
        return (n, jnp.maximum(i * hb - 1, 0), 0, 0)

    def bot_map(n, i):                     # rows [i*TH+TH, i*TH+TH+2) (clamped)
        return (n, jnp.minimum(i * hb + hb, last_hblk), 0, 0)

    def w_map(n, i):
        return (0, 0, 0)

    def b_map(n, i):
        return (0, 0)

    itemsize = jnp.dtype(compute_dtype).itemsize
    cost = pl.CostEstimate(
        flops=2 * 2 * N * H * W * 9 * C * Cp,
        transcendentals=0,
        bytes_accessed=int(N * H * W * C * 4 * (1.0 + (TH + 4) / TH)
                           + 2 * (9 * C * Cp + Cp) * itemsize),
    )

    out_nhwc = pl.pallas_call(
        _erb_kernel,
        out_shape=jax.ShapeDtypeStruct((N, H, W, C), jnp.float32),
        grid_spec=pltpu.PrefetchScalarGridSpec(
            num_scalar_prefetch=0,
            grid=(N, n_tiles),
            in_specs=[
                pl.BlockSpec((1, TH, W, C), mid_map),
                pl.BlockSpec((1, 2, W, C), top_map),
                pl.BlockSpec((1, 2, W, C), bot_map),
                # Constant block index: DMA'd once, stays resident across the
                # whole grid (extra pipeline buffer is negligible).
                pl.BlockSpec((9, C, Cp), w_map),
                pl.BlockSpec((1, Cp), b_map),
                pl.BlockSpec((9, C, Cp), w_map),
                pl.BlockSpec((1, Cp), b_map),
            ],
            out_specs=pl.BlockSpec((1, TH, W, C), mid_map),
            scratch_shapes=[
                pltpu.VMEM((TH + 4, W, C), compute_dtype),   # staged input rows
                pltpu.VMEM((TH + 2, W, C), compute_dtype),   # intermediate rows
            ],
        ),
        compiler_params=pltpu.CompilerParams(
            dimension_semantics=("parallel", "parallel"),
            vmem_limit_bytes=vmem_limit_bytes),
        cost_estimate=cost,
    )(x_nhwc, x_nhwc, x_nhwc, w1p, b1p, w2p, b2p)

    return jnp.transpose(out_nhwc, (0, 3, 1, 2))


def _reference_erb(x_nchw, w1, b1, w2, b2):
    """Pure-JAX reference using lax.conv_general_dilated (NHWC/HWIO)."""
    x = jnp.transpose(x_nchw, (0, 2, 3, 1))
    dn = ("NHWC", "HWIO", "NHWC")
    y = lax.conv_general_dilated(x, w1, (1, 1), "SAME", dimension_numbers=dn)
    y = y + b1
    y = jnp.where(y >= 0, y, LRELU * y)
    y = lax.conv_general_dilated(y, w2, (1, 1), "SAME", dimension_numbers=dn)
    y = y + b2
    return jnp.transpose(y, (0, 3, 1, 2))


if __name__ == "__main__":
    key = jax.random.PRNGKey(0)
    N, C, H, W = 2, 4, 16, 16  # small demo shapes (n_feats = C = 4)

    k_x, k_w1, k_b1, k_w2, k_b2 = jax.random.split(key, 5)
    x = jax.random.normal(k_x, (N, C, H, W), dtype=jnp.float32)

    # PyTorch Conv2d init range; weights stored directly in HWIO = (3,3,Cin,Cout).
    fan_in = C * 3 * 3
    bound = 1.0 / (fan_in ** 0.5)
    w1 = jax.random.uniform(k_w1, (3, 3, C, C), jnp.float32, -bound, bound)
    b1 = jax.random.uniform(k_b1, (C,), jnp.float32, -bound, bound)
    w2 = jax.random.uniform(k_w2, (3, 3, C, C), jnp.float32, -bound, bound)
    b2 = jax.random.uniform(k_b2, (C,), jnp.float32, -bound, bound)

    ref = jax.block_until_ready(_reference_erb(x, w1, b1, w2, b2))

    # f32 MXU-operand path: strict tolerance (one row tile per image here).
    out_f32 = jax.block_until_ready(
        erb_forward(x, w1, b1, w2, b2, compute_dtype=jnp.float32))
    assert out_f32.shape == (N, C, H, W)
    assert float(jnp.max(jnp.abs(out_f32 - ref))) < 1e-4

    # Multiple row tiles (interior tiles exercise both halos).
    out_t4 = jax.block_until_ready(
        erb_forward(x, w1, b1, w2, b2, row_tile=4, compute_dtype=jnp.float32))
    assert float(jnp.max(jnp.abs(out_t4 - ref))) < 1e-4

    out_t8 = jax.block_until_ready(
        erb_forward(x, w1, b1, w2, b2, row_tile=8, compute_dtype=jnp.float32))
    assert float(jnp.max(jnp.abs(out_t8 - ref))) < 1e-4

    # Default bf16 MXU-operand fast path (all TPU generations): loose tolerance.
    out_bf16 = jax.block_until_ready(erb_forward(x, w1, b1, w2, b2))
    assert float(jnp.max(jnp.abs(out_bf16 - ref))) < 0.15

    print("KERNEL_OK")
</pallas_src>

<mosaic_0001>
module attributes {stable_mosaic.version = 11 : i64} {
  func.func @_erb_kernel(%arg0: i32, %arg1: i32, %arg2: memref<1x16x16x4xf32, #tpu.memory_space<vmem>>, %arg3: memref<1x2x16x4xf32, #tpu.memory_space<vmem>>, %arg4: memref<1x2x16x4xf32, #tpu.memory_space<vmem>>, %arg5: memref<9x4x128xf32, #tpu.memory_space<vmem>>, %arg6: memref<1x128xf32, #tpu.memory_space<vmem>>, %arg7: memref<9x4x128xf32, #tpu.memory_space<vmem>>, %arg8: memref<1x128xf32, #tpu.memory_space<vmem>>, %arg9: memref<1x16x16x4xf32, #tpu.memory_space<vmem>>, %arg10: memref<20x16x4xf32, #tpu.memory_space<vmem>>, %arg11: memref<18x16x4xf32, #tpu.memory_space<vmem>>) attributes {dimension_semantics = [#tpu.dimension_semantics<parallel>, #tpu.dimension_semantics<parallel>], iteration_bounds = array<i64: 2, 1>, scalar_prefetch = 0 : i64, scratch_operands = 2 : i64, tpu.core_type = #tpu.core_type<tc>, window_params = [{transform_indices = @transform_0, window_bounds = array<i64: 1, 16, 16, 4>}, {transform_indices = @transform_1, window_bounds = array<i64: 1, 2, 16, 4>}, {transform_indices = @transform_2, window_bounds = array<i64: 1, 2, 16, 4>}, {pipeline_mode = #tpu.pipeline_mode<synchronous>, transform_indices = @transform_3, window_bounds = array<i64: 9, 4, 128>}, {pipeline_mode = #tpu.pipeline_mode<synchronous>, transform_indices = @transform_4, window_bounds = array<i64: 1, 128>}, {pipeline_mode = #tpu.pipeline_mode<synchronous>, transform_indices = @transform_5, window_bounds = array<i64: 9, 4, 128>}, {pipeline_mode = #tpu.pipeline_mode<synchronous>, transform_indices = @transform_6, window_bounds = array<i64: 1, 128>}, {transform_indices = @transform_7, window_bounds = array<i64: 1, 16, 16, 4>}]} {
    %c0 = arith.constant 0 : index
    %c0_0 = arith.constant 0 : index
    %c0_1 = arith.constant 0 : index
    %c0_2 = arith.constant 0 : index
    %0 = vector.load %arg3[%c0, %c0_0, %c0_1, %c0_2] : memref<1x2x16x4xf32, #tpu.memory_space<vmem>>, vector<1x2x16x4xf32>
    %1 = vector.shape_cast %0 : vector<1x2x16x4xf32> to vector<2x16x4xf32>
    %c0_3 = arith.constant 0 : index
    %c0_4 = arith.constant 0 : index
    %c0_5 = arith.constant 0 : index
    %2 = vector.load %arg10[%c0_3, %c0_4, %c0_5] : memref<20x16x4xf32, #tpu.memory_space<vmem>>, vector<2x16x4xf32>
    tpu.vector_store %arg10[%c0_3, %c0_4, %c0_5], %1 {strides = array<i32>} : memref<20x16x4xf32, #tpu.memory_space<vmem>>, vector<2x16x4xf32>,
    %c0_6 = arith.constant 0 : index
    %c0_7 = arith.constant 0 : index
    %c0_8 = arith.constant 0 : index
    %c0_9 = arith.constant 0 : index
    %3 = vector.load %arg2[%c0_6, %c0_7, %c0_8, %c0_9] : memref<1x16x16x4xf32, #tpu.memory_space<vmem>>, vector<1x16x16x4xf32>
    %4 = vector.shape_cast %3 : vector<1x16x16x4xf32> to vector<16x16x4xf32>
    %c2 = arith.constant 2 : index
    %c0_10 = arith.constant 0 : index
    %c0_11 = arith.constant 0 : index
    %5 = vector.load %arg10[%c2, %c0_10, %c0_11] : memref<20x16x4xf32, #tpu.memory_space<vmem>>, vector<16x16x4xf32>
    tpu.vector_store %arg10[%c2, %c0_10, %c0_11], %4 {strides = array<i32>} : memref<20x16x4xf32, #tpu.memory_space<vmem>>, vector<16x16x4xf32>,
    %c0_12 = arith.constant 0 : index
    %c0_13 = arith.constant 0 : index
    %c0_14 = arith.constant 0 : index
    %c0_15 = arith.constant 0 : index
    %6 = vector.load %arg4[%c0_12, %c0_13, %c0_14, %c0_15] : memref<1x2x16x4xf32, #tpu.memory_space<vmem>>, vector<1x2x16x4xf32>
    %7 = vector.shape_cast %6 : vector<1x2x16x4xf32> to vector<2x16x4xf32>
    %c18 = arith.constant 18 : index
    %c0_16 = arith.constant 0 : index
    %c0_17 = arith.constant 0 : index
    %8 = vector.load %arg10[%c18, %c0_16, %c0_17] : memref<20x16x4xf32, #tpu.memory_space<vmem>>, vector<2x16x4xf32>
    tpu.vector_store %arg10[%c18, %c0_16, %c0_17], %7 {strides = array<i32>} : memref<20x16x4xf32, #tpu.memory_space<vmem>>, vector<2x16x4xf32>,
    %c0_i32 = arith.constant 0 : i32
    %9 = arith.cmpi eq, %arg1, %c0_i32 : i32
    %10 = arith.extui %9 : i1 to i32
    %c0_i32_18 = arith.constant 0 : i32
    %11 = arith.cmpi ne, %10, %c0_i32_18 : i32
    scf.if %11 {
      %cst_116 = arith.constant 0.000000e+00 : f32
      %152 = vector.broadcast %cst_116 : f32 to vector<2x16x4xf32>
      %c0_117 = arith.constant 0 : index
      %c0_118 = arith.constant 0 : index
      %c0_119 = arith.constant 0 : index
      %153 = vector.load %arg10[%c0_117, %c0_118, %c0_119] : memref<20x16x4xf32, #tpu.memory_space<vmem>>, vector<2x16x4xf32>
      tpu.vector_store %arg10[%c0_117, %c0_118, %c0_119], %152 {strides = array<i32>} : memref<20x16x4xf32, #tpu.memory_space<vmem>>, vector<2x16x4xf32>,
    } else {
    }
    %c0_i32_19 = arith.constant 0 : i32
    %12 = arith.cmpi eq, %arg1, %c0_i32_19 : i32
    %13 = arith.extui %12 : i1 to i32
    %c0_i32_20 = arith.constant 0 : i32
    %14 = arith.cmpi ne, %13, %c0_i32_20 : i32
    scf.if %14 {
      %cst_116 = arith.constant 0.000000e+00 : f32
      %152 = vector.broadcast %cst_116 : f32 to vector<2x16x4xf32>
      %c18_117 = arith.constant 18 : index
      %c0_118 = arith.constant 0 : index
      %c0_119 = arith.constant 0 : index
      %153 = vector.load %arg10[%c18_117, %c0_118, %c0_119] : memref<20x16x4xf32, #tpu.memory_space<vmem>>, vector<2x16x4xf32>
      tpu.vector_store %arg10[%c18_117, %c0_118, %c0_119], %152 {strides = array<i32>} : memref<20x16x4xf32, #tpu.memory_space<vmem>>, vector<2x16x4xf32>,
    } else {
    }
    %c0_21 = arith.constant 0 : index
    %c0_22 = arith.constant 0 : index
    %c0_23 = arith.constant 0 : index
    %15 = vector.load %arg10[%c0_21, %c0_22, %c0_23] : memref<20x16x4xf32, #tpu.memory_space<vmem>>, vector<20x16x4xf32>
    %16 = vector.shape_cast %15 : vector<20x16x4xf32> to vector<320x4xf32>
    %17 = vector.extract_strided_slice %16 {offsets = [0, 0], sizes = [288, 4], strides = [1, 1]} : vector<320x4xf32> to vector<288x4xf32>
    %18 = vector.extract_strided_slice %16 {offsets = [16, 0], sizes = [288, 4], strides = [1, 1]} : vector<320x4xf32> to vector<288x4xf32>
    %19 = vector.extract_strided_slice %16 {offsets = [32, 0], sizes = [288, 4], strides = [1, 1]} : vector<320x4xf32> to vector<288x4xf32>
    %c0_24 = arith.constant 0 : index
    %c0_25 = arith.constant 0 : index
    %c0_26 = arith.constant 0 : index
    %20 = vector.load %arg5[%c0_24, %c0_25, %c0_26] : memref<9x4x128xf32, #tpu.memory_space<vmem>>, vector<1x4x128xf32>
    %21 = vector.shape_cast %20 : vector<1x4x128xf32> to vector<4x128xf32>
    %cst = arith.constant dense<0.000000e+00> : vector<288x128xf32>
    %22 = tpu.matmul %17, %21, %cst {dimension_numbers = #tpu.dot_dimension_numbers<[1], [0], [0], [1], [0, 0, 1, 1], [], []>} : vector<288x4xf32>, vector<4x128xf32>, vector<288x128xf32> -> vector<288x128xf32>
    %c3 = arith.constant 3 : index
    %c0_27 = arith.constant 0 : index
    %c0_28 = arith.constant 0 : index
    %23 = vector.load %arg5[%c3, %c0_27, %c0_28] : memref<9x4x128xf32, #tpu.memory_space<vmem>>, vector<1x4x128xf32>
    %24 = vector.shape_cast %23 : vector<1x4x128xf32> to vector<4x128xf32>
    %cst_29 = arith.constant dense<0.000000e+00> : vector<288x128xf32>
    %25 = tpu.matmul %18, %24, %cst_29 {dimension_numbers = #tpu.dot_dimension_numbers<[1], [0], [0], [1], [0, 0, 1, 1], [], []>} : vector<288x4xf32>, vector<4x128xf32>, vector<288x128xf32> -> vector<288x128xf32>
    %26 = arith.addf %22, %25 : vector<288x128xf32>
    %c6 = arith.constant 6 : index
    %c0_30 = arith.constant 0 : index
    %c0_31 = arith.constant 0 : index
    %27 = vector.load %arg5[%c6, %c0_30, %c0_31] : memref<9x4x128xf32, #tpu.memory_space<vmem>>, vector<1x4x128xf32>
    %28 = vector.shape_cast %27 : vector<1x4x128xf32> to vector<4x128xf32>
    %cst_32 = arith.constant dense<0.000000e+00> : vector<288x128xf32>
    %29 = tpu.matmul %19, %28, %cst_32 {dimension_numbers = #tpu.dot_dimension_numbers<[1], [0], [0], [1], [0, 0, 1, 1], [], []>} : vector<288x4xf32>, vector<4x128xf32>, vector<288x128xf32> -> vector<288x128xf32>
    %30 = arith.addf %26, %29 : vector<288x128xf32>
    %c1 = arith.constant 1 : index
    %c0_33 = arith.constant 0 : index
    %c0_34 = arith.constant 0 : index
    %31 = vector.load %arg5[%c1, %c0_33, %c0_34] : memref<9x4x128xf32, #tpu.memory_space<vmem>>, vector<1x4x128xf32>
    %32 = vector.shape_cast %31 : vector<1x4x128xf32> to vector<4x128xf32>
    %cst_35 = arith.constant dense<0.000000e+00> : vector<288x128xf32>
    %33 = tpu.matmul %17, %32, %cst_35 {dimension_numbers = #tpu.dot_dimension_numbers<[1], [0], [0], [1], [0, 0, 1, 1], [], []>} : vector<288x4xf32>, vector<4x128xf32>, vector<288x128xf32> -> vector<288x128xf32>
    %c4 = arith.constant 4 : index
    %c0_36 = arith.constant 0 : index
    %c0_37 = arith.constant 0 : index
    %34 = vector.load %arg5[%c4, %c0_36, %c0_37] : memref<9x4x128xf32, #tpu.memory_space<vmem>>, vector<1x4x128xf32>
    %35 = vector.shape_cast %34 : vector<1x4x128xf32> to vector<4x128xf32>
    %cst_38 = arith.constant dense<0.000000e+00> : vector<288x128xf32>
    %36 = tpu.matmul %18, %35, %cst_38 {dimension_numbers = #tpu.dot_dimension_numbers<[1], [0], [0], [1], [0, 0, 1, 1], [], []>} : vector<288x4xf32>, vector<4x128xf32>, vector<288x128xf32> -> vector<288x128xf32>
    %37 = arith.addf %33, %36 : vector<288x128xf32>
    %c7 = arith.constant 7 : index
    %c0_39 = arith.constant 0 : index
    %c0_40 = arith.constant 0 : index
    %38 = vector.load %arg5[%c7, %c0_39, %c0_40] : memref<9x4x128xf32, #tpu.memory_space<vmem>>, vector<1x4x128xf32>
    %39 = vector.shape_cast %38 : vector<1x4x128xf32> to vector<4x128xf32>
    %cst_41 = arith.constant dense<0.000000e+00> : vector<288x128xf32>
    %40 = tpu.matmul %19, %39, %cst_41 {dimension_numbers = #tpu.dot_dimension_numbers<[1], [0], [0], [1], [0, 0, 1, 1], [], []>} : vector<288x4xf32>, vector<4x128xf32>, vector<288x128xf32> -> vector<288x128xf32>
    %41 = arith.addf %37, %40 : vector<288x128xf32>
    %c2_42 = arith.constant 2 : index
    %c0_43 = arith.constant 0 : index
    %c0_44 = arith.constant 0 : index
    %42 = vector.load %arg5[%c2_42, %c0_43, %c0_44] : memref<9x4x128xf32, #tpu.memory_space<vmem>>, vector<1x4x128xf32>
    %43 = vector.shape_cast %42 : vector<1x4x128xf32> to vector<4x128xf32>
    %cst_45 = arith.constant dense<0.000000e+00> : vector<288x128xf32>
    %44 = tpu.matmul %17, %43, %cst_45 {dimension_numbers = #tpu.dot_dimension_numbers<[1], [0], [0], [1], [0, 0, 1, 1], [], []>} : vector<288x4xf32>, vector<4x128xf32>, vector<288x128xf32> -> vector<288x128xf32>
    %c5 = arith.constant 5 : index
    %c0_46 = arith.constant 0 : index
    %c0_47 = arith.constant 0 : index
    %45 = vector.load %arg5[%c5, %c0_46, %c0_47] : memref<9x4x128xf32, #tpu.memory_space<vmem>>, vector<1x4x128xf32>
    %46 = vector.shape_cast %45 : vector<1x4x128xf32> to vector<4x128xf32>
    %cst_48 = arith.constant dense<0.000000e+00> : vector<288x128xf32>
    %47 = tpu.matmul %18, %46, %cst_48 {dimension_numbers = #tpu.dot_dimension_numbers<[1], [0], [0], [1], [0, 0, 1, 1], [], []>} : vector<288x4xf32>, vector<4x128xf32>, vector<288x128xf32> -> vector<288x128xf32>
    %48 = arith.addf %44, %47 : vector<288x128xf32>
    %c8 = arith.constant 8 : index
    %c0_49 = arith.constant 0 : index
    %c0_50 = arith.constant 0 : index
    %49 = vector.load %arg5[%c8, %c0_49, %c0_50] : memref<9x4x128xf32, #tpu.memory_space<vmem>>, vector<1x4x128xf32>
    %50 = vector.shape_cast %49 : vector<1x4x128xf32> to vector<4x128xf32>
    %cst_51 = arith.constant dense<0.000000e+00> : vector<288x128xf32>
    %51 = tpu.matmul %19, %50, %cst_51 {dimension_numbers = #tpu.dot_dimension_numbers<[1], [0], [0], [1], [0, 0, 1, 1], [], []>} : vector<288x4xf32>, vector<4x128xf32>, vector<288x128xf32> -> vector<288x128xf32>
    %52 = arith.addf %48, %51 : vector<288x128xf32>
    %53 = tpu.iota {dimensions = array<i32: 1>} : vector<18x16x1xi32>
    %54 = vector.shape_cast %53 : vector<18x16x1xi32> to vector<288x1xi32>
    %c0_i32_52 = arith.constant 0 : i32
    %55 = vector.broadcast %c0_i32_52 : i32 to vector<288x1xi32>
    %56 = arith.cmpi sgt, %54, %55 : vector<288x1xi32>
    %c1_i32 = arith.constant 1 : i32
    %57 = tpu.dynamic_rotate %30 by %c1_i32 dim 0 : vector<288x128xf32>, i32 -> vector<288x128xf32>
    %cst_53 = arith.constant 0.000000e+00 : f32
    %58 = vector.shape_cast %56 : vector<288x1xi1> to vector<288x1xi1>
    %59 = vector.broadcast %58 : vector<288x1xi1> to vector<288x128xi1>
    %60 = vector.broadcast %cst_53 : f32 to vector<288x128xf32>
    %61 = arith.select %59, %57, %60 : vector<288x128xi1>, vector<288x128xf32>
    %c15_i32 = arith.constant 15 : i32
    %62 = vector.broadcast %c15_i32 : i32 to vector<288x1xi32>
    %63 = arith.cmpi slt, %54, %62 : vector<288x1xi32>
    %c287_i32 = arith.constant 287 : i32
    %64 = tpu.dynamic_rotate %52 by %c287_i32 dim 0 : vector<288x128xf32>, i32 -> vector<288x128xf32>
    %cst_54 = arith.constant 0.000000e+00 : f32
    %65 = vector.shape_cast %63 : vector<288x1xi1> to vector<288x1xi1>
    %66 = vector.broadcast %65 : vector<288x1xi1> to vector<288x128xi1>
    %67 = vector.broadcast %cst_54 : f32 to vector<288x128xf32>
    %68 = arith.select %66, %64, %67 : vector<288x128xi1>, vector<288x128xf32>
    %69 = arith.addf %41, %61 : vector<288x128xf32>
    %70 = arith.addf %69, %68 : vector<288x128xf32>
    %c0_55 = arith.constant 0 : index
    %c0_56 = arith.constant 0 : index
    %71 = vector.load %arg6[%c0_55, %c0_56] : memref<1x128xf32, #tpu.memory_space<vmem>>, vector<1x128xf32>
    %72 = vector.broadcast %71 : vector<1x128xf32> to vector<288x128xf32>
    %73 = arith.addf %70, %72 : vector<288x128xf32>
    %cst_57 = arith.constant 0.000000e+00 : f32
    %74 = vector.broadcast %cst_57 : f32 to vector<288x128xf32>
    %75 = arith.cmpf oge, %73, %74 : vector<288x128xf32>
    %cst_58 = arith.constant 1.000000e-01 : f32
    %76 = vector.broadcast %cst_58 : f32 to vector<288x128xf32>
    %77 = arith.mulf %76, %73 : vector<288x128xf32>
    %78 = arith.select %75, %73, %77 : vector<288x128xi1>, vector<288x128xf32>
    %79 = vector.extract_strided_slice %78 {offsets = [0, 0], sizes = [288, 4], strides = [1, 1]} : vector<288x128xf32> to vector<288x4xf32>
    %80 = vector.shape_cast %79 : vector<288x4xf32> to vector<18x16x4xf32>
    %c0_59 = arith.constant 0 : index
    %c0_60 = arith.constant 0 : index
    %c0_61 = arith.constant 0 : index
    %81 = vector.load %arg11[%c0_59, %c0_60, %c0_61] : memref<18x16x4xf32, #tpu.memory_space<vmem>>, vector<18x16x4xf32>
    tpu.vector_store %arg11[%c0_59, %c0_60, %c0_61], %80 {strides = array<i32>} : memref<18x16x4xf32, #tpu.memory_space<vmem>>, vector<18x16x4xf32>,
    %c0_i32_62 = arith.constant 0 : i32
    %82 = arith.cmpi eq, %arg1, %c0_i32_62 : i32
    %83 = arith.extui %82 : i1 to i32
    %c0_i32_63 = arith.constant 0 : i32
    %84 = arith.cmpi ne, %83, %c0_i32_63 : i32
    scf.if %84 {
      %cst_116 = arith.constant 0.000000e+00 : f32
      %152 = vector.broadcast %cst_116 : f32 to vector<1x16x4xf32>
      %c0_117 = arith.constant 0 : index
      %c0_118 = arith.constant 0 : index
      %c0_119 = arith.constant 0 : index
      %153 = vector.load %arg11[%c0_117, %c0_118, %c0_119] : memref<18x16x4xf32, #tpu.memory_space<vmem>>, vector<1x16x4xf32>
      tpu.vector_store %arg11[%c0_117, %c0_118, %c0_119], %152 {strides = array<i32>} : memref<18x16x4xf32, #tpu.memory_space<vmem>>, vector<1x16x4xf32>,
    } else {
    }
    %c0_i32_64 = arith.constant 0 : i32
    %85 = arith.cmpi eq, %arg1, %c0_i32_64 : i32
    %86 = arith.extui %85 : i1 to i32
    %c0_i32_65 = arith.constant 0 : i32
    %87 = arith.cmpi ne, %86, %c0_i32_65 : i32
    scf.if %87 {
      %cst_116 = arith.constant 0.000000e+00 : f32
      %152 = vector.broadcast %cst_116 : f32 to vector<1x16x4xf32>
      %c17 = arith.constant 17 : index
      %c0_117 = arith.constant 0 : index
      %c0_118 = arith.constant 0 : index
      %153 = vector.load %arg11[%c17, %c0_117, %c0_118] : memref<18x16x4xf32, #tpu.memory_space<vmem>>, vector<1x16x4xf32>
      tpu.vector_store %arg11[%c17, %c0_117, %c0_118], %152 {strides = array<i32>} : memref<18x16x4xf32, #tpu.memory_space<vmem>>, vector<1x16x4xf32>,
    } else {
    }
    %c0_66 = arith.constant 0 : index
    %c0_67 = arith.constant 0 : index
    %c0_68 = arith.constant 0 : index
    %88 = vector.load %arg11[%c0_66, %c0_67, %c0_68] : memref<18x16x4xf32, #tpu.memory_space<vmem>>, vector<18x16x4xf32>
    %89 = vector.shape_cast %88 : vector<18x16x4xf32> to vector<288x4xf32>
    %90 = vector.extract_strided_slice %89 {offsets = [0, 0], sizes = [256, 4], strides = [1, 1]} : vector<288x4xf32> to vector<256x4xf32>
    %91 = vector.extract_strided_slice %89 {offsets = [16, 0], sizes = [256, 4], strides = [1, 1]} : vector<288x4xf32> to vector<256x4xf32>
    %92 = vector.extract_strided_slice %89 {offsets = [32, 0], sizes = [256, 4], strides = [1, 1]} : vector<288x4xf32> to vector<256x4xf32>
    %c0_69 = arith.constant 0 : index
    %c0_70 = arith.constant 0 : index
    %c0_71 = arith.constant 0 : index
    %93 = vector.load %arg7[%c0_69, %c0_70, %c0_71] : memref<9x4x128xf32, #tpu.memory_space<vmem>>, vector<1x4x128xf32>
    %94 = vector.shape_cast %93 : vector<1x4x128xf32> to vector<4x128xf32>
    %cst_72 = arith.constant dense<0.000000e+00> : vector<256x128xf32>
    %95 = tpu.matmul %90, %94, %cst_72 {dimension_numbers = #tpu.dot_dimension_numbers<[1], [0], [0], [1], [0, 0, 1, 1], [], []>} : vector<256x4xf32>, vector<4x128xf32>, vector<256x128xf32> -> vector<256x128xf32>
    %c3_73 = arith.constant 3 : index
    %c0_74 = arith.constant 0 : index
    %c0_75 = arith.constant 0 : index
    %96 = vector.load %arg7[%c3_73, %c0_74, %c0_75] : memref<9x4x128xf32, #tpu.memory_space<vmem>>, vector<1x4x128xf32>
    %97 = vector.shape_cast %96 : vector<1x4x128xf32> to vector<4x128xf32>
    %cst_76 = arith.constant dense<0.000000e+00> : vector<256x128xf32>
    %98 = tpu.matmul %91, %97, %cst_76 {dimension_numbers = #tpu.dot_dimension_numbers<[1], [0], [0], [1], [0, 0, 1, 1], [], []>} : vector<256x4xf32>, vector<4x128xf32>, vector<256x128xf32> -> vector<256x128xf32>
    %99 = arith.addf %95, %98 : vector<256x128xf32>
    %c6_77 = arith.constant 6 : index
    %c0_78 = arith.constant 0 : index
    %c0_79 = arith.constant 0 : index
    %100 = vector.load %arg7[%c6_77, %c0_78, %c0_79] : memref<9x4x128xf32, #tpu.memory_space<vmem>>, vector<1x4x128xf32>
    %101 = vector.shape_cast %100 : vector<1x4x128xf32> to vector<4x128xf32>
    %cst_80 = arith.constant dense<0.000000e+00> : vector<256x128xf32>
    %102 = tpu.matmul %92, %101, %cst_80 {dimension_numbers = #tpu.dot_dimension_numbers<[1], [0], [0], [1], [0, 0, 1, 1], [], []>} : vector<256x4xf32>, vector<4x128xf32>, vector<256x128xf32> -> vector<256x128xf32>
    %103 = arith.addf %99, %102 : vector<256x128xf32>
    %c1_81 = arith.constant 1 : index
    %c0_82 = arith.constant 0 : index
    %c0_83 = arith.constant 0 : index
    %104 = vector.load %arg7[%c1_81, %c0_82, %c0_83] : memref<9x4x128xf32, #tpu.memory_space<vmem>>, vector<1x4x128xf32>
    %105 = vector.shape_cast %104 : vector<1x4x128xf32> to vector<4x128xf32>
    %cst_84 = arith.constant dense<0.000000e+00> : vector<256x128xf32>
    %106 = tpu.matmul %90, %105, %cst_84 {dimension_numbers = #tpu.dot_dimension_numbers<[1], [0], [0], [1], [0, 0, 1, 1], [], []>} : vector<256x4xf32>, vector<4x128xf32>, vector<256x128xf32> -> vector<256x128xf32>
    %c4_85 = arith.constant 4 : index
    %c0_86 = arith.constant 0 : index
    %c0_87 = arith.constant 0 : index
    %107 = vector.load %arg7[%c4_85, %c0_86, %c0_87] : memref<9x4x128xf32, #tpu.memory_space<vmem>>, vector<1x4x128xf32>
    %108 = vector.shape_cast %107 : vector<1x4x128xf32> to vector<4x128xf32>
    %cst_88 = arith.constant dense<0.000000e+00> : vector<256x128xf32>
    %109 = tpu.matmul %91, %108, %cst_88 {dimension_numbers = #tpu.dot_dimension_numbers<[1], [0], [0], [1], [0, 0, 1, 1], [], []>} : vector<256x4xf32>, vector<4x128xf32>, vector<256x128xf32> -> vector<256x128xf32>
    %110 = arith.addf %106, %109 : vector<256x128xf32>
    %c7_89 = arith.constant 7 : index
    %c0_90 = arith.constant 0 : index
    %c0_91 = arith.constant 0 : index
    %111 = vector.load %arg7[%c7_89, %c0_90, %c0_91] : memref<9x4x128xf32, #tpu.memory_space<vmem>>, vector<1x4x128xf32>
    %112 = vector.shape_cast %111 : vector<1x4x128xf32> to vector<4x128xf32>
    %cst_92 = arith.constant dense<0.000000e+00> : vector<256x128xf32>
    %113 = tpu.matmul %92, %112, %cst_92 {dimension_numbers = #tpu.dot_dimension_numbers<[1], [0], [0], [1], [0, 0, 1, 1], [], []>} : vector<256x4xf32>, vector<4x128xf32>, vector<256x128xf32> -> vector<256x128xf32>
    %114 = arith.addf %110, %113 : vector<256x128xf32>
    %c2_93 = arith.constant 2 : index
    %c0_94 = arith.constant 0 : index
    %c0_95 = arith.constant 0 : index
    %115 = vector.load %arg7[%c2_93, %c0_94, %c0_95] : memref<9x4x128xf32, #tpu.memory_space<vmem>>, vector<1x4x128xf32>
    %116 = vector.shape_cast %115 : vector<1x4x128xf32> to vector<4x128xf32>
    %cst_96 = arith.constant dense<0.000000e+00> : vector<256x128xf32>
    %117 = tpu.matmul %90, %116, %cst_96 {dimension_numbers = #tpu.dot_dimension_numbers<[1], [0], [0], [1], [0, 0, 1, 1], [], []>} : vector<256x4xf32>, vector<4x128xf32>, vector<256x128xf32> -> vector<256x128xf32>
    %c5_97 = arith.constant 5 : index
    %c0_98 = arith.constant 0 : index
    %c0_99 = arith.constant 0 : index
    %118 = vector.load %arg7[%c5_97, %c0_98, %c0_99] : memref<9x4x128xf32, #tpu.memory_space<vmem>>, vector<1x4x128xf32>
    %119 = vector.shape_cast %118 : vector<1x4x128xf32> to vector<4x128xf32>
    %cst_100 = arith.constant dense<0.000000e+00> : vector<256x128xf32>
    %120 = tpu.matmul %91, %119, %cst_100 {dimension_numbers = #tpu.dot_dimension_numbers<[1], [0], [0], [1], [0, 0, 1, 1], [], []>} : vector<256x4xf32>, vector<4x128xf32>, vector<256x128xf32> -> vector<256x128xf32>
    %121 = arith.addf %117, %120 : vector<256x128xf32>
    %c8_101 = arith.constant 8 : index
    %c0_102 = arith.constant 0 : index
    %c0_103 = arith.constant 0 : index
    %122 = vector.load %arg7[%c8_101, %c0_102, %c0_103] : memref<9x4x128xf32, #tpu.memory_space<vmem>>, vector<1x4x128xf32>
    %123 = vector.shape_cast %122 : vector<1x4x128xf32> to vector<4x128xf32>
    %cst_104 = arith.constant dense<0.000000e+00> : vector<256x128xf32>
    %124 = tpu.matmul %92, %123, %cst_104 {dimension_numbers = #tpu.dot_dimension_numbers<[1], [0], [0], [1], [0, 0, 1, 1], [], []>} : vector<256x4xf32>, vector<4x128xf32>, vector<256x128xf32> -> vector<256x128xf32>
    %125 = arith.addf %121, %124 : vector<256x128xf32>
    %126 = tpu.iota {dimensions = array<i32: 1>} : vector<16x16x1xi32>
    %127 = vector.shape_cast %126 : vector<16x16x1xi32> to vector<256x1xi32>
    %c0_i32_105 = arith.constant 0 : i32
    %128 = vector.broadcast %c0_i32_105 : i32 to vector<256x1xi32>
    %129 = arith.cmpi sgt, %127, %128 : vector<256x1xi32>
    %c1_i32_106 = arith.constant 1 : i32
    %130 = tpu.dynamic_rotate %103 by %c1_i32_106 dim 0 : vector<256x128xf32>, i32 -> vector<256x128xf32>
    %cst_107 = arith.constant 0.000000e+00 : f32
    %131 = vector.shape_cast %129 : vector<256x1xi1> to vector<256x1xi1>
    %132 = vector.broadcast %131 : vector<256x1xi1> to vector<256x128xi1>
    %133 = vector.broadcast %cst_107 : f32 to vector<256x128xf32>
    %134 = arith.select %132, %130, %133 : vector<256x128xi1>, vector<256x128xf32>
    %c15_i32_108 = arith.constant 15 : i32
    %135 = vector.broadcast %c15_i32_108 : i32 to vector<256x1xi32>
    %136 = arith.cmpi slt, %127, %135 : vector<256x1xi32>
    %c255_i32 = arith.constant 255 : i32
    %137 = tpu.dynamic_rotate %125 by %c255_i32 dim 0 : vector<256x128xf32>, i32 -> vector<256x128xf32>
    %cst_109 = arith.constant 0.000000e+00 : f32
    %138 = vector.shape_cast %136 : vector<256x1xi1> to vector<256x1xi1>
    %139 = vector.broadcast %138 : vector<256x1xi1> to vector<256x128xi1>
    %140 = vector.broadcast %cst_109 : f32 to vector<256x128xf32>
    %141 = arith.select %139, %137, %140 : vector<256x128xi1>, vector<256x128xf32>
    %142 = arith.addf %114, %134 : vector<256x128xf32>
    %143 = arith.addf %142, %141 : vector<256x128xf32>
    %c0_110 = arith.constant 0 : index
    %c0_111 = arith.constant 0 : index
    %144 = vector.load %arg8[%c0_110, %c0_111] : memref<1x128xf32, #tpu.memory_space<vmem>>, vector<1x128xf32>
    %145 = vector.broadcast %144 : vector<1x128xf32> to vector<256x128xf32>
    %146 = arith.addf %143, %145 : vector<256x128xf32>
    %147 = vector.extract_strided_slice %146 {offsets = [0, 0], sizes = [256, 4], strides = [1, 1]} : vector<256x128xf32> to vector<256x4xf32>
    %148 = vector.shape_cast %147 : vector<256x4xf32> to vector<16x16x4xf32>
    %c0_112 = arith.constant 0 : index
    %c0_113 = arith.constant 0 : index
    %c0_114 = arith.constant 0 : index
    %c0_115 = arith.constant 0 : index
    %149 = vector.load %arg9[%c0_112, %c0_113, %c0_114, %c0_115] : memref<1x16x16x4xf32, #tpu.memory_space<vmem>>, vector<1x16x16x4xf32>
    %150 = vector.shape_cast %149 : vector<1x16x16x4xf32> to vector<16x16x4xf32>
    %151 = vector.shape_cast %148 : vector<16x16x4xf32> to vector<1x16x16x4xf32>
    tpu.vector_store %arg9[%c0_112, %c0_113, %c0_114, %c0_115], %151 {strides = array<i32>} : memref<1x16x16x4xf32, #tpu.memory_space<vmem>>, vector<1x16x16x4xf32>,
    return
  }
  func.func @transform_0(%arg0: i32, %arg1: i32) -> (i32, i32, i32, i32) {
    %c0_i32 = arith.constant 0 : i32
    %c0_i32_0 = arith.constant 0 : i32
    %c0_i32_1 = arith.constant 0 : i32
    return %arg0, %arg1, %c0_i32, %c0_i32_0 : i32, i32, i32, i32
  }
  func.func @transform_1(%arg0: i32, %arg1: i32) -> (i32, i32, i32, i32) {
    %c8_i32 = arith.constant 8 : i32
    %0 = arith.muli %arg1, %c8_i32 : i32
    %c1_i32 = arith.constant 1 : i32
    %1 = arith.subi %0, %c1_i32 : i32
    %c0_i32 = arith.constant 0 : i32
    %2 = arith.maxsi %1, %c0_i32 : i32
    %c0_i32_0 = arith.constant 0 : i32
    %c0_i32_1 = arith.constant 0 : i32
    %c0_i32_2 = arith.constant 0 : i32
    return %arg0, %2, %c0_i32_0, %c0_i32_1 : i32, i32, i32, i32
  }
  func.func @transform_2(%arg0: i32, %arg1: i32) -> (i32, i32, i32, i32) {
    %c8_i32 = arith.constant 8 : i32
    %0 = arith.muli %arg1, %c8_i32 : i32
    %c8_i32_0 = arith.constant 8 : i32
    %1 = arith.addi %0, %c8_i32_0 : i32
    %c7_i32 = arith.constant 7 : i32
    %2 = arith.minsi %1, %c7_i32 : i32
    %c0_i32 = arith.constant 0 : i32
    %c0_i32_1 = arith.constant 0 : i32
    %c0_i32_2 = arith.constant 0 : i32
    return %arg0, %2, %c0_i32, %c0_i32_1 : i32, i32, i32, i32
  }
  func.func @transform_3(%arg0: i32, %arg1: i32) -> (i32, i32, i32) {
    %c0_i32 = arith.constant 0 : i32
    %c0_i32_0 = arith.constant 0 : i32
    %c0_i32_1 = arith.constant 0 : i32
    %c0_i32_2 = arith.constant 0 : i32
    return %c0_i32, %c0_i32_0, %c0_i32_1 : i32, i32, i32
  }
  func.func @transform_4(%arg0: i32, %arg1: i32) -> (i32, i32) {
    %c0_i32 = arith.constant 0 : i32
    %c0_i32_0 = arith.constant 0 : i32
    %c0_i32_1 = arith.constant 0 : i32
    return %c0_i32, %c0_i32_0 : i32, i32
  }
  func.func @transform_5(%arg0: i32, %arg1: i32) -> (i32, i32, i32) {
    %c0_i32 = arith.constant 0 : i32
    %c0_i32_0 = arith.constant 0 : i32
    %c0_i32_1 = arith.constant 0 : i32
    %c0_i32_2 = arith.constant 0 : i32
    return %c0_i32, %c0_i32_0, %c0_i32_1 : i32, i32, i32
  }
  func.func @transform_6(%arg0: i32, %arg1: i32) -> (i32, i32) {
    %c0_i32 = arith.constant 0 : i32
    %c0_i32_0 = arith.constant 0 : i32
    %c0_i32_1 = arith.constant 0 : i32
    return %c0_i32, %c0_i32_0 : i32, i32
  }
  func.func @transform_7(%arg0: i32, %arg1: i32) -> (i32, i32, i32, i32) {
    %c0_i32 = arith.constant 0 : i32
    %c0_i32_0 = arith.constant 0 : i32
    %c0_i32_1 = arith.constant 0 : i32
    return %arg0, %arg1, %c0_i32, %c0_i32_0 : i32, i32, i32, i32
  }
}

</mosaic_0001>

<llo_original>
// kernel: tpu_custom_call.1
$region0: #{tpu_custom_call.1}
  #allocation0 [shape = 'u32[]', space=smem, size = 0x4, offset = 0x4, fixed_abs, tag = 'smem constant byte address 0x4 - core index']
  #allocation1 [shape = 'u32[72,128]{1,0:T(1,128)}', space=vmem, size = 0x9000, scoped, tag = 'internal scratch']
  #allocation2 [shape = 'f32[20,16,4]{2,1,0:T(8,128)}', space=vmem, size = 0x28000, scoped, tag = 'scratch operand']
  #allocation3 [shape = 'f32[18,16,4]{2,1,0:T(8,128)}', space=vmem, size = 0x24000, scoped, tag = 'scratch operand']
  %s0 = inlined_call_operand.vmem [shape: f32[2,16,16,4], index: 0, kind: input, shape index: {}]
  %s1 = inlined_call_operand.vmem [shape: f32[2,16,16,4], index: 1, kind: input, shape index: {}]
  %s2 = inlined_call_operand.vmem [shape: f32[2,16,16,4], index: 2, kind: input, shape index: {}]
  %s3 = inlined_call_operand.vmem [shape: f32[9,4,128], index: 3, kind: input, shape index: {}]
  %s4 = inlined_call_operand.vmem [shape: f32[1,128], index: 4, kind: input, shape index: {}]
  %s5 = inlined_call_operand.vmem [shape: f32[9,4,128], index: 5, kind: input, shape index: {}]
  %s6 = inlined_call_operand.vmem [shape: f32[1,128], index: 6, kind: input, shape index: {}]
  %s7 = inlined_call_operand.vmem [shape: f32[2,16,16,4], index: 7, kind: output, shape index: {}]
  %s8 = sld [smem:[#allocation0]]
  $region69: #{tpu_custom_call.1} parent=0
    _
  %s10 = ssub.s32 1, %s8
  %s11 = scalar_select 0, %s10, %s8
  loop: start=0, step=1, limit=4
  $region2: #{tpu_custom_call.1} parent=0 // loop_pre_header
    _
  $region3: #{tpu_custom_call.1} parent=0 // loop_header
    %s13 = sphi 0, %s17
    %p14 = scmp.ge.s32.totalorder %s13, 4
    %s20 = sphi 0, %s32
    %s21 = sphi 0, %s28
    %s22 = sphi 0, %s20
    %s23 = sphi 0, %s21
    %s24 = sphi 0, %s22
    %s25 = sphi 0, %s23
    %s37 = sphi 0, %s39
    %s40 = sphi 0, %s37
    %s41 = sphi 0, %s40
    %s57 = sphi 0, %s41
    %s73 = sphi 0, %s75
    %s76 = sphi 0, %s73
    %s77 = sphi 0, %s76
    %s93 = sphi 0, %s77
    %s109 = sphi 0, %s111
    %s112 = sphi 0, %s109
    %s113 = sphi 0, %s112
    %s129 = sphi 0, %s113
    %s133 = sphi 0, %s133
    %s135 = sphi 0, %s133
    %s136 = sphi 0, %s135
    %s150 = sphi 0, %s136
    %s154 = sphi 0, %s154
    %s156 = sphi 0, %s154
    %s157 = sphi 0, %s156
    %s171 = sphi 0, %s157
    %s175 = sphi 0, %s175
    %s177 = sphi 0, %s175
    %s178 = sphi 0, %s177
    %s192 = sphi 0, %s178
    %s196 = sphi 0, %s196
    %s198 = sphi 0, %s196
    %s199 = sphi 0, %s198
    %s213 = sphi 0, %s199
    %s221 = sphi 0, %s223
    %s224 = sphi 0, %s221
    %s225 = sphi 0, %s224
    %s241 = sphi 0, %s225
  $region4: #{tpu_custom_call.1} parent=0 // loop_header_branch
    %16 = sbr.rel (%p14) target = $region8
  $region5: #{tpu_custom_call.1} parent=0 // loop_body
    %s18 = ssub.s32 %s13, 1
    %s19 = ssub.s32 %s13, 2
    %s26 = sadd.s32 1, %s21
    %p27 = scmp.ge.s32.totalorder %s26, 1
    %s28 = scalar_select %p27, 0, %s26
    %s29 = sadd.s32 1, %s20
    %s30 = scalar_select %p27, %s29, %s20
    %p31 = scmp.ge.s32.totalorder %s30, 2
    %s32 = scalar_select %p31, 0, %s30
    %s33 = ssub.s32 %s20, %s32
    %s34 = ssub.s32 %s21, %s28
    %s35 = sor.u32 %s33, %s34
    %p36 = scmp.eq.s32.totalorder %s35, 0
    %s38 = sadd.s32 %s37, 1
    %s39 = scalar_select %p36, %s37, %s38
    %p42 = pneg %p36
    %p43 = scmp.eq.s32.totalorder %s13, 1
    %p44 = por %p42, %p43
    %p45 = scmp.ne.s32.totalorder %s37, %s40
    %p46 = scmp.eq.s32.totalorder %s13, 0
    %p47 = por %p45, %p46
    %p48 = scmp.ne.s32.totalorder %s37, %s40
    %p49 = scmp.eq.s32.totalorder %s18, 1
    %p50 = por %p48, %p49
    %p51 = scmp.ne.s32.totalorder %s40, %s41
    %p52 = scmp.eq.s32.totalorder %s18, 0
    %p53 = por %p51, %p52
    %p54 = scmp.ne.s32.totalorder %s40, %s41
    %p55 = scmp.eq.s32.totalorder %s19, 1
    %p56 = por %p54, %p55
    %p58 = scmp.ne.s32.totalorder %s41, %s57
    %p59 = scmp.eq.s32.totalorder %s19, 0
    %p60 = por %p58, %p59
    %s61 = smul.u32 %s21, 8
    %s62 = ssub.s32 %s61, 1
    %p63 = scmp.gt.s32.totalorder %s62, 0
    %s64 = scalar_select %p63, %s62, 0
    %s65 = smul.u32 %s28, 8
    %s66 = ssub.s32 %s65, 1
    %p67 = scmp.gt.s32.totalorder %s66, 0
    %s68 = scalar_select %p67, %s66, 0
    %s69 = ssub.s32 %s20, %s32
    %s70 = ssub.s32 %s64, %s68
    %s71 = sor.u32 %s69, %s70
    %p72 = scmp.eq.s32.totalorder %s71, 0
    %s74 = sadd.s32 %s73, 1
    %s75 = scalar_select %p72, %s73, %s74
    %p78 = pneg %p72
    %p79 = scmp.eq.s32.totalorder %s13, 1
    %p80 = por %p78, %p79
    %p81 = scmp.ne.s32.totalorder %s73, %s76
    %p82 = scmp.eq.s32.totalorder %s13, 0
    %p83 = por %p81, %p82
    %p84 = scmp.ne.s32.totalorder %s73, %s76
    %p85 = scmp.eq.s32.totalorder %s18, 1
    %p86 = por %p84, %p85
    %p87 = scmp.ne.s32.totalorder %s76, %s77
    %p88 = scmp.eq.s32.totalorder %s18, 0
    %p89 = por %p87, %p88
    %p90 = scmp.ne.s32.totalorder %s76, %s77
    %p91 = scmp.eq.s32.totalorder %s19, 1
    %p92 = por %p90, %p91
    %p94 = scmp.ne.s32.totalorder %s77, %s93
    %p95 = scmp.eq.s32.totalorder %s19, 0
    %p96 = por %p94, %p95
    %s97 = smul.u32 %s21, 8
    %s98 = sadd.s32 %s97, 8
    %p99 = scmp.lt.s32.totalorder %s98, 7
    %s100 = scalar_select %p99, %s98, 7
    %s101 = smul.u32 %s28, 8
    %s102 = sadd.s32 %s101, 8
    %p103 = scmp.lt.s32.totalorder %s102, 7
    %s104 = scalar_select %p103, %s102, 7
    %s105 = ssub.s32 %s20, %s32
    %s106 = ssub.s32 %s100, %s104
    %s107 = sor.u32 %s105, %s106
    %p108 = scmp.eq.s32.totalorder %s107, 0
    %s110 = sadd.s32 %s109, 1
    %s111 = scalar_select %p108, %s109, %s110
    %p114 = pneg %p108
    %p115 = scmp.eq.s32.totalorder %s13, 1
    %p116 = por %p114, %p115
    %p117 = scmp.ne.s32.totalorder %s109, %s112
    %p118 = scmp.eq.s32.totalorder %s13, 0
    %p119 = por %p117, %p118
    %p120 = scmp.ne.s32.totalorder %s109, %s112
    %p121 = scmp.eq.s32.totalorder %s18, 1
    %p122 = por %p120, %p121
    %p123 = scmp.ne.s32.totalorder %s112, %s113
    %p124 = scmp.eq.s32.totalorder %s18, 0
    %p125 = por %p123, %p124
    %p126 = scmp.ne.s32.totalorder %s112, %s113
    %p127 = scmp.eq.s32.totalorder %s19, 1
    %p128 = por %p126, %p127
    %p130 = scmp.ne.s32.totalorder %s113, %s129
    %p131 = scmp.eq.s32.totalorder %s19, 0
    %p132 = por %p130, %p131
    %s134 = sadd.s32 %s133, 1
    %p137 = scmp.eq.s32.totalorder %s13, 1
    %p138 = scmp.ne.s32.totalorder %s133, %s135
    %p139 = scmp.eq.s32.totalorder %s13, 0
    %p140 = por %p138, %p139
    %p141 = scmp.ne.s32.totalorder %s133, %s135
    %p142 = scmp.eq.s32.totalorder %s18, 1
    %p143 = por %p141, %p142
    %p144 = scmp.ne.s32.totalorder %s135, %s136
    %p145 = scmp.eq.s32.totalorder %s18, 0
    %p146 = por %p144, %p145
    %p147 = scmp.ne.s32.totalorder %s135, %s136
    %p148 = scmp.eq.s32.totalorder %s19, 1
    %p149 = por %p147, %p148
    %p151 = scmp.ne.s32.totalorder %s136, %s150
    %p152 = scmp.eq.s32.totalorder %s19, 0
    %p153 = por %p151, %p152
    %s155 = sadd.s32 %s154, 1
    %p158 = scmp.eq.s32.totalorder %s13, 1
    %p159 = scmp.ne.s32.totalorder %s154, %s156
    %p160 = scmp.eq.s32.totalorder %s13, 0
    %p161 = por %p159, %p160
    %p162 = scmp.ne.s32.totalorder %s154, %s156
    %p163 = scmp.eq.s32.totalorder %s18, 1
    %p164 = por %p162, %p163
    %p165 = scmp.ne.s32.totalorder %s156, %s157
    %p166 = scmp.eq.s32.totalorder %s18, 0
    %p167 = por %p165, %p166
    %p168 = scmp.ne.s32.totalorder %s156, %s157
    %p169 = scmp.eq.s32.totalorder %s19, 1
    %p170 = por %p168, %p169
    %p172 = scmp.ne.s32.totalorder %s157, %s171
    %p173 = scmp.eq.s32.totalorder %s19, 0
    %p174 = por %p172, %p173
    %s176 = sadd.s32 %s175, 1
    %p179 = scmp.eq.s32.totalorder %s13, 1
    %p180 = scmp.ne.s32.totalorder %s175, %s177
    %p181 = scmp.eq.s32.totalorder %s13, 0
    %p182 = por %p180, %p181
    %p183 = scmp.ne.s32.totalorder %s175, %s177
    %p184 = scmp.eq.s32.totalorder %s18, 1
    %p185 = por %p183, %p184
    %p186 = scmp.ne.s32.totalorder %s177, %s178
    %p187 = scmp.eq.s32.totalorder %s18, 0
    %p188 = por %p186, %p187
    %p189 = scmp.ne.s32.totalorder %s177, %s178
    %p190 = scmp.eq.s32.totalorder %s19, 1
    %p191 = por %p189, %p190
    %p193 = scmp.ne.s32.totalorder %s178, %s192
    %p194 = scmp.eq.s32.totalorder %s19, 0
    %p195 = por %p193, %p194
    %s197 = sadd.s32 %s196, 1
    %p200 = scmp.eq.s32.totalorder %s13, 1
    %p201 = scmp.ne.s32.totalorder %s196, %s198
    %p202 = scmp.eq.s32.totalorder %s13, 0
    %p203 = por %p201, %p202
    %p204 = scmp.ne.s32.totalorder %s196, %s198
    %p205 = scmp.eq.s32.totalorder %s18, 1
    %p206 = por %p204, %p205
    %p207 = scmp.ne.s32.totalorder %s198, %s199
    %p208 = scmp.eq.s32.totalorder %s18, 0
    %p209 = por %p207, %p208
    %p210 = scmp.ne.s32.totalorder %s198, %s199
    %p211 = scmp.eq.s32.totalorder %s19, 1
    %p212 = por %p210, %p211
    %p214 = scmp.ne.s32.totalorder %s199, %s213
    %p215 = scmp.eq.s32.totalorder %s19, 0
    %p216 = por %p214, %p215
    %s217 = ssub.s32 %s20, %s32
    %s218 = ssub.s32 %s21, %s28
    %s219 = sor.u32 %s217, %s218
    %p220 = scmp.eq.s32.totalorder %s219, 0
    %s222 = sadd.s32 %s221, 1
    %s223 = scalar_select %p220, %s221, %s222
    %p226 = pneg %p220
    %p227 = scmp.eq.s32.totalorder %s13, 1
    %p228 = por %p226, %p227
    %p229 = scmp.ne.s32.totalorder %s221, %s224
    %p230 = scmp.eq.s32.totalorder %s13, 0
    %p231 = por %p229, %p230
    %p232 = scmp.ne.s32.totalorder %s221, %s224
    %p233 = scmp.eq.s32.totalorder %s18, 1
    %p234 = por %p232, %p233
    %p235 = scmp.ne.s32.totalorder %s224, %s225
    %p236 = scmp.eq.s32.totalorder %s18, 0
    %p237 = por %p235, %p236
    %p238 = scmp.ne.s32.totalorder %s224, %s225
    %p239 = scmp.eq.s32.totalorder %s19, 1
    %p240 = por %p238, %p239
    %p242 = scmp.ne.s32.totalorder %s225, %s241
    %p243 = scmp.eq.s32.totalorder %s19, 0
    %p244 = por %p242, %p243
    %p245 = scmp.le.s32.totalorder 1, %s13
    %p246 = scmp.lt.s32.totalorder %s13, 3
    %p247 = pnand %p245, %p246
    %p248 = pneg %p247
    // Predicated region
    $region9: #{tpu_custom_call.1} parent=5 // pred_check
      _
    $region10: #{tpu_custom_call.1} parent=5 // pred_check_branch
      %250 = sbr.rel (%p247) target = $region12
    $region11: #{tpu_custom_call.1} parent=5 // pred_region
      %s251 = ssub.s32 %s13, 1
      // Predicated region
      $region13: #{tpu_custom_call.1} parent=11 // pred_check
        %p252 = pneg %p146
      $region14: #{tpu_custom_call.1} parent=11 // pred_check_branch
        %254 = sbr.rel (%p252) target = $region16
      $region15: #{tpu_custom_call.1} parent=11 // pred_region
        _
      $region16: #{tpu_custom_call.1} parent=11 // pred_fallthru
        _
      // Predicated region
      $region17: #{tpu_custom_call.1} parent=11 // pred_check
        %p255 = pneg %p167
      $region18: #{tpu_custom_call.1} parent=11 // pred_check_branch
        %257 = sbr.rel (%p255) target = $region20
      $region19: #{tpu_custom_call.1} parent=11 // pred_region
        _
      $region20: #{tpu_custom_call.1} parent=11 // pred_fallthru
        _
      // Predicated region
      $region21: #{tpu_custom_call.1} parent=11 // pred_check
        %p258 = pneg %p188
      $region22: #{tpu_custom_call.1} parent=11 // pred_check_branch
        %260 = sbr.rel (%p258) target = $region24
      $region23: #{tpu_custom_call.1} parent=11 // pred_region
        _
      $region24: #{tpu_custom_call.1} parent=11 // pred_fallthru
        _
      // Predicated region
      $region25: #{tpu_custom_call.1} parent=11 // pred_check
        %p261 = pneg %p209
      $region26: #{tpu_custom_call.1} parent=11 // pred_check_branch
        %263 = sbr.rel (%p261) target = $region28
      $region27: #{tpu_custom_call.1} parent=11 // pred_region
        _
      $region28: #{tpu_custom_call.1} parent=11 // pred_fallthru
        _
    $region12: #{tpu_custom_call.1} parent=5 // pred_fallthru
      _
    %p264 = scmp.lt.s32.totalorder %s13, 2
    // Predicated region
    $region29: #{tpu_custom_call.1} parent=5 // pred_check
      %p265 = pneg %p264
    $region30: #{tpu_custom_call.1} parent=5 // pred_check_branch
      %267 = sbr.rel (%p265) target = $region32
    $region31: #{tpu_custom_call.1} parent=5 // pred_region
      // Predicated region
      $region33: #{tpu_custom_call.1} parent=31 // pred_check
        %p268 = pneg %p47
      $region34: #{tpu_custom_call.1} parent=31 // pred_check_branch
        %270 = sbr.rel (%p268) target = $region36
      $region35: #{tpu_custom_call.1} parent=31 // pred_region
        %s271 = smul.u32 16, %s21
        %p272 = scmp.lt.s32.totalorder %s20, 1
        %s273 = scalar_select %p272, %s20, 1
        %p274 = scmp.lt.s32.totalorder %s271, 15
        %s275 = scalar_select %p274, %s271, 15
        %s276 = smul.addr %s275, 2
        %s277 = smul.addr %s273, 32
        %s278 = sadd.s32 %s276, %s277
        %s279 = smul.addr %s278, 8
        %s280 = scalar_lea.vmem %s0, %s279
        %s281 = smul.u32 16, %s21
      $region36: #{tpu_custom_call.1} parent=31 // pred_fallthru
        _
      // Predicated region
      $region37: #{tpu_custom_call.1} parent=31 // pred_check
        %p282 = pneg %p83
      $region38: #{tpu_custom_call.1} parent=31 // pred_check_branch
        %284 = sbr.rel (%p282) target = $region40
      $region39: #{tpu_custom_call.1} parent=31 // pred_region
        %s285 = smul.u32 %s21, 8
        %s286 = ssub.s32 %s285, 1
        %p287 = scmp.gt.s32.totalorder %s286, 0
        %s288 = scalar_select %p287, %s286, 0
        %s289 = smul.u32 2, %s288
        %p290 = scmp.lt.s32.totalorder %s20, 1
        %s291 = scalar_select %p290, %s20, 1
        %p292 = scmp.lt.s32.totalorder %s289, 15
        %s293 = scalar_select %p292, %s289, 15
        %s294 = smul.addr %s293, 2
        %s295 = smul.addr %s291, 32
        %s296 = sadd.s32 %s294, %s295
        %s297 = smul.addr %s296, 8
        %s298 = scalar_lea.vmem %s1, %s297
        %s299 = smul.u32 %s21, 8
        %s300 = ssub.s32 %s299, 1
        %p301 = scmp.gt.s32.totalorder %s300, 0
        %s302 = scalar_select %p301, %s300, 0
        %s303 = smul.u32 2, %s302
      $region40: #{tpu_custom_call.1} parent=31 // pred_fallthru
        _
      // Predicated region
      $region41: #{tpu_custom_call.1} parent=31 // pred_check
        %p304 = pneg %p119
      $region42: #{tpu_custom_call.1} parent=31 // pred_check_branch
        %306 = sbr.rel (%p304) target = $region44
      $region43: #{tpu_custom_call.1} parent=31 // pred_region
        %s307 = smul.u32 %s21, 8
        %s308 = sadd.s32 %s307, 8
        %p309 = scmp.lt.s32.totalorder %s308, 7
        %s310 = scalar_select %p309, %s308, 7
        %s311 = smul.u32 2, %s310
        %p312 = scmp.lt.s32.totalorder %s20, 1
        %s313 = scalar_select %p312, %s20, 1
        %p314 = scmp.lt.s32.totalorder %s311, 15
        %s315 = scalar_select %p314, %s311, 15
        %s316 = smul.addr %s315, 2
        %s317 = smul.addr %s313, 32
        %s318 = sadd.s32 %s316, %s317
        %s319 = smul.addr %s318, 8
        %s320 = scalar_lea.vmem %s2, %s319
        %s321 = smul.u32 %s21, 8
        %s322 = sadd.s32 %s321, 8
        %p323 = scmp.lt.s32.totalorder %s322, 7
        %s324 = scalar_select %p323, %s322, 7
        %s325 = smul.u32 2, %s324
      $region44: #{tpu_custom_call.1} parent=31 // pred_fallthru
        _
    $region32: #{tpu_custom_call.1} parent=5 // pred_fallthru
      _
    %p326 = scmp.le.s32.totalorder 1, %s13
    %p327 = scmp.lt.s32.totalorder %s13, 3
    %p328 = pnand %p326, %p327
    %p329 = pneg %p328
    // Predicated region
    $region45: #{tpu_custom_call.1} parent=5 // pred_check
      _
    $region46: #{tpu_custom_call.1} parent=5 // pred_check_branch
      %331 = sbr.rel (%p328) target = $region48
    $region47: #{tpu_custom_call.1} parent=5 // pred_region
      %s332 = ssub.s32 %s13, 1
      %s333 = smul.u32 16, %s23
      %p334 = scmp.lt.s32.totalorder %s22, 1
      %s335 = scalar_select %p334, %s22, 1
      %p336 = scmp.lt.s32.totalorder %s333, 15
      %s337 = scalar_select %p336, %s333, 15
      %s338 = smul.addr %s337, 2
      %s339 = smul.addr %s335, 32
      %s340 = sadd.s32 %s338, %s339
      %s341 = smul.addr %s340, 8
      %s342 = scalar_lea.vmem %s0, %s341
      %p343 = pneg %p53
      %p344 = pneg %p50
      %s345 = smul.u32 %s23, 8
      %s346 = ssub.s32 %s345, 1
      %p347 = scmp.gt.s32.totalorder %s346, 0
      %s348 = scalar_select %p347, %s346, 0
      %s349 = smul.u32 2, %s348
      %p350 = scmp.lt.s32.totalorder %s22, 1
      %s351 = scalar_select %p350, %s22, 1
      %p352 = scmp.lt.s32.totalorder %s349, 15
      %s353 = scalar_select %p352, %s349, 15
      %s354 = smul.addr %s353, 2
      %s355 = smul.addr %s351, 32
      %s356 = sadd.s32 %s354, %s355
      %s357 = smul.addr %s356, 8
      %s358 = scalar_lea.vmem %s1, %s357
      %p359 = pneg %p89
      %p360 = pneg %p86
      %s361 = smul.u32 %s23, 8
      %s362 = sadd.s32 %s361, 8
      %p363 = scmp.lt.s32.totalorder %s362, 7
      %s364 = scalar_select %p363, %s362, 7
      %s365 = smul.u32 2, %s364
      %p366 = scmp.lt.s32.totalorder %s22, 1
      %s367 = scalar_select %p366, %s22, 1
      %p368 = scmp.lt.s32.totalorder %s365, 15
      %s369 = scalar_select %p368, %s365, 15
      %s370 = smul.addr %s369, 2
      %s371 = smul.addr %s367, 32
      %s372 = sadd.s32 %s370, %s371
      %s373 = smul.addr %s372, 8
      %s374 = scalar_lea.vmem %s2, %s373
      %p375 = pneg %p125
      %p376 = pneg %p122
      %p377 = pneg %p146
      %p378 = pneg %p143
      %p379 = pneg %p167
      %p380 = pneg %p164
      %p381 = pneg %p188
      %p382 = pneg %p185
      %p383 = pneg %p209
      %p384 = pneg %p206
      %p385 = pneg %p237
      %p386 = pneg %p234
      %s387 = smul.u32 16, %s23
      %p388 = scmp.lt.s32.totalorder %s22, 1
      %s389 = scalar_select %p388, %s22, 1
      %p390 = scmp.lt.s32.totalorder %s387, 15
      %s391 = scalar_select %p390, %s387, 15
      %s392 = smul.addr %s391, 2
      %s393 = smul.addr %s389, 32
      %s394 = sadd.s32 %s392, %s393
      %s395 = smul.addr %s394, 8
      %s396 = scalar_lea.vmem %s7, %s395
      %s397 = smul.u32 16, %s23
      %p398 = scmp.lt.s32.totalorder %s22, 1
      %s399 = scalar_select %p398, %s22, 1
      %p400 = scmp.lt.s32.totalorder %s397, 15
      %s401 = scalar_select %p400, %s397, 15
      %s402 = smul.addr %s401, 2
      %s403 = smul.addr %s399, 32
      %s404 = sadd.s32 %s402, %s403
      %s405 = smul.addr %s404, 8
      %s406 = scalar_lea.vmem %s0, %s405
      %s407 = smul.u32 16, %s23
      %s408 = smul.u32 %s23, 8
      %s409 = ssub.s32 %s408, 1
      %p410 = scmp.gt.s32.totalorder %s409, 0
      %s411 = scalar_select %p410, %s409, 0
      %s412 = smul.u32 2, %s411
      %p413 = scmp.lt.s32.totalorder %s22, 1
      %s414 = scalar_select %p413, %s22, 1
      %p415 = scmp.lt.s32.totalorder %s412, 15
      %s416 = scalar_select %p415, %s412, 15
      %s417 = smul.addr %s416, 2
      %s418 = smul.addr %s414, 32
      %s419 = sadd.s32 %s417, %s418
      %s420 = smul.addr %s419, 8
      %s421 = scalar_lea.vmem %s1, %s420
      %s422 = smul.u32 %s23, 8
      %s423 = ssub.s32 %s422, 1
      %p424 = scmp.gt.s32.totalorder %s423, 0
      %s425 = scalar_select %p424, %s423, 0
      %s426 = smul.u32 2, %s425
      %s427 = smul.u32 %s23, 8
      %s428 = sadd.s32 %s427, 8
      %p429 = scmp.lt.s32.totalorder %s428, 7
      %s430 = scalar_select %p429, %s428, 7
      %s431 = smul.u32 2, %s430
      %p432 = scmp.lt.s32.totalorder %s22, 1
      %s433 = scalar_select %p432, %s22, 1
      %p434 = scmp.lt.s32.totalorder %s431, 15
      %s435 = scalar_select %p434, %s431, 15
      %s436 = smul.addr %s435, 2
      %s437 = smul.addr %s433, 32
      %s438 = sadd.s32 %s436, %s437
      %s439 = smul.addr %s438, 8
      %s440 = scalar_lea.vmem %s2, %s439
      %s441 = smul.u32 %s23, 8
      %s442 = sadd.s32 %s441, 8
      %p443 = scmp.lt.s32.totalorder %s442, 7
      %s444 = scalar_select %p443, %s442, 7
      %s445 = smul.u32 2, %s444
      %s446 = smul.u32 16, %s23
      %p447 = scmp.lt.s32.totalorder %s22, 1
      %s448 = scalar_select %p447, %s22, 1
      %p449 = scmp.lt.s32.totalorder %s446, 15
      %s450 = scalar_select %p449, %s446, 15
      %s451 = smul.addr %s450, 2
      %s452 = smul.addr %s448, 32
      %s453 = sadd.s32 %s451, %s452
      %s454 = smul.addr %s453, 8
      %s455 = scalar_lea.vmem %s7, %s454
      %s456 = smul.u32 16, %s23
      %v457 = vld [vmem:[%s421] sm:$0xff]
      %v458 = vld [vmem:[%s421 + $0x8] sm:$0xff]
      %v459 = vld [vmem:[%s421 + $0x10] sm:$0xff]
      %v460 = vld [vmem:[%s421 + $0x18] sm:$0xff]
      %vm461 = vcmask 31744
      %462 = vst.msk [vmem:[#allocation2] sm:$0xff] %vm461, %v457
      %463 = vst.msk [vmem:[#allocation2 + $0x8] sm:$0xff] %vm461, %v458
      %464 = vst.msk [vmem:[#allocation2 + $0x10] sm:$0xff] %vm461, %v459
      %465 = vst.msk [vmem:[#allocation2 + $0x18] sm:$0xff] %vm461, %v460
      %v466 = vld [vmem:[%s406] sm:$0xff]
      %v467 = vld [vmem:[%s406 + $0x8] sm:$0xff]
      %v468 = vld [vmem:[%s406 + $0x10] sm:$0xff]
      %v469 = vld [vmem:[%s406 + $0x18] sm:$0xff]
      %v470 = vld [vmem:[%s406 + $0x20] sm:$0xff]
      %v471 = vld [vmem:[%s406 + $0x28] sm:$0xff]
      %v472 = vld [vmem:[%s406 + $0x30] sm:$0xff]
      %v473 = vld [vmem:[%s406 + $0x38] sm:$0xff]
      %v474 = vld [vmem:[%s406 + $0x40] sm:$0xff]
      %v475 = vld [vmem:[%s406 + $0x48] sm:$0xff]
      %v476 = vld [vmem:[%s406 + $0x50] sm:$0xff]
      %v477 = vld [vmem:[%s406 + $0x58] sm:$0xff]
      %v478 = vld [vmem:[%s406 + $0x60] sm:$0xff]
      %v479 = vld [vmem:[%s406 + $0x68] sm:$0xff]
      %v480 = vld [vmem:[%s406 + $0x70] sm:$0xff]
      %v481 = vld [vmem:[%s406 + $0x78] sm:$0xff]
      %v482 = vld [vmem:[%s406 + $0x80] sm:$0xff]
      %v483 = vld [vmem:[%s406 + $0x88] sm:$0xff]
      %v484 = vld [vmem:[%s406 + $0x90] sm:$0xff]
      %v485 = vld [vmem:[%s406 + $0x98] sm:$0xff]
      %v486 = vld [vmem:[%s406 + $0xa0] sm:$0xff]
      %v487 = vld [vmem:[%s406 + $0xa8] sm:$0xff]
      %v488 = vld [vmem:[%s406 + $0xb0] sm:$0xff]
      %v489 = vld [vmem:[%s406 + $0xb8] sm:$0xff]
      %v490 = vld [vmem:[%s406 + $0xc0] sm:$0xff]
      %v491 = vld [vmem:[%s406 + $0xc8] sm:$0xff]
      %v492 = vld [vmem:[%s406 + $0xd0] sm:$0xff]
      %v493 = vld [vmem:[%s406 + $0xd8] sm:$0xff]
      %v494 = vld [vmem:[%s406 + $0xe0] sm:$0xff]
      %v495 = vld [vmem:[%s406 + $0xe8] sm:$0xff]
      %v496 = vld [vmem:[%s406 + $0xf0] sm:$0xff]
      %v497 = vld [vmem:[%s406 + $0xf8] sm:$0xff]
      %s498 = scalar_lea.vmem [#allocation2], 32
      %499 = vst.msk [vmem:[%s498] sm:$0xff] %vm461, %v466
      %500 = vst.msk [vmem:[%s498 + $0x8] sm:$0xff] %vm461, %v467
      %501 = vst.msk [vmem:[%s498 + $0x10] sm:$0xff] %vm461, %v468
      %502 = vst.msk [vmem:[%s498 + $0x18] sm:$0xff] %vm461, %v469
      %503 = vst.msk [vmem:[%s498 + $0x20] sm:$0xff] %vm461, %v470
      %504 = vst.msk [vmem:[%s498 + $0x28] sm:$0xff] %vm461, %v471
      %505 = vst.msk [vmem:[%s498 + $0x30] sm:$0xff] %vm461, %v472
      %506 = vst.msk [vmem:[%s498 + $0x38] sm:$0xff] %vm461, %v473
      %507 = vst.msk [vmem:[%s498 + $0x40] sm:$0xff] %vm461, %v474
      %508 = vst.msk [vmem:[%s498 + $0x48] sm:$0xff] %vm461, %v475
      %509 = vst.msk [vmem:[%s498 + $0x50] sm:$0xff] %vm461, %v476
      %510 = vst.msk [vmem:[%s498 + $0x58] sm:$0xff] %vm461, %v477
      %511 = vst.msk [vmem:[%s498 + $0x60] sm:$0xff] %vm461, %v478
      %512 = vst.msk [vmem:[%s498 + $0x68] sm:$0xff] %vm461, %v479
      %513 = vst.msk [vmem:[%s498 + $0x70] sm:$0xff] %vm461, %v480
      %514 = vst.msk [vmem:[%s498 + $0x78] sm:$0xff] %vm461, %v481
      %515 = vst.msk [vmem:[%s498 + $0x80] sm:$0xff] %vm461, %v482
      %516 = vst.msk [vmem:[%s498 + $0x88] sm:$0xff] %vm461, %v483
      %517 = vst.msk [vmem:[%s498 + $0x90] sm:$0xff] %vm461, %v484
      %518 = vst.msk [vmem:[%s498 + $0x98] sm:$0xff] %vm461, %v485
      %519 = vst.msk [vmem:[%s498 + $0xa0] sm:$0xff] %vm461, %v486
      %520 = vst.msk [vmem:[%s498 + $0xa8] sm:$0xff] %vm461, %v487
      %521 = vst.msk [vmem:[%s498 + $0xb0] sm:$0xff] %vm461, %v488
      %522 = vst.msk [vmem:[%s498 + $0xb8] sm:$0xff] %vm461, %v489
      %523 = vst.msk [vmem:[%s498 + $0xc0] sm:$0xff] %vm461, %v490
      %524 = vst.msk [vmem:[%s498 + $0xc8] sm:$0xff] %vm461, %v491
      %525 = vst.msk [vmem:[%s498 + $0xd0] sm:$0xff] %vm461, %v492
      %526 = vst.msk [vmem:[%s498 + $0xd8] sm:$0xff] %vm461, %v493
      %527 = vst.msk [vmem:[%s498 + $0xe0] sm:$0xff] %vm461, %v494
      %528 = vst.msk [vmem:[%s498 + $0xe8] sm:$0xff] %vm461, %v495
      %529 = vst.msk [vmem:[%s498 + $0xf0] sm:$0xff] %vm461, %v496
      %530 = vst.msk [vmem:[%s498 + $0xf8] sm:$0xff] %vm461, %v497
      %v531 = vld [vmem:[%s440] sm:$0xff]
      %v532 = vld [vmem:[%s440 + $0x8] sm:$0xff]
      %v533 = vld [vmem:[%s440 + $0x10] sm:$0xff]
      %v534 = vld [vmem:[%s440 + $0x18] sm:$0xff]
      %s535 = scalar_lea.vmem [#allocation2], 288
      %536 = vst.msk [vmem:[%s535] sm:$0xff] %vm461, %v531
      %537 = vst.msk [vmem:[%s535 + $0x8] sm:$0xff] %vm461, %v532
      %538 = vst.msk [vmem:[%s535 + $0x10] sm:$0xff] %vm461, %v533
      %539 = vst.msk [vmem:[%s535 + $0x18] sm:$0xff] %vm461, %v534
      %p540 = scmp.eq.s32.totalorder %s23, 0
      // Predicated region
      $region49: #{tpu_custom_call.1} parent=47 // pred_check
        %p541 = pneg %p540
      $region50: #{tpu_custom_call.1} parent=47 // pred_check_branch
        %543 = sbr.rel (%p541) target = $region52
      $region51: #{tpu_custom_call.1} parent=47 // pred_region
        %544 = vst.msk [vmem:[#allocation2] sm:$0xff] %vm461, 0.0
        %545 = vst.msk [vmem:[#allocation2 + $0x8] sm:$0xff] %vm461, 0.0
        %546 = vst.msk [vmem:[#allocation2 + $0x10] sm:$0xff] %vm461, 0.0
        %547 = vst.msk [vmem:[#allocation2 + $0x18] sm:$0xff] %vm461, 0.0
        %548 = vst.msk [vmem:[%s535] sm:$0xff] %vm461, 0.0
        %549 = vst.msk [vmem:[%s535 + $0x8] sm:$0xff] %vm461, 0.0
        %550 = vst.msk [vmem:[%s535 + $0x10] sm:$0xff] %vm461, 0.0
        %551 = vst.msk [vmem:[%s535 + $0x18] sm:$0xff] %vm461, 0.0
      $region52: #{tpu_custom_call.1} parent=47 // pred_fallthru
        _
      %v552 = vld [vmem:[#allocation2] sm:$0xff]
      %v553 = vld [vmem:[#allocation2 + $0x8] sm:$0xff]
      %v554 = vld [vmem:[#allocation2 + $0x10] sm:$0xff]
      %v555 = vld [vmem:[#allocation2 + $0x18] sm:$0xff]
      %v556 = vld [vmem:[#allocation2 + $0x20] sm:$0xff]
      %v557 = vld [vmem:[#allocation2 + $0x28] sm:$0xff]
      %v558 = vld [vmem:[#allocation2 + $0x30] sm:$0xff]
      %v559 = vld [vmem:[#allocation2 + $0x38] sm:$0xff]
      %v560 = vld [vmem:[#allocation2 + $0x40] sm:$0xff]
      %v561 = vld [vmem:[#allocation2 + $0x48] sm:$0xff]
      %v562 = vld [vmem:[#allocation2 + $0x50] sm:$0xff]
      %v563 = vld [vmem:[#allocation2 + $0x58] sm:$0xff]
      %v564 = vld [vmem:[#allocation2 + $0x60] sm:$0xff]
      %v565 = vld [vmem:[#allocation2 + $0x68] sm:$0xff]
      %v566 = vld [vmem:[#allocation2 + $0x70] sm:$0xff]
      %v567 = vld [vmem:[#allocation2 + $0x78] sm:$0xff]
      %v568 = vld [vmem:[#allocation2 + $0x80] sm:$0xff]
      %v569 = vld [vmem:[#allocation2 + $0x88] sm:$0xff]
      %v570 = vld [vmem:[#allocation2 + $0x90] sm:$0xff]
      %v571 = vld [vmem:[#allocation2 + $0x98] sm:$0xff]
      %v572 = vld [vmem:[#allocation2 + $0xa0] sm:$0xff]
      %v573 = vld [vmem:[#allocation2 + $0xa8] sm:$0xff]
      %v574 = vld [vmem:[#allocation2 + $0xb0] sm:$0xff]
      %v575 = vld [vmem:[#allocation2 + $0xb8] sm:$0xff]
      %v576 = vld [vmem:[#allocation2 + $0xc0] sm:$0xff]
      %v577 = vld [vmem:[#allocation2 + $0xc8] sm:$0xff]
      %v578 = vld [vmem:[#allocation2 + $0xd0] sm:$0xff]
      %v579 = vld [vmem:[#allocation2 + $0xd8] sm:$0xff]
      %v580 = vld [vmem:[#allocation2 + $0xe0] sm:$0xff]
      %v581 = vld [vmem:[#allocation2 + $0xe8] sm:$0xff]
      %v582 = vld [vmem:[#allocation2 + $0xf0] sm:$0xff]
      %v583 = vld [vmem:[#allocation2 + $0xf8] sm:$0xff]
      %v584 = vld [vmem:[#allocation2 + $0x100] sm:$0xff]
      %v585 = vld [vmem:[#allocation2 + $0x108] sm:$0xff]
      %v586 = vld [vmem:[#allocation2 + $0x110] sm:$0xff]
      %v587 = vld [vmem:[#allocation2 + $0x118] sm:$0xff]
      %v588 = vld [vmem:[#allocation2 + $0x120] sm:$0xff]
      %v589 = vld [vmem:[#allocation2 + $0x128] sm:$0xff]
      %v590 = vld [vmem:[#allocation2 + $0x130] sm:$0xff]
      %v591 = vld [vmem:[#allocation2 + $0x138] sm:$0xff]
      %v592 = vld [vmem:[%s3] sm:$0xf]
      %s593 = scalar_lea.vmem %s3, 12
      %v594 = vld [vmem:[%s593] sm:$0xf]
      %v596 = vsel %vm461, %v554, 0
      %v599 = vsel %vm461, %v555, 0
      %v602 = vsel %vm461, %v556, 0
      %v605 = vsel %vm461, %v557, 0
      %v608 = vsel %vm461, %v558, 0
      %v611 = vsel %vm461, %v559, 0
      %v614 = vsel %vm461, %v560, 0
      %v617 = vsel %vm461, %v561, 0
      %v620 = vsel %vm461, %v562, 0
      %v623 = vsel %vm461, %v563, 0
      %v626 = vsel %vm461, %v564, 0
      %v629 = vsel %vm461, %v565, 0
      %v632 = vsel %vm461, %v566, 0
      %v635 = vsel %vm461, %v567, 0
      %v638 = vsel %vm461, %v568, 0
      %v641 = vsel %vm461, %v569, 0
      %v644 = vsel %vm461, %v570, 0
      %v647 = vsel %vm461, %v571, 0
      %v650 = vsel %vm461, %v572, 0
      %v653 = vsel %vm461, %v573, 0
      %v656 = vsel %vm461, %v574, 0
      %v659 = vsel %vm461, %v575, 0
      %v662 = vsel %vm461, %v576, 0
      %v665 = vsel %vm461, %v577, 0
      %v668 = vsel %vm461, %v578, 0
      %v671 = vsel %vm461, %v579, 0
      %v674 = vsel %vm461, %v580, 0
      %v677 = vsel %vm461, %v581, 0
      %v680 = vsel %vm461, %v582, 0
      %v683 = vsel %vm461, %v583, 0
      %v686 = vsel %vm461, %v584, 0
      %v689 = vsel %vm461, %v585, 0
      %v692 = vsel %vm461, %v586, 0
      %v695 = vsel %vm461, %v587, 0
      %v698 = vsel %vm461, %v588, 0
      %v701 = vsel %vm461, %v589, 0
      %vm703 = vcmask 1043456
      %v705 = vsel %vm703, %v594, 0
      %707 = vmatpush.msra.mxu0 0.0
      %708 = vmatpush.msra.mxu0 0.0
      %709 = vmatpush.msra.mxu0 0.0
      %710 = vmatpush.msra.mxu0 0.0
      %711 = vmatpush.msra.mxu0 0.0
      %712 = vmatpush.msra.mxu0 0.0
      %713 = vmatpush.msra.mxu0 0.0
      %714 = vmatpush.msra.mxu0 0.0
      %715 = vmatpush.msra.mxu0 0.0
      %716 = vmatpush.msra.mxu0 0.0
      %717 = vmatpush.msra.mxu0 0.0
      %718 = vmatpush.msra.mxu0 0.0
      %719 = vmatpush.msra.mxu0 0.0
      %720 = vmatpush.msra.mxu0 0.0
      %721 = vmatpush.msra.mxu0 0.0
      %722 = vmatpush.msra.mxu0 %v705
      %723 = vmatmul.f32.gmra.mxu0 %v596
      %v724 = vpop.f32.mrf.mxu0
      %v725 = vadd.f32 0.0, %v724
      %726 = vmatmul.f32.gmra.mxu0 %v599
      %v727 = vpop.f32.mrf.mxu0
      %v728 = vadd.f32 0.0, %v727
      %729 = vmatmul.f32.gmra.mxu0 %v602
      %v730 = vpop.f32.mrf.mxu0
      %v731 = vadd.f32 0.0, %v730
      %732 = vmatmul.f32.gmra.mxu0 %v605
      %v733 = vpop.f32.mrf.mxu0
      %v734 = vadd.f32 0.0, %v733
      %735 = vmatmul.f32.gmra.mxu0 %v608
      %v736 = vpop.f32.mrf.mxu0
      %v737 = vadd.f32 0.0, %v736
      %738 = vmatmul.f32.gmra.mxu0 %v611
      %v739 = vpop.f32.mrf.mxu0
      %v740 = vadd.f32 0.0, %v739
      %741 = vmatmul.f32.gmra.mxu0 %v614
      %v742 = vpop.f32.mrf.mxu0
      %v743 = vadd.f32 0.0, %v742
      %744 = vmatmul.f32.gmra.mxu0 %v617
      %v745 = vpop.f32.mrf.mxu0
      %v746 = vadd.f32 0.0, %v745
      %747 = vmatmul.f32.gmra.mxu0 %v620
      %v748 = vpop.f32.mrf.mxu0
      %v749 = vadd.f32 0.0, %v748
      %750 = vmatmul.f32.gmra.mxu0 %v623
      %v751 = vpop.f32.mrf.mxu0
      %v752 = vadd.f32 0.0, %v751
      %753 = vmatmul.f32.gmra.mxu0 %v626
      %v754 = vpop.f32.mrf.mxu0
      %v755 = vadd.f32 0.0, %v754
      %756 = vmatmul.f32.gmra.mxu0 %v629
      %v757 = vpop.f32.mrf.mxu0
      %v758 = vadd.f32 0.0, %v757
      %759 = vmatmul.f32.gmra.mxu0 %v632
      %v760 = vpop.f32.mrf.mxu0
      %v761 = vadd.f32 0.0, %v760
      %762 = vmatmul.f32.gmra.mxu0 %v635
      %v763 = vpop.f32.mrf.mxu0
      %v764 = vadd.f32 0.0, %v763
      %765 = vmatmul.f32.gmra.mxu0 %v638
      %v766 = vpop.f32.mrf.mxu0
      %v767 = vadd.f32 0.0, %v766
      %768 = vmatmul.f32.gmra.mxu0 %v641
      %v769 = vpop.f32.mrf.mxu0
      %v770 = vadd.f32 0.0, %v769
      %771 = vmatmul.f32.gmra.mxu0 %v644
      %v772 = vpop.f32.mrf.mxu0
      %v773 = vadd.f32 0.0, %v772
      %774 = vmatmul.f32.gmra.mxu0 %v647
      %v775 = vpop.f32.mrf.mxu0
      %v776 = vadd.f32 0.0, %v775
      %777 = vmatmul.f32.gmra.mxu0 %v650
      %v778 = vpop.f32.mrf.mxu0
      %v779 = vadd.f32 0.0, %v778
      %780 = vmatmul.f32.gmra.mxu0 %v653
      %v781 = vpop.f32.mrf.mxu0
      %v782 = vadd.f32 0.0, %v781
      %783 = vmatmul.f32.gmra.mxu0 %v656
      %v784 = vpop.f32.mrf.mxu0
      %v785 = vadd.f32 0.0, %v784
      %786 = vmatmul.f32.gmra.mxu0 %v659
      %v787 = vpop.f32.mrf.mxu0
      %v788 = vadd.f32 0.0, %v787
      %789 = vmatmul.f32.gmra.mxu0 %v662
      %v790 = vpop.f32.mrf.mxu0
      %v791 = vadd.f32 0.0, %v790
      %792 = vmatmul.f32.gmra.mxu0 %v665
      %v793 = vpop.f32.mrf.mxu0
      %v794 = vadd.f32 0.0, %v793
      %795 = vmatmul.f32.gmra.mxu0 %v668
      %v796 = vpop.f32.mrf.mxu0
      %v797 = vadd.f32 0.0, %v796
      %798 = vmatmul.f32.gmra.mxu0 %v671
      %v799 = vpop.f32.mrf.mxu0
      %v800 = vadd.f32 0.0, %v799
      %801 = vmatmul.f32.gmra.mxu0 %v674
      %v802 = vpop.f32.mrf.mxu0
      %v803 = vadd.f32 0.0, %v802
      %804 = vmatmul.f32.gmra.mxu0 %v677
      %v805 = vpop.f32.mrf.mxu0
      %v806 = vadd.f32 0.0, %v805
      %807 = vmatmul.f32.gmra.mxu0 %v680
      %v808 = vpop.f32.mrf.mxu0
      %v809 = vadd.f32 0.0, %v808
      %810 = vmatmul.f32.gmra.mxu0 %v683
      %v811 = vpop.f32.mrf.mxu0
      %v812 = vadd.f32 0.0, %v811
      %813 = vmatmul.f32.gmra.mxu0 %v686
      %v814 = vpop.f32.mrf.mxu0
      %v815 = vadd.f32 0.0, %v814
      %816 = vmatmul.f32.gmra.mxu0 %v689
      %v817 = vpop.f32.mrf.mxu0
      %v818 = vadd.f32 0.0, %v817
      %819 = vmatmul.f32.gmra.mxu0 %v692
      %v820 = vpop.f32.mrf.mxu0
      %v821 = vadd.f32 0.0, %v820
      %822 = vmatmul.f32.gmra.mxu0 %v695
      %v823 = vpop.f32.mrf.mxu0
      %v824 = vadd.f32 0.0, %v823
      %825 = vmatmul.f32.gmra.mxu0 %v698
      %v826 = vpop.f32.mrf.mxu0
      %v827 = vadd.f32 0.0, %v826
      %828 = vmatmul.f32.gmra.mxu0 %v701
      %v829 = vpop.f32.mrf.mxu0
      %v830 = vadd.f32 0.0, %v829
      %831 = vdwg.mxu0
      %v833 = vsel %vm461, %v552, 0
      %v836 = vsel %vm461, %v553, 0
      %v839 = vsel %vm703, %v592, 0
      %841 = vmatpush.msra.mxu0 0.0
      %842 = vmatpush.msra.mxu0 0.0
      %843 = vmatpush.msra.mxu0 0.0
      %844 = vmatpush.msra.mxu0 0.0
      %845 = vmatpush.msra.mxu0 0.0
      %846 = vmatpush.msra.mxu0 0.0
      %847 = vmatpush.msra.mxu0 0.0
      %848 = vmatpush.msra.mxu0 0.0
      %849 = vmatpush.msra.mxu0 0.0
      %850 = vmatpush.msra.mxu0 0.0
      %851 = vmatpush.msra.mxu0 0.0
      %852 = vmatpush.msra.mxu0 0.0
      %853 = vmatpush.msra.mxu0 0.0
      %854 = vmatpush.msra.mxu0 0.0
      %855 = vmatpush.msra.mxu0 0.0
      %856 = vmatpush.msra.mxu0 %v839
      %857 = vmatmul.f32.gmra.mxu0 %v833
      %v858 = vpop.f32.mrf.mxu0
      %v859 = vadd.f32 %v725, %v858
      %860 = vmatmul.f32.gmra.mxu0 %v836
      %v861 = vpop.f32.mrf.mxu0
      %v862 = vadd.f32 %v728, %v861
      %863 = vmatmul.f32.gmra.mxu0 %v596
      %v864 = vpop.f32.mrf.mxu0
      %v865 = vadd.f32 %v731, %v864
      %866 = vmatmul.f32.gmra.mxu0 %v599
      %v867 = vpop.f32.mrf.mxu0
      %v868 = vadd.f32 %v734, %v867
      %869 = vmatmul.f32.gmra.mxu0 %v602
      %v870 = vpop.f32.mrf.mxu0
      %v871 = vadd.f32 %v737, %v870
      %872 = vmatmul.f32.gmra.mxu0 %v605
      %v873 = vpop.f32.mrf.mxu0
      %v874 = vadd.f32 %v740, %v873
      %875 = vmatmul.f32.gmra.mxu0 %v608
      %v876 = vpop.f32.mrf.mxu0
      %v877 = vadd.f32 %v743, %v876
      %878 = vmatmul.f32.gmra.mxu0 %v611
      %v879 = vpop.f32.mrf.mxu0
      %v880 = vadd.f32 %v746, %v879
      %881 = vmatmul.f32.gmra.mxu0 %v614
      %v882 = vpop.f32.mrf.mxu0
      %v883 = vadd.f32 %v749, %v882
      %884 = vmatmul.f32.gmra.mxu0 %v617
      %v885 = vpop.f32.mrf.mxu0
      %v886 = vadd.f32 %v752, %v885
      %887 = vmatmul.f32.gmra.mxu0 %v620
      %v888 = vpop.f32.mrf.mxu0
      %v889 = vadd.f32 %v755, %v888
      %890 = vmatmul.f32.gmra.mxu0 %v623
      %v891 = vpop.f32.mrf.mxu0
      %v892 = vadd.f32 %v758, %v891
      %893 = vmatmul.f32.gmra.mxu0 %v626
      %v894 = vpop.f32.mrf.mxu0
      %v895 = vadd.f32 %v761, %v894
      %896 = vmatmul.f32.gmra.mxu0 %v629
      %v897 = vpop.f32.mrf.mxu0
      %v898 = vadd.f32 %v764, %v897
      %899 = vmatmul.f32.gmra.mxu0 %v632
      %v900 = vpop.f32.mrf.mxu0
      %v901 = vadd.f32 %v767, %v900
      %902 = vmatmul.f32.gmra.mxu0 %v635
      %v903 = vpop.f32.mrf.mxu0
      %v904 = vadd.f32 %v770, %v903
      %905 = vmatmul.f32.gmra.mxu0 %v638
      %v906 = vpop.f32.mrf.mxu0
      %v907 = vadd.f32 %v773, %v906
      %908 = vmatmul.f32.gmra.mxu0 %v641
      %v909 = vpop.f32.mrf.mxu0
      %v910 = vadd.f32 %v776, %v909
      %911 = vmatmul.f32.gmra.mxu0 %v644
      %v912 = vpop.f32.mrf.mxu0
      %v913 = vadd.f32 %v779, %v912
      %914 = vmatmul.f32.gmra.mxu0 %v647
      %v915 = vpop.f32.mrf.mxu0
      %v916 = vadd.f32 %v782, %v915
      %917 = vmatmul.f32.gmra.mxu0 %v650
      %v918 = vpop.f32.mrf.mxu0
      %v919 = vadd.f32 %v785, %v918
      %920 = vmatmul.f32.gmra.mxu0 %v653
      %v921 = vpop.f32.mrf.mxu0
      %v922 = vadd.f32 %v788, %v921
      %923 = vmatmul.f32.gmra.mxu0 %v656
      %v924 = vpop.f32.mrf.mxu0
      %v925 = vadd.f32 %v791, %v924
      %926 = vmatmul.f32.gmra.mxu0 %v659
      %v927 = vpop.f32.mrf.mxu0
      %v928 = vadd.f32 %v794, %v927
      %929 = vmatmul.f32.gmra.mxu0 %v662
      %v930 = vpop.f32.mrf.mxu0
      %v931 = vadd.f32 %v797, %v930
      %932 = vmatmul.f32.gmra.mxu0 %v665
      %v933 = vpop.f32.mrf.mxu0
      %v934 = vadd.f32 %v800, %v933
      %935 = vmatmul.f32.gmra.mxu0 %v668
      %v936 = vpop.f32.mrf.mxu0
      %v937 = vadd.f32 %v803, %v936
      %938 = vmatmul.f32.gmra.mxu0 %v671
      %v939 = vpop.f32.mrf.mxu0
      %v940 = vadd.f32 %v806, %v939
      %941 = vmatmul.f32.gmra.mxu0 %v674
      %v942 = vpop.f32.mrf.mxu0
      %v943 = vadd.f32 %v809, %v942
      %944 = vmatmul.f32.gmra.mxu0 %v677
      %v945 = vpop.f32.mrf.mxu0
      %v946 = vadd.f32 %v812, %v945
      %947 = vmatmul.f32.gmra.mxu0 %v680
      %v948 = vpop.f32.mrf.mxu0
      %v949 = vadd.f32 %v815, %v948
      %950 = vmatmul.f32.gmra.mxu0 %v683
      %v951 = vpop.f32.mrf.mxu0
      %v952 = vadd.f32 %v818, %v951
      %953 = vmatmul.f32.gmra.mxu0 %v686
      %v954 = vpop.f32.mrf.mxu0
      %v955 = vadd.f32 %v821, %v954
      %956 = vmatmul.f32.gmra.mxu0 %v689
      %v957 = vpop.f32.mrf.mxu0
      %v958 = vadd.f32 %v824, %v957
      %959 = vmatmul.f32.gmra.mxu0 %v692
      %v960 = vpop.f32.mrf.mxu0
      %v961 = vadd.f32 %v827, %v960
      %962 = vmatmul.f32.gmra.mxu0 %v695
      %v963 = vpop.f32.mrf.mxu0
      %v964 = vadd.f32 %v830, %v963
      %965 = vdwg.mxu0
      %s966 = scalar_lea.vmem %s3, 24
      %v967 = vld [vmem:[%s966] sm:$0xf]
      %v969 = vsel %vm461, %v590, 0
      %v972 = vsel %vm461, %v591, 0
      %v975 = vsel %vm703, %v967, 0
      %977 = vmatpush.msra.mxu0 0.0
      %978 = vmatpush.msra.mxu0 0.0
      %979 = vmatpush.msra.mxu0 0.0
      %980 = vmatpush.msra.mxu0 0.0
      %981 = vmatpush.msra.mxu0 0.0
      %982 = vmatpush.msra.mxu0 0.0
      %983 = vmatpush.msra.mxu0 0.0
      %984 = vmatpush.msra.mxu0 0.0
      %985 = vmatpush.msra.mxu0 0.0
      %986 = vmatpush.msra.mxu0 0.0
      %987 = vmatpush.msra.mxu0 0.0
      %988 = vmatpush.msra.mxu0 0.0
      %989 = vmatpush.msra.mxu0 0.0
      %990 = vmatpush.msra.mxu0 0.0
      %991 = vmatpush.msra.mxu0 0.0
      %992 = vmatpush.msra.mxu0 %v975
      %993 = vmatmul.f32.gmra.mxu0 %v602
      %v994 = vpop.f32.mrf.mxu0
      %v995 = vadd.f32 0.0, %v994
      %996 = vmatmul.f32.gmra.mxu0 %v605
      %v997 = vpop.f32.mrf.mxu0
      %v998 = vadd.f32 0.0, %v997
      %999 = vmatmul.f32.gmra.mxu0 %v608
      %v1000 = vpop.f32.mrf.mxu0
      %v1001 = vadd.f32 0.0, %v1000
      %1002 = vmatmul.f32.gmra.mxu0 %v611
      %v1003 = vpop.f32.mrf.mxu0
      %v1004 = vadd.f32 0.0, %v1003
      %1005 = vmatmul.f32.gmra.mxu0 %v614
      %v1006 = vpop.f32.mrf.mxu0
      %v1007 = vadd.f32 0.0, %v1006
      %1008 = vmatmul.f32.gmra.mxu0 %v617
      %v1009 = vpop.f32.mrf.mxu0
      %v1010 = vadd.f32 0.0, %v1009
      %1011 = vmatmul.f32.gmra.mxu0 %v620
      %v1012 = vpop.f32.mrf.mxu0
      %v1013 = vadd.f32 0.0, %v1012
      %1014 = vmatmul.f32.gmra.mxu0 %v623
      %v1015 = vpop.f32.mrf.mxu0
      %v1016 = vadd.f32 0.0, %v1015
      %1017 = vmatmul.f32.gmra.mxu0 %v626
      %v1018 = vpop.f32.mrf.mxu0
      %v1019 = vadd.f32 0.0, %v1018
      %1020 = vmatmul.f32.gmra.mxu0 %v629
      %v1021 = vpop.f32.mrf.mxu0
      %v1022 = vadd.f32 0.0, %v1021
      %1023 = vmatmul.f32.gmra.mxu0 %v632
      %v1024 = vpop.f32.mrf.mxu0
      %v1025 = vadd.f32 0.0, %v1024
      %1026 = vmatmul.f32.gmra.mxu0 %v635
      %v1027 = vpop.f32.mrf.mxu0
      %v1028 = vadd.f32 0.0, %v1027
      %1029 = vmatmul.f32.gmra.mxu0 %v638
      %v1030 = vpop.f32.mrf.mxu0
      %v1031 = vadd.f32 0.0, %v1030
      %1032 = vmatmul.f32.gmra.mxu0 %v641
      %v1033 = vpop.f32.mrf.mxu0
      %v1034 = vadd.f32 0.0, %v1033
      %1035 = vmatmul.f32.gmra.mxu0 %v644
      %v1036 = vpop.f32.mrf.mxu0
      %v1037 = vadd.f32 0.0, %v1036
      %1038 = vmatmul.f32.gmra.mxu0 %v647
      %v1039 = vpop.f32.mrf.mxu0
      %v1040 = vadd.f32 0.0, %v1039
      %1041 = vmatmul.f32.gmra.mxu0 %v650
      %v1042 = vpop.f32.mrf.mxu0
      %v1043 = vadd.f32 0.0, %v1042
      %1044 = vmatmul.f32.gmra.mxu0 %v653
      %v1045 = vpop.f32.mrf.mxu0
      %v1046 = vadd.f32 0.0, %v1045
      %1047 = vmatmul.f32.gmra.mxu0 %v656
      %v1048 = vpop.f32.mrf.mxu0
      %v1049 = vadd.f32 0.0, %v1048
      %1050 = vmatmul.f32.gmra.mxu0 %v659
      %v1051 = vpop.f32.mrf.mxu0
      %v1052 = vadd.f32 0.0, %v1051
      %1053 = vmatmul.f32.gmra.mxu0 %v662
      %v1054 = vpop.f32.mrf.mxu0
      %v1055 = vadd.f32 0.0, %v1054
      %1056 = vmatmul.f32.gmra.mxu0 %v665
      %v1057 = vpop.f32.mrf.mxu0
      %v1058 = vadd.f32 0.0, %v1057
      %1059 = vmatmul.f32.gmra.mxu0 %v668
      %v1060 = vpop.f32.mrf.mxu0
      %v1061 = vadd.f32 0.0, %v1060
      %1062 = vmatmul.f32.gmra.mxu0 %v671
      %v1063 = vpop.f32.mrf.mxu0
      %v1064 = vadd.f32 0.0, %v1063
      %1065 = vmatmul.f32.gmra.mxu0 %v674
      %v1066 = vpop.f32.mrf.mxu0
      %v1067 = vadd.f32 0.0, %v1066
      %1068 = vmatmul.f32.gmra.mxu0 %v677
      %v1069 = vpop.f32.mrf.mxu0
      %v1070 = vadd.f32 0.0, %v1069
      %1071 = vmatmul.f32.gmra.mxu0 %v680
      %v1072 = vpop.f32.mrf.mxu0
      %v1073 = vadd.f32 0.0, %v1072
      %1074 = vmatmul.f32.gmra.mxu0 %v683
      %v1075 = vpop.f32.mrf.mxu0
      %v1076 = vadd.f32 0.0, %v1075
      %1077 = vmatmul.f32.gmra.mxu0 %v686
      %v1078 = vpop.f32.mrf.mxu0
      %v1079 = vadd.f32 0.0, %v1078
      %1080 = vmatmul.f32.gmra.mxu0 %v689
      %v1081 = vpop.f32.mrf.mxu0
      %v1082 = vadd.f32 0.0, %v1081
      %1083 = vmatmul.f32.gmra.mxu0 %v692
      %v1084 = vpop.f32.mrf.mxu0
      %v1085 = vadd.f32 0.0, %v1084
      %1086 = vmatmul.f32.gmra.mxu0 %v695
      %v1087 = vpop.f32.mrf.mxu0
      %v1088 = vadd.f32 0.0, %v1087
      %1089 = vmatmul.f32.gmra.mxu0 %v698
      %v1090 = vpop.f32.mrf.mxu0
      %v1091 = vadd.f32 0.0, %v1090
      %1092 = vmatmul.f32.gmra.mxu0 %v701
      %v1093 = vpop.f32.mrf.mxu0
      %v1094 = vadd.f32 0.0, %v1093
      %1095 = vmatmul.f32.gmra.mxu0 %v969
      %v1096 = vpop.f32.mrf.mxu0
      %v1097 = vadd.f32 0.0, %v1096
      %1098 = vmatmul.f32.gmra.mxu0 %v972
      %v1099 = vpop.f32.mrf.mxu0
      %v1100 = vadd.f32 0.0, %v1099
      %1101 = vdwg.mxu0
      %v1102 = vadd.f32 %v859, %v995
      %v1103 = vadd.f32 %v862, %v998
      %v1104 = vadd.f32 %v865, %v1001
      %v1105 = vadd.f32 %v868, %v1004
      %v1106 = vadd.f32 %v871, %v1007
      %v1107 = vadd.f32 %v874, %v1010
      %v1108 = vadd.f32 %v877, %v1013
      %v1109 = vadd.f32 %v880, %v1016
      %v1110 = vadd.f32 %v883, %v1019
      %v1111 = vadd.f32 %v886, %v1022
      %v1112 = vadd.f32 %v889, %v1025
      %v1113 = vadd.f32 %v892, %v1028
      %v1114 = vadd.f32 %v895, %v1031
      %v1115 = vadd.f32 %v898, %v1034
      %v1116 = vadd.f32 %v901, %v1037
      %v1117 = vadd.f32 %v904, %v1040
      %v1118 = vadd.f32 %v907, %v1043
      %v1119 = vadd.f32 %v910, %v1046
      %v1120 = vadd.f32 %v913, %v1049
      %v1121 = vadd.f32 %v916, %v1052
      %v1122 = vadd.f32 %v919, %v1055
      %v1123 = vadd.f32 %v922, %v1058
      %v1124 = vadd.f32 %v925, %v1061
      %v1125 = vadd.f32 %v928, %v1064
      %v1126 = vadd.f32 %v931, %v1067
      %v1127 = vadd.f32 %v934, %v1070
      %v1128 = vadd.f32 %v937, %v1073
      %v1129 = vadd.f32 %v940, %v1076
      %v1130 = vadd.f32 %v943, %v1079
      %v1131 = vadd.f32 %v946, %v1082
      %v1132 = vadd.f32 %v949, %v1085
      %v1133 = vadd.f32 %v952, %v1088
      %v1134 = vadd.f32 %v955, %v1091
      %v1135 = vadd.f32 %v958, %v1094
      %v1136 = vadd.f32 %v961, %v1097
      %v1137 = vadd.f32 %v964, %v1100
      %s1138 = scalar_lea.vmem %s3, 4
      %v1139 = vld [vmem:[%s1138] sm:$0xf]
      %s1140 = scalar_lea.vmem %s3, 16
      %v1141 = vld [vmem:[%s1140] sm:$0xf]
      %v1143 = vsel %vm703, %v1141, 0
      %1145 = vmatpush.msra.mxu0 0.0
      %1146 = vmatpush.msra.mxu0 0.0
      %1147 = vmatpush.msra.mxu0 0.0
      %1148 = vmatpush.msra.mxu0 0.0
      %1149 = vmatpush.msra.mxu0 0.0
      %1150 = vmatpush.msra.mxu0 0.0
      %1151 = vmatpush.msra.mxu0 0.0
      %1152 = vmatpush.msra.mxu0 0.0
      %1153 = vmatpush.msra.mxu0 0.0
      %1154 = vmatpush.msra.mxu0 0.0
      %1155 = vmatpush.msra.mxu0 0.0
      %1156 = vmatpush.msra.mxu0 0.0
      %1157 = vmatpush.msra.mxu0 0.0
      %1158 = vmatpush.msra.mxu0 0.0
      %1159 = vmatpush.msra.mxu0 0.0
      %1160 = vmatpush.msra.mxu0 %v1143
      %1161 = vmatmul.f32.gmra.mxu0 %v596
      %v1162 = vpop.f32.mrf.mxu0
      %v1163 = vadd.f32 0.0, %v1162
      %1164 = vmatmul.f32.gmra.mxu0 %v599
      %v1165 = vpop.f32.mrf.mxu0
      %v1166 = vadd.f32 0.0, %v1165
      %1167 = vmatmul.f32.gmra.mxu0 %v602
      %v1168 = vpop.f32.mrf.mxu0
      %v1169 = vadd.f32 0.0, %v1168
      %1170 = vmatmul.f32.gmra.mxu0 %v605
      %v1171 = vpop.f32.mrf.mxu0
      %v1172 = vadd.f32 0.0, %v1171
      %1173 = vmatmul.f32.gmra.mxu0 %v608
      %v1174 = vpop.f32.mrf.mxu0
      %v1175 = vadd.f32 0.0, %v1174
      %1176 = vmatmul.f32.gmra.mxu0 %v611
      %v1177 = vpop.f32.mrf.mxu0
      %v1178 = vadd.f32 0.0, %v1177
      %1179 = vmatmul.f32.gmra.mxu0 %v614
      %v1180 = vpop.f32.mrf.mxu0
      %v1181 = vadd.f32 0.0, %v1180
      %1182 = vmatmul.f32.gmra.mxu0 %v617
      %v1183 = vpop.f32.mrf.mxu0
      %v1184 = vadd.f32 0.0, %v1183
      %1185 = vmatmul.f32.gmra.mxu0 %v620
      %v1186 = vpop.f32.mrf.mxu0
      %v1187 = vadd.f32 0.0, %v1186
      %1188 = vmatmul.f32.gmra.mxu0 %v623
      %v1189 = vpop.f32.mrf.mxu0
      %v1190 = vadd.f32 0.0, %v1189
      %1191 = vmatmul.f32.gmra.mxu0 %v626
      %v1192 = vpop.f32.mrf.mxu0
      %v1193 = vadd.f32 0.0, %v1192
      %1194 = vmatmul.f32.gmra.mxu0 %v629
      %v1195 = vpop.f32.mrf.mxu0
      %v1196 = vadd.f32 0.0, %v1195
      %1197 = vmatmul.f32.gmra.mxu0 %v632
      %v1198 = vpop.f32.mrf.mxu0
      %v1199 = vadd.f32 0.0, %v1198
      %1200 = vmatmul.f32.gmra.mxu0 %v635
      %v1201 = vpop.f32.mrf.mxu0
      %v1202 = vadd.f32 0.0, %v1201
      %1203 = vmatmul.f32.gmra.mxu0 %v638
      %v1204 = vpop.f32.mrf.mxu0
      %v1205 = vadd.f32 0.0, %v1204
      %1206 = vmatmul.f32.gmra.mxu0 %v641
      %v1207 = vpop.f32.mrf.mxu0
      %v1208 = vadd.f32 0.0, %v1207
      %1209 = vmatmul.f32.gmra.mxu0 %v644
      %v1210 = vpop.f32.mrf.mxu0
      %v1211 = vadd.f32 0.0, %v1210
      %1212 = vmatmul.f32.gmra.mxu0 %v647
      %v1213 = vpop.f32.mrf.mxu0
      %v1214 = vadd.f32 0.0, %v1213
      %1215 = vmatmul.f32.gmra.mxu0 %v650
      %v1216 = vpop.f32.mrf.mxu0
      %v1217 = vadd.f32 0.0, %v1216
      %1218 = vmatmul.f32.gmra.mxu0 %v653
      %v1219 = vpop.f32.mrf.mxu0
      %v1220 = vadd.f32 0.0, %v1219
      %1221 = vmatmul.f32.gmra.mxu0 %v656
      %v1222 = vpop.f32.mrf.mxu0
      %v1223 = vadd.f32 0.0, %v1222
      %1224 = vmatmul.f32.gmra.mxu0 %v659
      %v1225 = vpop.f32.mrf.mxu0
      %v1226 = vadd.f32 0.0, %v1225
      %1227 = vmatmul.f32.gmra.mxu0 %v662
      %v1228 = vpop.f32.mrf.mxu0
      %v1229 = vadd.f32 0.0, %v1228
      %1230 = vmatmul.f32.gmra.mxu0 %v665
      %v1231 = vpop.f32.mrf.mxu0
      %v1232 = vadd.f32 0.0, %v1231
      %1233 = vmatmul.f32.gmra.mxu0 %v668
      %v1234 = vpop.f32.mrf.mxu0
      %v1235 = vadd.f32 0.0, %v1234
      %1236 = vmatmul.f32.gmra.mxu0 %v671
      %v1237 = vpop.f32.mrf.mxu0
      %v1238 = vadd.f32 0.0, %v1237
      %1239 = vmatmul.f32.gmra.mxu0 %v674
      %v1240 = vpop.f32.mrf.mxu0
      %v1241 = vadd.f32 0.0, %v1240
      %1242 = vmatmul.f32.gmra.mxu0 %v677
      %v1243 = vpop.f32.mrf.mxu0
      %v1244 = vadd.f32 0.0, %v1243
      %1245 = vmatmul.f32.gmra.mxu0 %v680
      %v1246 = vpop.f32.mrf.mxu0
      %v1247 = vadd.f32 0.0, %v1246
      %1248 = vmatmul.f32.gmra.mxu0 %v683
      %v1249 = vpop.f32.mrf.mxu0
      %v1250 = vadd.f32 0.0, %v1249
      %1251 = vmatmul.f32.gmra.mxu0 %v686
      %v1252 = vpop.f32.mrf.mxu0
      %v1253 = vadd.f32 0.0, %v1252
      %1254 = vmatmul.f32.gmra.mxu0 %v689
      %v1255 = vpop.f32.mrf.mxu0
      %v1256 = vadd.f32 0.0, %v1255
      %1257 = vmatmul.f32.gmra.mxu0 %v692
      %v1258 = vpop.f32.mrf.mxu0
      %v1259 = vadd.f32 0.0, %v1258
      %1260 = vmatmul.f32.gmra.mxu0 %v695
      %v1261 = vpop.f32.mrf.mxu0
      %v1262 = vadd.f32 0.0, %v1261
      %1263 = vmatmul.f32.gmra.mxu0 %v698
      %v1264 = vpop.f32.mrf.mxu0
      %v1265 = vadd.f32 0.0, %v1264
      %1266 = vmatmul.f32.gmra.mxu0 %v701
      %v1267 = vpop.f32.mrf.mxu0
      %v1268 = vadd.f32 0.0, %v1267
      %1269 = vdwg.mxu0
      %v1271 = vsel %vm703, %v1139, 0
      %1273 = vmatpush.msra.mxu0 0.0
      %1274 = vmatpush.msra.mxu0 0.0
      %1275 = vmatpush.msra.mxu0 0.0
      %1276 = vmatpush.msra.mxu0 0.0
      %1277 = vmatpush.msra.mxu0 0.0
      %1278 = vmatpush.msra.mxu0 0.0
      %1279 = vmatpush.msra.mxu0 0.0
      %1280 = vmatpush.msra.mxu0 0.0
      %1281 = vmatpush.msra.mxu0 0.0
      %1282 = vmatpush.msra.mxu0 0.0
      %1283 = vmatpush.msra.mxu0 0.0
      %1284 = vmatpush.msra.mxu0 0.0
      %1285 = vmatpush.msra.mxu0 0.0
      %1286 = vmatpush.msra.mxu0 0.0
      %1287 = vmatpush.msra.mxu0 0.0
      %1288 = vmatpush.msra.mxu0 %v1271
      %1289 = vmatmul.f32.gmra.mxu0 %v833
      %v1290 = vpop.f32.mrf.mxu0
      %v1291 = vadd.f32 %v1163, %v1290
      %1292 = vmatmul.f32.gmra.mxu0 %v836
      %v1293 = vpop.f32.mrf.mxu0
      %v1294 = vadd.f32 %v1166, %v1293
      %1295 = vmatmul.f32.gmra.mxu0 %v596
      %v1296 = vpop.f32.mrf.mxu0
      %v1297 = vadd.f32 %v1169, %v1296
      %1298 = vmatmul.f32.gmra.mxu0 %v599
      %v1299 = vpop.f32.mrf.mxu0
      %v1300 = vadd.f32 %v1172, %v1299
      %1301 = vmatmul.f32.gmra.mxu0 %v602
      %v1302 = vpop.f32.mrf.mxu0
      %v1303 = vadd.f32 %v1175, %v1302
      %1304 = vmatmul.f32.gmra.mxu0 %v605
      %v1305 = vpop.f32.mrf.mxu0
      %v1306 = vadd.f32 %v1178, %v1305
      %1307 = vmatmul.f32.gmra.mxu0 %v608
      %v1308 = vpop.f32.mrf.mxu0
      %v1309 = vadd.f32 %v1181, %v1308
      %1310 = vmatmul.f32.gmra.mxu0 %v611
      %v1311 = vpop.f32.mrf.mxu0
      %v1312 = vadd.f32 %v1184, %v1311
      %1313 = vmatmul.f32.gmra.mxu0 %v614
      %v1314 = vpop.f32.mrf.mxu0
      %v1315 = vadd.f32 %v1187, %v1314
      %1316 = vmatmul.f32.gmra.mxu0 %v617
      %v1317 = vpop.f32.mrf.mxu0
      %v1318 = vadd.f32 %v1190, %v1317
      %1319 = vmatmul.f32.gmra.mxu0 %v620
      %v1320 = vpop.f32.mrf.mxu0
      %v1321 = vadd.f32 %v1193, %v1320
      %1322 = vmatmul.f32.gmra.mxu0 %v623
      %v1323 = vpop.f32.mrf.mxu0
      %v1324 = vadd.f32 %v1196, %v1323
      %1325 = vmatmul.f32.gmra.mxu0 %v626
      %v1326 = vpop.f32.mrf.mxu0
      %v1327 = vadd.f32 %v1199, %v1326
      %1328 = vmatmul.f32.gmra.mxu0 %v629
      %v1329 = vpop.f32.mrf.mxu0
      %v1330 = vadd.f32 %v1202, %v1329
      %1331 = vmatmul.f32.gmra.mxu0 %v632
      %v1332 = vpop.f32.mrf.mxu0
      %v1333 = vadd.f32 %v1205, %v1332
      %1334 = vmatmul.f32.gmra.mxu0 %v635
      %v1335 = vpop.f32.mrf.mxu0
      %v1336 = vadd.f32 %v1208, %v1335
      %1337 = vmatmul.f32.gmra.mxu0 %v638
      %v1338 = vpop.f32.mrf.mxu0
      %v1339 = vadd.f32 %v1211, %v1338
      %1340 = vmatmul.f32.gmra.mxu0 %v641
      %v1341 = vpop.f32.mrf.mxu0
      %v1342 = vadd.f32 %v1214, %v1341
      %1343 = vmatmul.f32.gmra.mxu0 %v644
      %v1344 = vpop.f32.mrf.mxu0
      %v1345 = vadd.f32 %v1217, %v1344
      %1346 = vmatmul.f32.gmra.mxu0 %v647
      %v1347 = vpop.f32.mrf.mxu0
      %v1348 = vadd.f32 %v1220, %v1347
      %1349 = vmatmul.f32.gmra.mxu0 %v650
      %v1350 = vpop.f32.mrf.mxu0
      %v1351 = vadd.f32 %v1223, %v1350
      %1352 = vmatmul.f32.gmra.mxu0 %v653
      %v1353 = vpop.f32.mrf.mxu0
      %v1354 = vadd.f32 %v1226, %v1353
      %1355 = vmatmul.f32.gmra.mxu0 %v656
      %v1356 = vpop.f32.mrf.mxu0
      %v1357 = vadd.f32 %v1229, %v1356
      %1358 = vmatmul.f32.gmra.mxu0 %v659
      %v1359 = vpop.f32.mrf.mxu0
      %v1360 = vadd.f32 %v1232, %v1359
      %1361 = vmatmul.f32.gmra.mxu0 %v662
      %v1362 = vpop.f32.mrf.mxu0
      %v1363 = vadd.f32 %v1235, %v1362
      %1364 = vmatmul.f32.gmra.mxu0 %v665
      %v1365 = vpop.f32.mrf.mxu0
      %v1366 = vadd.f32 %v1238, %v1365
      %1367 = vmatmul.f32.gmra.mxu0 %v668
      %v1368 = vpop.f32.mrf.mxu0
      %v1369 = vadd.f32 %v1241, %v1368
      %1370 = vmatmul.f32.gmra.mxu0 %v671
      %v1371 = vpop.f32.mrf.mxu0
      %v1372 = vadd.f32 %v1244, %v1371
      %1373 = vmatmul.f32.gmra.mxu0 %v674
      %v1374 = vpop.f32.mrf.mxu0
      %v1375 = vadd.f32 %v1247, %v1374
      %1376 = vmatmul.f32.gmra.mxu0 %v677
      %v1377 = vpop.f32.mrf.mxu0
      %v1378 = vadd.f32 %v1250, %v1377
      %1379 = vmatmul.f32.gmra.mxu0 %v680
      %v1380 = vpop.f32.mrf.mxu0
      %v1381 = vadd.f32 %v1253, %v1380
      %1382 = vmatmul.f32.gmra.mxu0 %v683
      %v1383 = vpop.f32.mrf.mxu0
      %v1384 = vadd.f32 %v1256, %v1383
      %1385 = vmatmul.f32.gmra.mxu0 %v686
      %v1386 = vpop.f32.mrf.mxu0
      %v1387 = vadd.f32 %v1259, %v1386
      %1388 = vmatmul.f32.gmra.mxu0 %v689
      %v1389 = vpop.f32.mrf.mxu0
      %v1390 = vadd.f32 %v1262, %v1389
      %1391 = vmatmul.f32.gmra.mxu0 %v692
      %v1392 = vpop.f32.mrf.mxu0
      %v1393 = vadd.f32 %v1265, %v1392
      %1394 = vmatmul.f32.gmra.mxu0 %v695
      %v1395 = vpop.f32.mrf.mxu0
      %v1396 = vadd.f32 %v1268, %v1395
      %1397 = vdwg.mxu0
      %s1398 = scalar_lea.vmem %s3, 28
      %v1399 = vld [vmem:[%s1398] sm:$0xf]
      %v1401 = vsel %vm703, %v1399, 0
      %1403 = vmatpush.msra.mxu0 0.0
      %1404 = vmatpush.msra.mxu0 0.0
      %1405 = vmatpush.msra.mxu0 0.0
      %1406 = vmatpush.msra.mxu0 0.0
      %1407 = vmatpush.msra.mxu0 0.0
      %1408 = vmatpush.msra.mxu0 0.0
      %1409 = vmatpush.msra.mxu0 0.0
      %1410 = vmatpush.msra.mxu0 0.0
      %1411 = vmatpush.msra.mxu0 0.0
      %1412 = vmatpush.msra.mxu0 0.0
      %1413 = vmatpush.msra.mxu0 0.0
      %1414 = vmatpush.msra.mxu0 0.0
      %1415 = vmatpush.msra.mxu0 0.0
      %1416 = vmatpush.msra.mxu0 0.0
      %1417 = vmatpush.msra.mxu0 0.0
      %1418 = vmatpush.msra.mxu0 %v1401
      %1419 = vmatmul.f32.gmra.mxu0 %v602
      %v1420 = vpop.f32.mrf.mxu0
      %v1421 = vadd.f32 0.0, %v1420
      %1422 = vmatmul.f32.gmra.mxu0 %v605
      %v1423 = vpop.f32.mrf.mxu0
      %v1424 = vadd.f32 0.0, %v1423
      %1425 = vmatmul.f32.gmra.mxu0 %v608
      %v1426 = vpop.f32.mrf.mxu0
      %v1427 = vadd.f32 0.0, %v1426
      %1428 = vmatmul.f32.gmra.mxu0 %v611
      %v1429 = vpop.f32.mrf.mxu0
      %v1430 = vadd.f32 0.0, %v1429
      %1431 = vmatmul.f32.gmra.mxu0 %v614
      %v1432 = vpop.f32.mrf.mxu0
      %v1433 = vadd.f32 0.0, %v1432
      %1434 = vmatmul.f32.gmra.mxu0 %v617
      %v1435 = vpop.f32.mrf.mxu0
      %v1436 = vadd.f32 0.0, %v1435
      %1437 = vmatmul.f32.gmra.mxu0 %v620
      %v1438 = vpop.f32.mrf.mxu0
      %v1439 = vadd.f32 0.0, %v1438
      %1440 = vmatmul.f32.gmra.mxu0 %v623
      %v1441 = vpop.f32.mrf.mxu0
      %v1442 = vadd.f32 0.0, %v1441
      %1443 = vmatmul.f32.gmra.mxu0 %v626
      %v1444 = vpop.f32.mrf.mxu0
      %v1445 = vadd.f32 0.0, %v1444
      %1446 = vmatmul.f32.gmra.mxu0 %v629
      %v1447 = vpop.f32.mrf.mxu0
      %v1448 = vadd.f32 0.0, %v1447
      %1449 = vmatmul.f32.gmra.mxu0 %v632
      %v1450 = vpop.f32.mrf.mxu0
      %v1451 = vadd.f32 0.0, %v1450
      %1452 = vmatmul.f32.gmra.mxu0 %v635
      %v1453 = vpop.f32.mrf.mxu0
      %v1454 = vadd.f32 0.0, %v1453
      %1455 = vmatmul.f32.gmra.mxu0 %v638
      %v1456 = vpop.f32.mrf.mxu0
      %v1457 = vadd.f32 0.0, %v1456
      %1458 = vmatmul.f32.gmra.mxu0 %v641
      %v1459 = vpop.f32.mrf.mxu0
      %v1460 = vadd.f32 0.0, %v1459
      %1461 = vmatmul.f32.gmra.mxu0 %v644
      %v1462 = vpop.f32.mrf.mxu0
      %v1463 = vadd.f32 0.0, %v1462
      %1464 = vmatmul.f32.gmra.mxu0 %v647
      %v1465 = vpop.f32.mrf.mxu0
      %v1466 = vadd.f32 0.0, %v1465
      %1467 = vmatmul.f32.gmra.mxu0 %v650
      %v1468 = vpop.f32.mrf.mxu0
      %v1469 = vadd.f32 0.0, %v1468
      %1470 = vmatmul.f32.gmra.mxu0 %v653
      %v1471 = vpop.f32.mrf.mxu0
      %v1472 = vadd.f32 0.0, %v1471
      %1473 = vmatmul.f32.gmra.mxu0 %v656
      %v1474 = vpop.f32.mrf.mxu0
      %v1475 = vadd.f32 0.0, %v1474
      %1476 = vmatmul.f32.gmra.mxu0 %v659
      %v1477 = vpop.f32.mrf.mxu0
      %v1478 = vadd.f32 0.0, %v1477
      %1479 = vmatmul.f32.gmra.mxu0 %v662
      %v1480 = vpop.f32.mrf.mxu0
      %v1481 = vadd.f32 0.0, %v1480
      %1482 = vmatmul.f32.gmra.mxu0 %v665
      %v1483 = vpop.f32.mrf.mxu0
      %v1484 = vadd.f32 0.0, %v1483
      %1485 = vmatmul.f32.gmra.mxu0 %v668
      %v1486 = vpop.f32.mrf.mxu0
      %v1487 = vadd.f32 0.0, %v1486
      %1488 = vmatmul.f32.gmra.mxu0 %v671
      %v1489 = vpop.f32.mrf.mxu0
      %v1490 = vadd.f32 0.0, %v1489
      %1491 = vmatmul.f32.gmra.mxu0 %v674
      %v1492 = vpop.f32.mrf.mxu0
      %v1493 = vadd.f32 0.0, %v1492
      %1494 = vmatmul.f32.gmra.mxu0 %v677
      %v1495 = vpop.f32.mrf.mxu0
      %v1496 = vadd.f32 0.0, %v1495
      %1497 = vmatmul.f32.gmra.mxu0 %v680
      %v1498 = vpop.f32.mrf.mxu0
      %v1499 = vadd.f32 0.0, %v1498
      %1500 = vmatmul.f32.gmra.mxu0 %v683
      %v1501 = vpop.f32.mrf.mxu0
      %v1502 = vadd.f32 0.0, %v1501
      %1503 = vmatmul.f32.gmra.mxu0 %v686
      %v1504 = vpop.f32.mrf.mxu0
      %v1505 = vadd.f32 0.0, %v1504
      %1506 = vmatmul.f32.gmra.mxu0 %v689
      %v1507 = vpop.f32.mrf.mxu0
      %v1508 = vadd.f32 0.0, %v1507
      %1509 = vmatmul.f32.gmra.mxu0 %v692
      %v1510 = vpop.f32.mrf.mxu0
      %v1511 = vadd.f32 0.0, %v1510
      %1512 = vmatmul.f32.gmra.mxu0 %v695
      %v1513 = vpop.f32.mrf.mxu0
      %v1514 = vadd.f32 0.0, %v1513
      %1515 = vmatmul.f32.gmra.mxu0 %v698
      %v1516 = vpop.f32.mrf.mxu0
      %v1517 = vadd.f32 0.0, %v1516
      %1518 = vmatmul.f32.gmra.mxu0 %v701
      %v1519 = vpop.f32.mrf.mxu0
      %v1520 = vadd.f32 0.0, %v1519
      %1521 = vmatmul.f32.gmra.mxu0 %v969
      %v1522 = vpop.f32.mrf.mxu0
      %v1523 = vadd.f32 0.0, %v1522
      %1524 = vmatmul.f32.gmra.mxu0 %v972
      %v1525 = vpop.f32.mrf.mxu0
      %v1526 = vadd.f32 0.0, %v1525
      %1527 = vdwg.mxu0
      %v1528 = vadd.f32 %v1291, %v1421
      %v1529 = vadd.f32 %v1294, %v1424
      %v1530 = vadd.f32 %v1297, %v1427
      %v1531 = vadd.f32 %v1300, %v1430
      %v1532 = vadd.f32 %v1303, %v1433
      %v1533 = vadd.f32 %v1306, %v1436
      %v1534 = vadd.f32 %v1309, %v1439
      %v1535 = vadd.f32 %v1312, %v1442
      %v1536 = vadd.f32 %v1315, %v1445
      %v1537 = vadd.f32 %v1318, %v1448
      %v1538 = vadd.f32 %v1321, %v1451
      %v1539 = vadd.f32 %v1324, %v1454
      %v1540 = vadd.f32 %v1327, %v1457
      %v1541 = vadd.f32 %v1330, %v1460
      %v1542 = vadd.f32 %v1333, %v1463
      %v1543 = vadd.f32 %v1336, %v1466
      %v1544 = vadd.f32 %v1339, %v1469
      %v1545 = vadd.f32 %v1342, %v1472
      %v1546 = vadd.f32 %v1345, %v1475
      %v1547 = vadd.f32 %v1348, %v1478
      %v1548 = vadd.f32 %v1351, %v1481
      %v1549 = vadd.f32 %v1354, %v1484
      %v1550 = vadd.f32 %v1357, %v1487
      %v1551 = vadd.f32 %v1360, %v1490
      %v1552 = vadd.f32 %v1363, %v1493
      %v1553 = vadd.f32 %v1366, %v1496
      %v1554 = vadd.f32 %v1369, %v1499
      %v1555 = vadd.f32 %v1372, %v1502
      %v1556 = vadd.f32 %v1375, %v1505
      %v1557 = vadd.f32 %v1378, %v1508
      %v1558 = vadd.f32 %v1381, %v1511
      %v1559 = vadd.f32 %v1384, %v1514
      %v1560 = vadd.f32 %v1387, %v1517
      %v1561 = vadd.f32 %v1390, %v1520
      %v1562 = vadd.f32 %v1393, %v1523
      %v1563 = vadd.f32 %v1396, %v1526
      %s1564 = scalar_lea.vmem %s3, 8
      %v1565 = vld [vmem:[%s1564] sm:$0xf]
      %s1566 = scalar_lea.vmem %s3, 20
      %v1567 = vld [vmem:[%s1566] sm:$0xf]
      %v1569 = vsel %vm703, %v1567, 0
      %1571 = vmatpush.msra.mxu0 0.0
      %1572 = vmatpush.msra.mxu0 0.0
      %1573 = vmatpush.msra.mxu0 0.0
      %1574 = vmatpush.msra.mxu0 0.0
      %1575 = vmatpush.msra.mxu0 0.0
      %1576 = vmatpush.msra.mxu0 0.0
      %1577 = vmatpush.msra.mxu0 0.0
      %1578 = vmatpush.msra.mxu0 0.0
      %1579 = vmatpush.msra.mxu0 0.0
      %1580 = vmatpush.msra.mxu0 0.0
      %1581 = vmatpush.msra.mxu0 0.0
      %1582 = vmatpush.msra.mxu0 0.0
      %1583 = vmatpush.msra.mxu0 0.0
      %1584 = vmatpush.msra.mxu0 0.0
      %1585 = vmatpush.msra.mxu0 0.0
      %1586 = vmatpush.msra.mxu0 %v1569
      %1587 = vmatmul.f32.gmra.mxu0 %v596
      %v1588 = vpop.f32.mrf.mxu0
      %v1589 = vadd.f32 0.0, %v1588
      %1590 = vmatmul.f32.gmra.mxu0 %v599
      %v1591 = vpop.f32.mrf.mxu0
      %v1592 = vadd.f32 0.0, %v1591
      %1593 = vmatmul.f32.gmra.mxu0 %v602
      %v1594 = vpop.f32.mrf.mxu0
      %v1595 = vadd.f32 0.0, %v1594
      %1596 = vmatmul.f32.gmra.mxu0 %v605
      %v1597 = vpop.f32.mrf.mxu0
      %v1598 = vadd.f32 0.0, %v1597
      %1599 = vmatmul.f32.gmra.mxu0 %v608
      %v1600 = vpop.f32.mrf.mxu0
      %v1601 = vadd.f32 0.0, %v1600
      %1602 = vmatmul.f32.gmra.mxu0 %v611
      %v1603 = vpop.f32.mrf.mxu0
      %v1604 = vadd.f32 0.0, %v1603
      %1605 = vmatmul.f32.gmra.mxu0 %v614
      %v1606 = vpop.f32.mrf.mxu0
      %v1607 = vadd.f32 0.0, %v1606
      %1608 = vmatmul.f32.gmra.mxu0 %v617
      %v1609 = vpop.f32.mrf.mxu0
      %v1610 = vadd.f32 0.0, %v1609
      %1611 = vmatmul.f32.gmra.mxu0 %v620
      %v1612 = vpop.f32.mrf.mxu0
      %v1613 = vadd.f32 0.0, %v1612
      %1614 = vmatmul.f32.gmra.mxu0 %v623
      %v1615 = vpop.f32.mrf.mxu0
      %v1616 = vadd.f32 0.0, %v1615
      %1617 = vmatmul.f32.gmra.mxu0 %v626
      %v1618 = vpop.f32.mrf.mxu0
      %v1619 = vadd.f32 0.0, %v1618
      %1620 = vmatmul.f32.gmra.mxu0 %v629
      %v1621 = vpop.f32.mrf.mxu0
      %v1622 = vadd.f32 0.0, %v1621
      %1623 = vmatmul.f32.gmra.mxu0 %v632
      %v1624 = vpop.f32.mrf.mxu0
      %v1625 = vadd.f32 0.0, %v1624
      %1626 = vmatmul.f32.gmra.mxu0 %v635
      %v1627 = vpop.f32.mrf.mxu0
      %v1628 = vadd.f32 0.0, %v1627
      %1629 = vmatmul.f32.gmra.mxu0 %v638
      %v1630 = vpop.f32.mrf.mxu0
      %v1631 = vadd.f32 0.0, %v1630
      %1632 = vmatmul.f32.gmra.mxu0 %v641
      %v1633 = vpop.f32.mrf.mxu0
      %v1634 = vadd.f32 0.0, %v1633
      %1635 = vmatmul.f32.gmra.mxu0 %v644
      %v1636 = vpop.f32.mrf.mxu0
      %v1637 = vadd.f32 0.0, %v1636
      %1638 = vmatmul.f32.gmra.mxu0 %v647
      %v1639 = vpop.f32.mrf.mxu0
      %v1640 = vadd.f32 0.0, %v1639
      %1641 = vmatmul.f32.gmra.mxu0 %v650
      %v1642 = vpop.f32.mrf.mxu0
      %v1643 = vadd.f32 0.0, %v1642
      %1644 = vmatmul.f32.gmra.mxu0 %v653
      %v1645 = vpop.f32.mrf.mxu0
      %v1646 = vadd.f32 0.0, %v1645
      %1647 = vmatmul.f32.gmra.mxu0 %v656
      %v1648 = vpop.f32.mrf.mxu0
      %v1649 = vadd.f32 0.0, %v1648
      %1650 = vmatmul.f32.gmra.mxu0 %v659
      %v1651 = vpop.f32.mrf.mxu0
      %v1652 = vadd.f32 0.0, %v1651
      %1653 = vmatmul.f32.gmra.mxu0 %v662
      %v1654 = vpop.f32.mrf.mxu0
      %v1655 = vadd.f32 0.0, %v1654
      %1656 = vmatmul.f32.gmra.mxu0 %v665
      %v1657 = vpop.f32.mrf.mxu0
      %v1658 = vadd.f32 0.0, %v1657
      %1659 = vmatmul.f32.gmra.mxu0 %v668
      %v1660 = vpop.f32.mrf.mxu0
      %v1661 = vadd.f32 0.0, %v1660
      %1662 = vmatmul.f32.gmra.mxu0 %v671
      %v1663 = vpop.f32.mrf.mxu0
      %v1664 = vadd.f32 0.0, %v1663
      %1665 = vmatmul.f32.gmra.mxu0 %v674
      %v1666 = vpop.f32.mrf.mxu0
      %v1667 = vadd.f32 0.0, %v1666
      %1668 = vmatmul.f32.gmra.mxu0 %v677
      %v1669 = vpop.f32.mrf.mxu0
      %v1670 = vadd.f32 0.0, %v1669
      %1671 = vmatmul.f32.gmra.mxu0 %v680
      %v1672 = vpop.f32.mrf.mxu0
      %v1673 = vadd.f32 0.0, %v1672
      %1674 = vmatmul.f32.gmra.mxu0 %v683
      %v1675 = vpop.f32.mrf.mxu0
      %v1676 = vadd.f32 0.0, %v1675
      %1677 = vmatmul.f32.gmra.mxu0 %v686
      %v1678 = vpop.f32.mrf.mxu0
      %v1679 = vadd.f32 0.0, %v1678
      %1680 = vmatmul.f32.gmra.mxu0 %v689
      %v1681 = vpop.f32.mrf.mxu0
      %v1682 = vadd.f32 0.0, %v1681
      %1683 = vmatmul.f32.gmra.mxu0 %v692
      %v1684 = vpop.f32.mrf.mxu0
      %v1685 = vadd.f32 0.0, %v1684
      %1686 = vmatmul.f32.gmra.mxu0 %v695
      %v1687 = vpop.f32.mrf.mxu0
      %v1688 = vadd.f32 0.0, %v1687
      %1689 = vmatmul.f32.gmra.mxu0 %v698
      %v1690 = vpop.f32.mrf.mxu0
      %v1691 = vadd.f32 0.0, %v1690
      %1692 = vmatmul.f32.gmra.mxu0 %v701
      %v1693 = vpop.f32.mrf.mxu0
      %v1694 = vadd.f32 0.0, %v1693
      %1695 = vdwg.mxu0
      %v1697 = vsel %vm703, %v1565, 0
      %1699 = vmatpush.msra.mxu0 0.0
      %1700 = vmatpush.msra.mxu0 0.0
      %1701 = vmatpush.msra.mxu0 0.0
      %1702 = vmatpush.msra.mxu0 0.0
      %1703 = vmatpush.msra.mxu0 0.0
      %1704 = vmatpush.msra.mxu0 0.0
      %1705 = vmatpush.msra.mxu0 0.0
      %1706 = vmatpush.msra.mxu0 0.0
      %1707 = vmatpush.msra.mxu0 0.0
      %1708 = vmatpush.msra.mxu0 0.0
      %1709 = vmatpush.msra.mxu0 0.0
      %1710 = vmatpush.msra.mxu0 0.0
      %1711 = vmatpush.msra.mxu0 0.0
      %1712 = vmatpush.msra.mxu0 0.0
      %1713 = vmatpush.msra.mxu0 0.0
      %1714 = vmatpush.msra.mxu0 %v1697
      %1715 = vmatmul.f32.gmra.mxu0 %v833
      %v1716 = vpop.f32.mrf.mxu0
      %v1717 = vadd.f32 %v1589, %v1716
      %1718 = vmatmul.f32.gmra.mxu0 %v836
      %v1719 = vpop.f32.mrf.mxu0
      %v1720 = vadd.f32 %v1592, %v1719
      %1721 = vmatmul.f32.gmra.mxu0 %v596
      %v1722 = vpop.f32.mrf.mxu0
      %v1723 = vadd.f32 %v1595, %v1722
      %1724 = vmatmul.f32.gmra.mxu0 %v599
      %v1725 = vpop.f32.mrf.mxu0
      %v1726 = vadd.f32 %v1598, %v1725
      %1727 = vmatmul.f32.gmra.mxu0 %v602
      %v1728 = vpop.f32.mrf.mxu0
      %v1729 = vadd.f32 %v1601, %v1728
      %1730 = vmatmul.f32.gmra.mxu0 %v605
      %v1731 = vpop.f32.mrf.mxu0
      %v1732 = vadd.f32 %v1604, %v1731
      %1733 = vmatmul.f32.gmra.mxu0 %v608
      %v1734 = vpop.f32.mrf.mxu0
      %v1735 = vadd.f32 %v1607, %v1734
      %1736 = vmatmul.f32.gmra.mxu0 %v611
      %v1737 = vpop.f32.mrf.mxu0
      %v1738 = vadd.f32 %v1610, %v1737
      %1739 = vmatmul.f32.gmra.mxu0 %v614
      %v1740 = vpop.f32.mrf.mxu0
      %v1741 = vadd.f32 %v1613, %v1740
      %1742 = vmatmul.f32.gmra.mxu0 %v617
      %v1743 = vpop.f32.mrf.mxu0
      %v1744 = vadd.f32 %v1616, %v1743
      %1745 = vmatmul.f32.gmra.mxu0 %v620
      %v1746 = vpop.f32.mrf.mxu0
      %v1747 = vadd.f32 %v1619, %v1746
      %1748 = vmatmul.f32.gmra.mxu0 %v623
      %v1749 = vpop.f32.mrf.mxu0
      %v1750 = vadd.f32 %v1622, %v1749
      %1751 = vmatmul.f32.gmra.mxu0 %v626
      %v1752 = vpop.f32.mrf.mxu0
      %v1753 = vadd.f32 %v1625, %v1752
      %1754 = vmatmul.f32.gmra.mxu0 %v629
      %v1755 = vpop.f32.mrf.mxu0
      %v1756 = vadd.f32 %v1628, %v1755
      %1757 = vmatmul.f32.gmra.mxu0 %v632
      %v1758 = vpop.f32.mrf.mxu0
      %v1759 = vadd.f32 %v1631, %v1758
      %1760 = vmatmul.f32.gmra.mxu0 %v635
      %v1761 = vpop.f32.mrf.mxu0
      %v1762 = vadd.f32 %v1634, %v1761
      %1763 = vmatmul.f32.gmra.mxu0 %v638
      %v1764 = vpop.f32.mrf.mxu0
      %v1765 = vadd.f32 %v1637, %v1764
      %1766 = vmatmul.f32.gmra.mxu0 %v641
      %v1767 = vpop.f32.mrf.mxu0
      %v1768 = vadd.f32 %v1640, %v1767
      %1769 = vmatmul.f32.gmra.mxu0 %v644
      %v1770 = vpop.f32.mrf.mxu0
      %v1771 = vadd.f32 %v1643, %v1770
      %1772 = vmatmul.f32.gmra.mxu0 %v647
      %v1773 = vpop.f32.mrf.mxu0
      %v1774 = vadd.f32 %v1646, %v1773
      %1775 = vmatmul.f32.gmra.mxu0 %v650
      %v1776 = vpop.f32.mrf.mxu0
      %v1777 = vadd.f32 %v1649, %v1776
      %1778 = vmatmul.f32.gmra.mxu0 %v653
      %v1779 = vpop.f32.mrf.mxu0
      %v1780 = vadd.f32 %v1652, %v1779
      %1781 = vmatmul.f32.gmra.mxu0 %v656
      %v1782 = vpop.f32.mrf.mxu0
      %v1783 = vadd.f32 %v1655, %v1782
      %1784 = vmatmul.f32.gmra.mxu0 %v659
      %v1785 = vpop.f32.mrf.mxu0
      %v1786 = vadd.f32 %v1658, %v1785
      %1787 = vmatmul.f32.gmra.mxu0 %v662
      %v1788 = vpop.f32.mrf.mxu0
      %v1789 = vadd.f32 %v1661, %v1788
      %1790 = vmatmul.f32.gmra.mxu0 %v665
      %v1791 = vpop.f32.mrf.mxu0
      %v1792 = vadd.f32 %v1664, %v1791
      %1793 = vmatmul.f32.gmra.mxu0 %v668
      %v1794 = vpop.f32.mrf.mxu0
      %v1795 = vadd.f32 %v1667, %v1794
      %1796 = vmatmul.f32.gmra.mxu0 %v671
      %v1797 = vpop.f32.mrf.mxu0
      %v1798 = vadd.f32 %v1670, %v1797
      %1799 = vmatmul.f32.gmra.mxu0 %v674
      %v1800 = vpop.f32.mrf.mxu0
      %v1801 = vadd.f32 %v1673, %v1800
      %1802 = vmatmul.f32.gmra.mxu0 %v677
      %v1803 = vpop.f32.mrf.mxu0
      %v1804 = vadd.f32 %v1676, %v1803
      %1805 = vmatmul.f32.gmra.mxu0 %v680
      %v1806 = vpop.f32.mrf.mxu0
      %v1807 = vadd.f32 %v1679, %v1806
      %1808 = vmatmul.f32.gmra.mxu0 %v683
      %v1809 = vpop.f32.mrf.mxu0
      %v1810 = vadd.f32 %v1682, %v1809
      %1811 = vmatmul.f32.gmra.mxu0 %v686
      %v1812 = vpop.f32.mrf.mxu0
      %v1813 = vadd.f32 %v1685, %v1812
      %1814 = vmatmul.f32.gmra.mxu0 %v689
      %v1815 = vpop.f32.mrf.mxu0
      %v1816 = vadd.f32 %v1688, %v1815
      %1817 = vmatmul.f32.gmra.mxu0 %v692
      %v1818 = vpop.f32.mrf.mxu0
      %v1819 = vadd.f32 %v1691, %v1818
      %1820 = vmatmul.f32.gmra.mxu0 %v695
      %v1821 = vpop.f32.mrf.mxu0
      %v1822 = vadd.f32 %v1694, %v1821
      %1823 = vdwg.mxu0
      %s1824 = scalar_lea.vmem %s3, 32
      %v1825 = vld [vmem:[%s1824] sm:$0xf]
      %v1827 = vsel %vm703, %v1825, 0
      %1829 = vmatpush.msra.mxu0 0.0
      %1830 = vmatpush.msra.mxu0 0.0
      %1831 = vmatpush.msra.mxu0 0.0
      %1832 = vmatpush.msra.mxu0 0.0
      %1833 = vmatpush.msra.mxu0 0.0
      %1834 = vmatpush.msra.mxu0 0.0
      %1835 = vmatpush.msra.mxu0 0.0
      %1836 = vmatpush.msra.mxu0 0.0
      %1837 = vmatpush.msra.mxu0 0.0
      %1838 = vmatpush.msra.mxu0 0.0
      %1839 = vmatpush.msra.mxu0 0.0
      %1840 = vmatpush.msra.mxu0 0.0
      %1841 = vmatpush.msra.mxu0 0.0
      %1842 = vmatpush.msra.mxu0 0.0
      %1843 = vmatpush.msra.mxu0 0.0
      %1844 = vmatpush.msra.mxu0 %v1827
      %1845 = vmatmul.f32.gmra.mxu0 %v602
      %v1846 = vpop.f32.mrf.mxu0
      %v1847 = vadd.f32 0.0, %v1846
      %1848 = vmatmul.f32.gmra.mxu0 %v605
      %v1849 = vpop.f32.mrf.mxu0
      %v1850 = vadd.f32 0.0, %v1849
      %1851 = vmatmul.f32.gmra.mxu0 %v608
      %v1852 = vpop.f32.mrf.mxu0
      %v1853 = vadd.f32 0.0, %v1852
      %1854 = vmatmul.f32.gmra.mxu0 %v611
      %v1855 = vpop.f32.mrf.mxu0
      %v1856 = vadd.f32 0.0, %v1855
      %1857 = vmatmul.f32.gmra.mxu0 %v614
      %v1858 = vpop.f32.mrf.mxu0
      %v1859 = vadd.f32 0.0, %v1858
      %1860 = vmatmul.f32.gmra.mxu0 %v617
      %v1861 = vpop.f32.mrf.mxu0
      %v1862 = vadd.f32 0.0, %v1861
      %1863 = vmatmul.f32.gmra.mxu0 %v620
      %v1864 = vpop.f32.mrf.mxu0
      %v1865 = vadd.f32 0.0, %v1864
      %1866 = vmatmul.f32.gmra.mxu0 %v623
      %v1867 = vpop.f32.mrf.mxu0
      %v1868 = vadd.f32 0.0, %v1867
      %1869 = vmatmul.f32.gmra.mxu0 %v626
      %v1870 = vpop.f32.mrf.mxu0
      %v1871 = vadd.f32 0.0, %v1870
      %1872 = vmatmul.f32.gmra.mxu0 %v629
      %v1873 = vpop.f32.mrf.mxu0
      %v1874 = vadd.f32 0.0, %v1873
      %1875 = vmatmul.f32.gmra.mxu0 %v632
      %v1876 = vpop.f32.mrf.mxu0
      %v1877 = vadd.f32 0.0, %v1876
      %1878 = vmatmul.f32.gmra.mxu0 %v635
      %v1879 = vpop.f32.mrf.mxu0
      %v1880 = vadd.f32 0.0, %v1879
      %1881 = vmatmul.f32.gmra.mxu0 %v638
      %v1882 = vpop.f32.mrf.mxu0
      %v1883 = vadd.f32 0.0, %v1882
      %1884 = vmatmul.f32.gmra.mxu0 %v641
      %v1885 = vpop.f32.mrf.mxu0
      %v1886 = vadd.f32 0.0, %v1885
      %1887 = vmatmul.f32.gmra.mxu0 %v644
      %v1888 = vpop.f32.mrf.mxu0
      %v1889 = vadd.f32 0.0, %v1888
      %1890 = vmatmul.f32.gmra.mxu0 %v647
      %v1891 = vpop.f32.mrf.mxu0
      %v1892 = vadd.f32 0.0, %v1891
      %1893 = vmatmul.f32.gmra.mxu0 %v650
      %v1894 = vpop.f32.mrf.mxu0
      %v1895 = vadd.f32 0.0, %v1894
      %1896 = vmatmul.f32.gmra.mxu0 %v653
      %v1897 = vpop.f32.mrf.mxu0
      %v1898 = vadd.f32 0.0, %v1897
      %1899 = vmatmul.f32.gmra.mxu0 %v656
      %v1900 = vpop.f32.mrf.mxu0
      %v1901 = vadd.f32 0.0, %v1900
      %1902 = vmatmul.f32.gmra.mxu0 %v659
      %v1903 = vpop.f32.mrf.mxu0
      %v1904 = vadd.f32 0.0, %v1903
      %1905 = vmatmul.f32.gmra.mxu0 %v662
      %v1906 = vpop.f32.mrf.mxu0
      %v1907 = vadd.f32 0.0, %v1906
      %1908 = vmatmul.f32.gmra.mxu0 %v665
      %v1909 = vpop.f32.mrf.mxu0
      %v1910 = vadd.f32 0.0, %v1909
      %1911 = vmatmul.f32.gmra.mxu0 %v668
      %v1912 = vpop.f32.mrf.mxu0
      %v1913 = vadd.f32 0.0, %v1912
      %1914 = vmatmul.f32.gmra.mxu0 %v671
      %v1915 = vpop.f32.mrf.mxu0
      %v1916 = vadd.f32 0.0, %v1915
      %1917 = vmatmul.f32.gmra.mxu0 %v674
      %v1918 = vpop.f32.mrf.mxu0
      %v1919 = vadd.f32 0.0, %v1918
      %1920 = vmatmul.f32.gmra.mxu0 %v677
      %v1921 = vpop.f32.mrf.mxu0
      %v1922 = vadd.f32 0.0, %v1921
      %1923 = vmatmul.f32.gmra.mxu0 %v680
      %v1924 = vpop.f32.mrf.mxu0
      %v1925 = vadd.f32 0.0, %v1924
      %1926 = vmatmul.f32.gmra.mxu0 %v683
      %v1927 = vpop.f32.mrf.mxu0
      %v1928 = vadd.f32 0.0, %v1927
      %1929 = vmatmul.f32.gmra.mxu0 %v686
      %v1930 = vpop.f32.mrf.mxu0
      %v1931 = vadd.f32 0.0, %v1930
      %1932 = vmatmul.f32.gmra.mxu0 %v689
      %v1933 = vpop.f32.mrf.mxu0
      %v1934 = vadd.f32 0.0, %v1933
      %1935 = vmatmul.f32.gmra.mxu0 %v692
      %v1936 = vpop.f32.mrf.mxu0
      %v1937 = vadd.f32 0.0, %v1936
      %1938 = vmatmul.f32.gmra.mxu0 %v695
      %v1939 = vpop.f32.mrf.mxu0
      %v1940 = vadd.f32 0.0, %v1939
      %1941 = vmatmul.f32.gmra.mxu0 %v698
      %v1942 = vpop.f32.mrf.mxu0
      %v1943 = vadd.f32 0.0, %v1942
      %1944 = vmatmul.f32.gmra.mxu0 %v701
      %v1945 = vpop.f32.mrf.mxu0
      %v1946 = vadd.f32 0.0, %v1945
      %1947 = vmatmul.f32.gmra.mxu0 %v969
      %v1948 = vpop.f32.mrf.mxu0
      %v1949 = vadd.f32 0.0, %v1948
      %1950 = vmatmul.f32.gmra.mxu0 %v972
      %v1951 = vpop.f32.mrf.mxu0
      %v1952 = vadd.f32 0.0, %v1951
      %1953 = vdwg.mxu0
      %v1954 = vadd.f32 %v1717, %v1847
      %v1955 = vadd.f32 %v1720, %v1850
      %v1956 = vadd.f32 %v1723, %v1853
      %v1957 = vadd.f32 %v1726, %v1856
      %v1958 = vadd.f32 %v1729, %v1859
      %v1959 = vadd.f32 %v1732, %v1862
      %v1960 = vadd.f32 %v1735, %v1865
      %v1961 = vadd.f32 %v1738, %v1868
      %v1962 = vadd.f32 %v1741, %v1871
      %v1963 = vadd.f32 %v1744, %v1874
      %v1964 = vadd.f32 %v1747, %v1877
      %v1965 = vadd.f32 %v1750, %v1880
      %v1966 = vadd.f32 %v1753, %v1883
      %v1967 = vadd.f32 %v1756, %v1886
      %v1968 = vadd.f32 %v1759, %v1889
      %v1969 = vadd.f32 %v1762, %v1892
      %v1970 = vadd.f32 %v1765, %v1895
      %v1971 = vadd.f32 %v1768, %v1898
      %v1972 = vadd.f32 %v1771, %v1901
      %v1973 = vadd.f32 %v1774, %v1904
      %v1974 = vadd.f32 %v1777, %v1907
      %v1975 = vadd.f32 %v1780, %v1910
      %v1976 = vadd.f32 %v1783, %v1913
      %v1977 = vadd.f32 %v1786, %v1916
      %v1978 = vadd.f32 %v1789, %v1919
      %v1979 = vadd.f32 %v1792, %v1922
      %v1980 = vadd.f32 %v1795, %v1925
      %v1981 = vadd.f32 %v1798, %v1928
      %v1982 = vadd.f32 %v1801, %v1931
      %v1983 = vadd.f32 %v1804, %v1934
      %v1984 = vadd.f32 %v1807, %v1937
      %v1985 = vadd.f32 %v1810, %v1940
      %v1986 = vadd.f32 %v1813, %v1943
      %v1987 = vadd.f32 %v1816, %v1946
      %v1988 = vadd.f32 %v1819, %v1949
      %v1989 = vadd.f32 %v1822, %v1952
      %v1990 = vlaneseq
      %v1991 = vshrl.u32 %v1990, 7
      %v1992 = vadd.s32 %v1991, 8
      %vm1993 = vcmp.gt.s32.totalorder %v1991, 0
      %vm1994 = vcmp.gt.s32.totalorder %v1992, 0
      %v1995 = vrot.slane %v1102, 7
      %v1996 = vrot.slane %v1103, 7
      %v1997 = vrot.slane %v1104, 7
      %v1998 = vrot.slane %v1105, 7
      %v1999 = vrot.slane %v1106, 7
      %v2000 = vrot.slane %v1107, 7
      %v2001 = vrot.slane %v1108, 7
      %v2002 = vrot.slane %v1109, 7
      %v2003 = vrot.slane %v1110, 7
      %v2004 = vrot.slane %v1111, 7
      %v2005 = vrot.slane %v1112, 7
      %v2006 = vrot.slane %v1113, 7
      %v2007 = vrot.slane %v1114, 7
      %v2008 = vrot.slane %v1115, 7
      %v2009 = vrot.slane %v1116, 7
      %v2010 = vrot.slane %v1117, 7
      %v2011 = vrot.slane %v1118, 7
      %v2012 = vrot.slane %v1119, 7
      %v2013 = vrot.slane %v1120, 7
      %v2014 = vrot.slane %v1121, 7
      %v2015 = vrot.slane %v1122, 7
      %v2016 = vrot.slane %v1123, 7
      %v2017 = vrot.slane %v1124, 7
      %v2018 = vrot.slane %v1125, 7
      %v2019 = vrot.slane %v1126, 7
      %v2020 = vrot.slane %v1127, 7
      %v2021 = vrot.slane %v1128, 7
      %v2022 = vrot.slane %v1129, 7
      %v2023 = vrot.slane %v1130, 7
      %v2024 = vrot.slane %v1131, 7
      %v2025 = vrot.slane %v1132, 7
      %v2026 = vrot.slane %v1133, 7
      %v2027 = vrot.slane %v1134, 7
      %v2028 = vrot.slane %v1135, 7
      %v2029 = vrot.slane %v1136, 7
      %v2030 = vrot.slane %v1137, 7
      %vm2031 = vcmp.lt.s32.totalorder %v1991, 1
      %v2032 = vsel %vm2031, %v2029, %v2030
      %v2033 = vsel %vm2031, %v2028, %v2029
      %v2034 = vsel %vm2031, %v2027, %v2028
      %v2035 = vsel %vm2031, %v2026, %v2027
      %v2036 = vsel %vm2031, %v2025, %v2026
      %v2037 = vsel %vm2031, %v2024, %v2025
      %v2038 = vsel %vm2031, %v2023, %v2024
      %v2039 = vsel %vm2031, %v2022, %v2023
      %v2040 = vsel %vm2031, %v2021, %v2022
      %v2041 = vsel %vm2031, %v2020, %v2021
      %v2042 = vsel %vm2031, %v2019, %v2020
      %v2043 = vsel %vm2031, %v2018, %v2019
      %v2044 = vsel %vm2031, %v2017, %v2018
      %v2045 = vsel %vm2031, %v2016, %v2017
      %v2046 = vsel %vm2031, %v2015, %v2016
      %v2047 = vsel %vm2031, %v2014, %v2015
      %v2048 = vsel %vm2031, %v2013, %v2014
      %v2049 = vsel %vm2031, %v2012, %v2013
      %v2050 = vsel %vm2031, %v2011, %v2012
      %v2051 = vsel %vm2031, %v2010, %v2011
      %v2052 = vsel %vm2031, %v2009, %v2010
      %v2053 = vsel %vm2031, %v2008, %v2009
      %v2054 = vsel %vm2031, %v2007, %v2008
      %v2055 = vsel %vm2031, %v2006, %v2007
      %v2056 = vsel %vm2031, %v2005, %v2006
      %v2057 = vsel %vm2031, %v2004, %v2005
      %v2058 = vsel %vm2031, %v2003, %v2004
      %v2059 = vsel %vm2031, %v2002, %v2003
      %v2060 = vsel %vm2031, %v2001, %v2002
      %v2061 = vsel %vm2031, %v2000, %v2001
      %v2062 = vsel %vm2031, %v1999, %v2000
      %v2063 = vsel %vm2031, %v1998, %v1999
      %v2064 = vsel %vm2031, %v1997, %v1998
      %v2065 = vsel %vm2031, %v1996, %v1997
      %v2066 = vsel %vm2031, %v1995, %v1996
      %v2067 = vsel %vm2031, %v2030, %v1995
      %v2068 = vsel %vm1993, 1, 0
      %v2069 = vsel %vm1994, 1, 0
      %vm2070 = vcmp.eq.s32.totalorder %v2068, 1
      %vm2071 = vcmp.eq.s32.totalorder %v2069, 1
      %v2072 = vsel %vm2070, %v2067, 0.0
      %v2073 = vsel %vm2071, %v2066, 0.0
      %v2074 = vsel %vm2070, %v2065, 0.0
      %v2075 = vsel %vm2071, %v2064, 0.0
      %v2076 = vsel %vm2070, %v2063, 0.0
      %v2077 = vsel %vm2071, %v2062, 0.0
      %v2078 = vsel %vm2070, %v2061, 0.0
      %v2079 = vsel %vm2071, %v2060, 0.0
      %v2080 = vsel %vm2070, %v2059, 0.0
      %v2081 = vsel %vm2071, %v2058, 0.0
      %v2082 = vsel %vm2070, %v2057, 0.0
      %v2083 = vsel %vm2071, %v2056, 0.0
      %v2084 = vsel %vm2070, %v2055, 0.0
      %v2085 = vsel %vm2071, %v2054, 0.0
      %v2086 = vsel %vm2070, %v2053, 0.0
      %v2087 = vsel %vm2071, %v2052, 0.0
      %v2088 = vsel %vm2070, %v2051, 0.0
      %v2089 = vsel %vm2071, %v2050, 0.0
      %v2090 = vsel %vm2070, %v2049, 0.0
      %v2091 = vsel %vm2071, %v2048, 0.0
      %v2092 = vsel %vm2070, %v2047, 0.0
      %v2093 = vsel %vm2071, %v2046, 0.0
      %v2094 = vsel %vm2070, %v2045, 0.0
      %v2095 = vsel %vm2071, %v2044, 0.0
      %v2096 = vsel %vm2070, %v2043, 0.0
      %v2097 = vsel %vm2071, %v2042, 0.0
      %v2098 = vsel %vm2070, %v2041, 0.0
      %v2099 = vsel %vm2071, %v2040, 0.0
      %v2100 = vsel %vm2070, %v2039, 0.0
      %v2101 = vsel %vm2071, %v2038, 0.0
      %v2102 = vsel %vm2070, %v2037, 0.0
      %v2103 = vsel %vm2071, %v2036, 0.0
      %v2104 = vsel %vm2070, %v2035, 0.0
      %v2105 = vsel %vm2071, %v2034, 0.0
      %v2106 = vsel %vm2070, %v2033, 0.0
      %v2107 = vsel %vm2071, %v2032, 0.0
      %vm2108 = vcmp.lt.s32.totalorder %v1991, 15
      %vm2109 = vcmp.lt.s32.totalorder %v1992, 15
      %v2110 = vrot.slane %v1954, 1
      %v2111 = vrot.slane %v1955, 1
      %v2112 = vrot.slane %v1956, 1
      %v2113 = vrot.slane %v1957, 1
      %v2114 = vrot.slane %v1958, 1
      %v2115 = vrot.slane %v1959, 1
      %v2116 = vrot.slane %v1960, 1
      %v2117 = vrot.slane %v1961, 1
      %v2118 = vrot.slane %v1962, 1
      %v2119 = vrot.slane %v1963, 1
      %v2120 = vrot.slane %v1964, 1
      %v2121 = vrot.slane %v1965, 1
      %v2122 = vrot.slane %v1966, 1
      %v2123 = vrot.slane %v1967, 1
      %v2124 = vrot.slane %v1968, 1
      %v2125 = vrot.slane %v1969, 1
      %v2126 = vrot.slane %v1970, 1
      %v2127 = vrot.slane %v1971, 1
      %v2128 = vrot.slane %v1972, 1
      %v2129 = vrot.slane %v1973, 1
      %v2130 = vrot.slane %v1974, 1
      %v2131 = vrot.slane %v1975, 1
      %v2132 = vrot.slane %v1976, 1
      %v2133 = vrot.slane %v1977, 1
      %v2134 = vrot.slane %v1978, 1
      %v2135 = vrot.slane %v1979, 1
      %v2136 = vrot.slane %v1980, 1
      %v2137 = vrot.slane %v1981, 1
      %v2138 = vrot.slane %v1982, 1
      %v2139 = vrot.slane %v1983, 1
      %v2140 = vrot.slane %v1984, 1
      %v2141 = vrot.slane %v1985, 1
      %v2142 = vrot.slane %v1986, 1
      %v2143 = vrot.slane %v1987, 1
      %v2144 = vrot.slane %v1988, 1
      %v2145 = vrot.slane %v1989, 1
      %vm2146 = vcmp.lt.s32.totalorder %v1991, 7
      %v2147 = vsel %vm2146, %v2144, %v2145
      %v2148 = vsel %vm2146, %v2143, %v2144
      %v2149 = vsel %vm2146, %v2142, %v2143
      %v2150 = vsel %vm2146, %v2141, %v2142
      %v2151 = vsel %vm2146, %v2140, %v2141
      %v2152 = vsel %vm2146, %v2139, %v2140
      %v2153 = vsel %vm2146, %v2138, %v2139
      %v2154 = vsel %vm2146, %v2137, %v2138
      %v2155 = vsel %vm2146, %v2136, %v2137
      %v2156 = vsel %vm2146, %v2135, %v2136
      %v2157 = vsel %vm2146, %v2134, %v2135
      %v2158 = vsel %vm2146, %v2133, %v2134
      %v2159 = vsel %vm2146, %v2132, %v2133
      %v2160 = vsel %vm2146, %v2131, %v2132
      %v2161 = vsel %vm2146, %v2130, %v2131
      %v2162 = vsel %vm2146, %v2129, %v2130
      %v2163 = vsel %vm2146, %v2128, %v2129
      %v2164 = vsel %vm2146, %v2127, %v2128
      %v2165 = vsel %vm2146, %v2126, %v2127
      %v2166 = vsel %vm2146, %v2125, %v2126
      %v2167 = vsel %vm2146, %v2124, %v2125
      %v2168 = vsel %vm2146, %v2123, %v2124
      %v2169 = vsel %vm2146, %v2122, %v2123
      %v2170 = vsel %vm2146, %v2121, %v2122
      %v2171 = vsel %vm2146, %v2120, %v2121
      %v2172 = vsel %vm2146, %v2119, %v2120
      %v2173 = vsel %vm2146, %v2118, %v2119
      %v2174 = vsel %vm2146, %v2117, %v2118
      %v2175 = vsel %vm2146, %v2116, %v2117
      %v2176 = vsel %vm2146, %v2115, %v2116
      %v2177 = vsel %vm2146, %v2114, %v2115
      %v2178 = vsel %vm2146, %v2113, %v2114
      %v2179 = vsel %vm2146, %v2112, %v2113
      %v2180 = vsel %vm2146, %v2111, %v2112
      %v2181 = vsel %vm2146, %v2110, %v2111
      %v2182 = vsel %vm2146, %v2145, %v2110
      %v2183 = vsel %vm2108, 1, 0
      %v2184 = vsel %vm2109, 1, 0
      %vm2185 = vcmp.eq.s32.totalorder %v2183, 1
      %vm2186 = vcmp.eq.s32.totalorder %v2184, 1
      %v2187 = vsel %vm2185, %v2181, 0.0
      %v2188 = vsel %vm2186, %v2180, 0.0
      %v2189 = vsel %vm2185, %v2179, 0.0
      %v2190 = vsel %vm2186, %v2178, 0.0
      %v2191 = vsel %vm2185, %v2177, 0.0
      %v2192 = vsel %vm2186, %v2176, 0.0
      %v2193 = vsel %vm2185, %v2175, 0.0
      %v2194 = vsel %vm2186, %v2174, 0.0
      %v2195 = vsel %vm2185, %v2173, 0.0
      %v2196 = vsel %vm2186, %v2172, 0.0
      %v2197 = vsel %vm2185, %v2171, 0.0
      %v2198 = vsel %vm2186, %v2170, 0.0
      %v2199 = vsel %vm2185, %v2169, 0.0
      %v2200 = vsel %vm2186, %v2168, 0.0
      %v2201 = vsel %vm2185, %v2167, 0.0
      %v2202 = vsel %vm2186, %v2166, 0.0
      %v2203 = vsel %vm2185, %v2165, 0.0
      %v2204 = vsel %vm2186, %v2164, 0.0
      %v2205 = vsel %vm2185, %v2163, 0.0
      %v2206 = vsel %vm2186, %v2162, 0.0
      %v2207 = vsel %vm2185, %v2161, 0.0
      %v2208 = vsel %vm2186, %v2160, 0.0
      %v2209 = vsel %vm2185, %v2159, 0.0
      %v2210 = vsel %vm2186, %v2158, 0.0
      %v2211 = vsel %vm2185, %v2157, 0.0
      %v2212 = vsel %vm2186, %v2156, 0.0
      %v2213 = vsel %vm2185, %v2155, 0.0
      %v2214 = vsel %vm2186, %v2154, 0.0
      %v2215 = vsel %vm2185, %v2153, 0.0
      %v2216 = vsel %vm2186, %v2152, 0.0
      %v2217 = vsel %vm2185, %v2151, 0.0
      %v2218 = vsel %vm2186, %v2150, 0.0
      %v2219 = vsel %vm2185, %v2149, 0.0
      %v2220 = vsel %vm2186, %v2148, 0.0
      %v2221 = vsel %vm2185, %v2147, 0.0
      %v2222 = vsel %vm2186, %v2182, 0.0
      %v2223 = vadd.f32 %v1528, %v2072
      %v2224 = vadd.f32 %v1529, %v2073
      %v2225 = vadd.f32 %v1530, %v2074
      %v2226 = vadd.f32 %v1531, %v2075
      %v2227 = vadd.f32 %v1532, %v2076
      %v2228 = vadd.f32 %v1533, %v2077
      %v2229 = vadd.f32 %v1534, %v2078
      %v2230 = vadd.f32 %v1535, %v2079
      %v2231 = vadd.f32 %v1536, %v2080
      %v2232 = vadd.f32 %v1537, %v2081
      %v2233 = vadd.f32 %v1538, %v2082
      %v2234 = vadd.f32 %v1539, %v2083
      %v2235 = vadd.f32 %v1540, %v2084
      %v2236 = vadd.f32 %v1541, %v2085
      %v2237 = vadd.f32 %v1542, %v2086
      %v2238 = vadd.f32 %v1543, %v2087
      %v2239 = vadd.f32 %v1544, %v2088
      %v2240 = vadd.f32 %v1545, %v2089
      %v2241 = vadd.f32 %v1546, %v2090
      %v2242 = vadd.f32 %v1547, %v2091
      %v2243 = vadd.f32 %v1548, %v2092
      %v2244 = vadd.f32 %v1549, %v2093
      %v2245 = vadd.f32 %v1550, %v2094
      %v2246 = vadd.f32 %v1551, %v2095
      %v2247 = vadd.f32 %v1552, %v2096
      %v2248 = vadd.f32 %v1553, %v2097
      %v2249 = vadd.f32 %v1554, %v2098
      %v2250 = vadd.f32 %v1555, %v2099
      %v2251 = vadd.f32 %v1556, %v2100
      %v2252 = vadd.f32 %v1557, %v2101
      %v2253 = vadd.f32 %v1558, %v2102
      %v2254 = vadd.f32 %v1559, %v2103
      %v2255 = vadd.f32 %v1560, %v2104
      %v2256 = vadd.f32 %v1561, %v2105
      %v2257 = vadd.f32 %v1562, %v2106
      %v2258 = vadd.f32 %v1563, %v2107
      %v2259 = vadd.f32 %v2223, %v2187
      %v2260 = vadd.f32 %v2224, %v2188
      %v2261 = vadd.f32 %v2225, %v2189
      %v2262 = vadd.f32 %v2226, %v2190
      %v2263 = vadd.f32 %v2227, %v2191
      %v2264 = vadd.f32 %v2228, %v2192
      %v2265 = vadd.f32 %v2229, %v2193
      %v2266 = vadd.f32 %v2230, %v2194
      %v2267 = vadd.f32 %v2231, %v2195
      %v2268 = vadd.f32 %v2232, %v2196
      %v2269 = vadd.f32 %v2233, %v2197
      %v2270 = vadd.f32 %v2234, %v2198
      %v2271 = vadd.f32 %v2235, %v2199
      %v2272 = vadd.f32 %v2236, %v2200
      %v2273 = vadd.f32 %v2237, %v2201
      %v2274 = vadd.f32 %v2238, %v2202
      %v2275 = vadd.f32 %v2239, %v2203
      %v2276 = vadd.f32 %v2240, %v2204
      %v2277 = vadd.f32 %v2241, %v2205
      %v2278 = vadd.f32 %v2242, %v2206
      %v2279 = vadd.f32 %v2243, %v2207
      %v2280 = vadd.f32 %v2244, %v2208
      %v2281 = vadd.f32 %v2245, %v2209
      %v2282 = vadd.f32 %v2246, %v2210
      %v2283 = vadd.f32 %v2247, %v2211
      %v2284 = vadd.f32 %v2248, %v2212
      %v2285 = vadd.f32 %v2249, %v2213
      %v2286 = vadd.f32 %v2250, %v2214
      %v2287 = vadd.f32 %v2251, %v2215
      %v2288 = vadd.f32 %v2252, %v2216
      %v2289 = vadd.f32 %v2253, %v2217
      %v2290 = vadd.f32 %v2254, %v2218
      %v2291 = vadd.f32 %v2255, %v2219
      %v2292 = vadd.f32 %v2256, %v2220
      %v2293 = vadd.f32 %v2257, %v2221
      %v2294 = vadd.f32 %v2258, %v2222
      %v2295 = vld [vmem:[%s4] sm:$0x1]
      %v2297 = vperm.slane %v2295, 0
      %v2299 = vadd.f32 %v2259, %v2297
      %v2300 = vadd.f32 %v2260, %v2297
      %v2301 = vadd.f32 %v2261, %v2297
      %v2302 = vadd.f32 %v2262, %v2297
      %v2303 = vadd.f32 %v2263, %v2297
      %v2304 = vadd.f32 %v2264, %v2297
      %v2305 = vadd.f32 %v2265, %v2297
      %v2306 = vadd.f32 %v2266, %v2297
      %v2307 = vadd.f32 %v2267, %v2297
      %v2308 = vadd.f32 %v2268, %v2297
      %v2309 = vadd.f32 %v2269, %v2297
      %v2310 = vadd.f32 %v2270, %v2297
      %v2311 = vadd.f32 %v2271, %v2297
      %v2312 = vadd.f32 %v2272, %v2297
      %v2313 = vadd.f32 %v2273, %v2297
      %v2314 = vadd.f32 %v2274, %v2297
      %v2315 = vadd.f32 %v2275, %v2297
      %v2316 = vadd.f32 %v2276, %v2297
      %v2317 = vadd.f32 %v2277, %v2297
      %v2318 = vadd.f32 %v2278, %v2297
      %v2319 = vadd.f32 %v2279, %v2297
      %v2320 = vadd.f32 %v2280, %v2297
      %v2321 = vadd.f32 %v2281, %v2297
      %v2322 = vadd.f32 %v2282, %v2297
      %v2323 = vadd.f32 %v2283, %v2297
      %v2324 = vadd.f32 %v2284, %v2297
      %v2325 = vadd.f32 %v2285, %v2297
      %v2326 = vadd.f32 %v2286, %v2297
      %v2327 = vadd.f32 %v2287, %v2297
      %v2328 = vadd.f32 %v2288, %v2297
      %v2329 = vadd.f32 %v2289, %v2297
      %v2330 = vadd.f32 %v2290, %v2297
      %v2331 = vadd.f32 %v2291, %v2297
      %v2332 = vadd.f32 %v2292, %v2297
      %v2333 = vadd.f32 %v2293, %v2297
      %v2334 = vadd.f32 %v2294, %v2297
      %vm2335 = vcmp.ge.f32.partialorder %v2299, 0.0
      %vm2336 = vcmp.ge.f32.partialorder %v2300, 0.0
      %vm2337 = vcmp.ge.f32.partialorder %v2301, 0.0
      %vm2338 = vcmp.ge.f32.partialorder %v2302, 0.0
      %vm2339 = vcmp.ge.f32.partialorder %v2303, 0.0
      %vm2340 = vcmp.ge.f32.partialorder %v2304, 0.0
      %vm2341 = vcmp.ge.f32.partialorder %v2305, 0.0
      %vm2342 = vcmp.ge.f32.partialorder %v2306, 0.0
      %vm2343 = vcmp.ge.f32.partialorder %v2307, 0.0
      %vm2344 = vcmp.ge.f32.partialorder %v2308, 0.0
      %vm2345 = vcmp.ge.f32.partialorder %v2309, 0.0
      %vm2346 = vcmp.ge.f32.partialorder %v2310, 0.0
      %vm2347 = vcmp.ge.f32.partialorder %v2311, 0.0
      %vm2348 = vcmp.ge.f32.partialorder %v2312, 0.0
      %vm2349 = vcmp.ge.f32.partialorder %v2313, 0.0
      %vm2350 = vcmp.ge.f32.partialorder %v2314, 0.0
      %vm2351 = vcmp.ge.f32.partialorder %v2315, 0.0
      %vm2352 = vcmp.ge.f32.partialorder %v2316, 0.0
      %vm2353 = vcmp.ge.f32.partialorder %v2317, 0.0
      %vm2354 = vcmp.ge.f32.partialorder %v2318, 0.0
      %vm2355 = vcmp.ge.f32.partialorder %v2319, 0.0
      %vm2356 = vcmp.ge.f32.partialorder %v2320, 0.0
      %vm2357 = vcmp.ge.f32.partialorder %v2321, 0.0
      %vm2358 = vcmp.ge.f32.partialorder %v2322, 0.0
      %vm2359 = vcmp.ge.f32.partialorder %v2323, 0.0
      %vm2360 = vcmp.ge.f32.partialorder %v2324, 0.0
      %vm2361 = vcmp.ge.f32.partialorder %v2325, 0.0
      %vm2362 = vcmp.ge.f32.partialorder %v2326, 0.0
      %vm2363 = vcmp.ge.f32.partialorder %v2327, 0.0
      %vm2364 = vcmp.ge.f32.partialorder %v2328, 0.0
      %vm2365 = vcmp.ge.f32.partialorder %v2329, 0.0
      %vm2366 = vcmp.ge.f32.partialorder %v2330, 0.0
      %vm2367 = vcmp.ge.f32.partialorder %v2331, 0.0
      %vm2368 = vcmp.ge.f32.partialorder %v2332, 0.0
      %vm2369 = vcmp.ge.f32.partialorder %v2333, 0.0
      %vm2370 = vcmp.ge.f32.partialorder %v2334, 0.0
      %v2371 = vmul.f32 %v2299, 0.1
      %v2372 = vmul.f32 %v2300, 0.1
      %v2373 = vmul.f32 %v2301, 0.1
      %v2374 = vmul.f32 %v2302, 0.1
      %v2375 = vmul.f32 %v2303, 0.1
      %v2376 = vmul.f32 %v2304, 0.1
      %v2377 = vmul.f32 %v2305, 0.1
      %v2378 = vmul.f32 %v2306, 0.1
      %v2379 = vmul.f32 %v2307, 0.1
      %v2380 = vmul.f32 %v2308, 0.1
      %v2381 = vmul.f32 %v2309, 0.1
      %v2382 = vmul.f32 %v2310, 0.1
      %v2383 = vmul.f32 %v2311, 0.1
      %v2384 = vmul.f32 %v2312, 0.1
      %v2385 = vmul.f32 %v2313, 0.1
      %v2386 = vmul.f32 %v2314, 0.1
      %v2387 = vmul.f32 %v2315, 0.1
      %v2388 = vmul.f32 %v2316, 0.1
      %v2389 = vmul.f32 %v2317, 0.1
      %v2390 = vmul.f32 %v2318, 0.1
      %v2391 = vmul.f32 %v2319, 0.1
      %v2392 = vmul.f32 %v2320, 0.1
      %v2393 = vmul.f32 %v2321, 0.1
      %v2394 = vmul.f32 %v2322, 0.1
      %v2395 = vmul.f32 %v2323, 0.1
      %v2396 = vmul.f32 %v2324, 0.1
      %v2397 = vmul.f32 %v2325, 0.1
      %v2398 = vmul.f32 %v2326, 0.1
      %v2399 = vmul.f32 %v2327, 0.1
      %v2400 = vmul.f32 %v2328, 0.1
      %v2401 = vmul.f32 %v2329, 0.1
      %v2402 = vmul.f32 %v2330, 0.1
      %v2403 = vmul.f32 %v2331, 0.1
      %v2404 = vmul.f32 %v2332, 0.1
      %v2405 = vmul.f32 %v2333, 0.1
      %v2406 = vmul.f32 %v2334, 0.1
      %v2407 = vsel %vm2335, %v2299, %v2371
      %v2408 = vsel %vm2336, %v2300, %v2372
      %v2409 = vsel %vm2337, %v2301, %v2373
      %v2410 = vsel %vm2338, %v2302, %v2374
      %v2411 = vsel %vm2339, %v2303, %v2375
      %v2412 = vsel %vm2340, %v2304, %v2376
      %v2413 = vsel %vm2341, %v2305, %v2377
      %v2414 = vsel %vm2342, %v2306, %v2378
      %v2415 = vsel %vm2343, %v2307, %v2379
      %v2416 = vsel %vm2344, %v2308, %v2380
      %v2417 = vsel %vm2345, %v2309, %v2381
      %v2418 = vsel %vm2346, %v2310, %v2382
      %v2419 = vsel %vm2347, %v2311, %v2383
      %v2420 = vsel %vm2348, %v2312, %v2384
      %v2421 = vsel %vm2349, %v2313, %v2385
      %v2422 = vsel %vm2350, %v2314, %v2386
      %v2423 = vsel %vm2351, %v2315, %v2387
      %v2424 = vsel %vm2352, %v2316, %v2388
      %v2425 = vsel %vm2353, %v2317, %v2389
      %v2426 = vsel %vm2354, %v2318, %v2390
      %v2427 = vsel %vm2355, %v2319, %v2391
      %v2428 = vsel %vm2356, %v2320, %v2392
      %v2429 = vsel %vm2357, %v2321, %v2393
      %v2430 = vsel %vm2358, %v2322, %v2394
      %v2431 = vsel %vm2359, %v2323, %v2395
      %v2432 = vsel %vm2360, %v2324, %v2396
      %v2433 = vsel %vm2361, %v2325, %v2397
      %v2434 = vsel %vm2362, %v2326, %v2398
      %v2435 = vsel %vm2363, %v2327, %v2399
      %v2436 = vsel %vm2364, %v2328, %v2400
      %v2437 = vsel %vm2365, %v2329, %v2401
      %v2438 = vsel %vm2366, %v2330, %v2402
      %v2439 = vsel %vm2367, %v2331, %v2403
      %v2440 = vsel %vm2368, %v2332, %v2404
      %v2441 = vsel %vm2369, %v2333, %v2405
      %v2442 = vsel %vm2370, %v2334, %v2406
      %2443 = vst.msk [vmem:[#allocation3] sm:$0xff] %vm461, %v2407
      %2444 = vst.msk [vmem:[#allocation3 + $0x8] sm:$0xff] %vm461, %v2408
      %2445 = vst.msk [vmem:[#allocation3 + $0x10] sm:$0xff] %vm461, %v2409
      %2446 = vst.msk [vmem:[#allocation3 + $0x18] sm:$0xff] %vm461, %v2410
      %2447 = vst.msk [vmem:[#allocation3 + $0x20] sm:$0xff] %vm461, %v2411
      %2448 = vst.msk [vmem:[#allocation3 + $0x28] sm:$0xff] %vm461, %v2412
      %2449 = vst.msk [vmem:[#allocation3 + $0x30] sm:$0xff] %vm461, %v2413
      %2450 = vst.msk [vmem:[#allocation3 + $0x38] sm:$0xff] %vm461, %v2414
      %2451 = vst.msk [vmem:[#allocation3 + $0x40] sm:$0xff] %vm461, %v2415
      %2452 = vst.msk [vmem:[#allocation3 + $0x48] sm:$0xff] %vm461, %v2416
      %2453 = vst.msk [vmem:[#allocation3 + $0x50] sm:$0xff] %vm461, %v2417
      %2454 = vst.msk [vmem:[#allocation3 + $0x58] sm:$0xff] %vm461, %v2418
      %2455 = vst.msk [vmem:[#allocation3 + $0x60] sm:$0xff] %vm461, %v2419
      %2456 = vst.msk [vmem:[#allocation3 + $0x68] sm:$0xff] %vm461, %v2420
      %2457 = vst.msk [vmem:[#allocation3 + $0x70] sm:$0xff] %vm461, %v2421
      %2458 = vst.msk [vmem:[#allocation3 + $0x78] sm:$0xff] %vm461, %v2422
      %2459 = vst.msk [vmem:[#allocation3 + $0x80] sm:$0xff] %vm461, %v2423
      %2460 = vst.msk [vmem:[#allocation3 + $0x88] sm:$0xff] %vm461, %v2424
      %2461 = vst.msk [vmem:[#allocation3 + $0x90] sm:$0xff] %vm461, %v2425
      %2462 = vst.msk [vmem:[#allocation3 + $0x98] sm:$0xff] %vm461, %v2426
      %2463 = vst.msk [vmem:[#allocation3 + $0xa0] sm:$0xff] %vm461, %v2427
      %2464 = vst.msk [vmem:[#allocation3 + $0xa8] sm:$0xff] %vm461, %v2428
      %2465 = vst.msk [vmem:[#allocation3 + $0xb0] sm:$0xff] %vm461, %v2429
      %2466 = vst.msk [vmem:[#allocation3 + $0xb8] sm:$0xff] %vm461, %v2430
      %2467 = vst.msk [vmem:[#allocation3 + $0xc0] sm:$0xff] %vm461, %v2431
      %2468 = vst.msk [vmem:[#allocation3 + $0xc8] sm:$0xff] %vm461, %v2432
      %2469 = vst.msk [vmem:[#allocation3 + $0xd0] sm:$0xff] %vm461, %v2433
      %2470 = vst.msk [vmem:[#allocation3 + $0xd8] sm:$0xff] %vm461, %v2434
      %2471 = vst.msk [vmem:[#allocation3 + $0xe0] sm:$0xff] %vm461, %v2435
      %2472 = vst.msk [vmem:[#allocation3 + $0xe8] sm:$0xff] %vm461, %v2436
      %2473 = vst.msk [vmem:[#allocation3 + $0xf0] sm:$0xff] %vm461, %v2437
      %2474 = vst.msk [vmem:[#allocation3 + $0xf8] sm:$0xff] %vm461, %v2438
      %2475 = vst.msk [vmem:[#allocation3 + $0x100] sm:$0xff] %vm461, %v2439
      %2476 = vst.msk [vmem:[#allocation3 + $0x108] sm:$0xff] %vm461, %v2440
      %2477 = vst.msk [vmem:[#allocation3 + $0x110] sm:$0xff] %vm461, %v2441
      %2478 = vst.msk [vmem:[#allocation3 + $0x118] sm:$0xff] %vm461, %v2442
      // Predicated region
      $region53: #{tpu_custom_call.1} parent=47 // pred_check
        %p2479 = pneg %p540
      $region54: #{tpu_custom_call.1} parent=47 // pred_check_branch
        %2481 = sbr.rel (%p2479) target = $region56
      $region55: #{tpu_custom_call.1} parent=47 // pred_region
        %2482 = vst.msk [vmem:[#allocation3] sm:$0xff] %vm461, 0.0
        %2483 = vst.msk [vmem:[#allocation3 + $0x8] sm:$0xff] %vm461, 0.0
        %s2484 = scalar_lea.vmem [#allocation3], 272
        %2485 = vst.msk [vmem:[%s2484] sm:$0xff] %vm461, 0.0
        %2486 = vst.msk [vmem:[%s2484 + $0x8] sm:$0xff] %vm461, 0.0
      $region56: #{tpu_custom_call.1} parent=47 // pred_fallthru
        _
      %v2487 = vld [vmem:[#allocation3] sm:$0xff]
      %v2488 = vld [vmem:[#allocation3 + $0x8] sm:$0xff]
      %v2489 = vld [vmem:[#allocation3 + $0x10] sm:$0xff]
      %v2490 = vld [vmem:[#allocation3 + $0x18] sm:$0xff]
      %v2491 = vld [vmem:[#allocation3 + $0x20] sm:$0xff]
      %v2492 = vld [vmem:[#allocation3 + $0x28] sm:$0xff]
      %v2493 = vld [vmem:[#allocation3 + $0x30] sm:$0xff]
      %v2494 = vld [vmem:[#allocation3 + $0x38] sm:$0xff]
      %v2495 = vld [vmem:[#allocation3 + $0x40] sm:$0xff]
      %v2496 = vld [vmem:[#allocation3 + $0x48] sm:$0xff]
      %v2497 = vld [vmem:[#allocation3 + $0x50] sm:$0xff]
      %v2498 = vld [vmem:[#allocation3 + $0x58] sm:$0xff]
      %v2499 = vld [vmem:[#allocation3 + $0x60] sm:$0xff]
      %v2500 = vld [vmem:[#allocation3 + $0x68] sm:$0xff]
      %v2501 = vld [vmem:[#allocation3 + $0x70] sm:$0xff]
      %v2502 = vld [vmem:[#allocation3 + $0x78] sm:$0xff]
      %v2503 = vld [vmem:[#allocation3 + $0x80] sm:$0xff]
      %v2504 = vld [vmem:[#allocation3 + $0x88] sm:$0xff]
      %v2505 = vld [vmem:[#allocation3 + $0x90] sm:$0xff]
      %v2506 = vld [vmem:[#allocation3 + $0x98] sm:$0xff]
      %v2507 = vld [vmem:[#allocation3 + $0xa0] sm:$0xff]
      %v2508 = vld [vmem:[#allocation3 + $0xa8] sm:$0xff]
      %v2509 = vld [vmem:[#allocation3 + $0xb0] sm:$0xff]
      %v2510 = vld [vmem:[#allocation3 + $0xb8] sm:$0xff]
      %v2511 = vld [vmem:[#allocation3 + $0xc0] sm:$0xff]
      %v2512 = vld [vmem:[#allocation3 + $0xc8] sm:$0xff]
      %v2513 = vld [vmem:[#allocation3 + $0xd0] sm:$0xff]
      %v2514 = vld [vmem:[#allocation3 + $0xd8] sm:$0xff]
      %v2515 = vld [vmem:[#allocation3 + $0xe0] sm:$0xff]
      %v2516 = vld [vmem:[#allocation3 + $0xe8] sm:$0xff]
      %v2517 = vld [vmem:[#allocation3 + $0xf0] sm:$0xff]
      %v2518 = vld [vmem:[#allocation3 + $0xf8] sm:$0xff]
      %v2519 = vld [vmem:[#allocation3 + $0x100] sm:$0xff]
      %v2520 = vld [vmem:[#allocation3 + $0x108] sm:$0xff]
      %v2521 = vld [vmem:[#allocation3 + $0x110] sm:$0xff]
      %v2522 = vld [vmem:[#allocation3 + $0x118] sm:$0xff]
      %v2523 = vld [vmem:[%s5] sm:$0xf]
      %s2524 = scalar_lea.vmem %s5, 12
      %v2525 = vld [vmem:[%s2524] sm:$0xf]
      %v2527 = vsel %vm461, %v2489, 0
      %v2530 = vsel %vm461, %v2490, 0
      %v2533 = vsel %vm461, %v2491, 0
      %v2536 = vsel %vm461, %v2492, 0
      %v2539 = vsel %vm461, %v2493, 0
      %v2542 = vsel %vm461, %v2494, 0
      %v2545 = vsel %vm461, %v2495, 0
      %v2548 = vsel %vm461, %v2496, 0
      %v2551 = vsel %vm461, %v2497, 0
      %v2554 = vsel %vm461, %v2498, 0
      %v2557 = vsel %vm461, %v2499, 0
      %v2560 = vsel %vm461, %v2500, 0
      %v2563 = vsel %vm461, %v2501, 0
      %v2566 = vsel %vm461, %v2502, 0
      %v2569 = vsel %vm461, %v2503, 0
      %v2572 = vsel %vm461, %v2504, 0
      %v2575 = vsel %vm461, %v2505, 0
      %v2578 = vsel %vm461, %v2506, 0
      %v2581 = vsel %vm461, %v2507, 0
      %v2584 = vsel %vm461, %v2508, 0
      %v2587 = vsel %vm461, %v2509, 0
      %v2590 = vsel %vm461, %v2510, 0
      %v2593 = vsel %vm461, %v2511, 0
      %v2596 = vsel %vm461, %v2512, 0
      %v2599 = vsel %vm461, %v2513, 0
      %v2602 = vsel %vm461, %v2514, 0
      %v2605 = vsel %vm461, %v2515, 0
      %v2608 = vsel %vm461, %v2516, 0
      %v2611 = vsel %vm461, %v2517, 0
      %v2614 = vsel %vm461, %v2518, 0
      %v2617 = vsel %vm461, %v2519, 0
      %v2620 = vsel %vm461, %v2520, 0
      %v2623 = vsel %vm703, %v2525, 0
      %2625 = vmatpush.msra.mxu0 0.0
      %2626 = vmatpush.msra.mxu0 0.0
      %2627 = vmatpush.msra.mxu0 0.0
      %2628 = vmatpush.msra.mxu0 0.0
      %2629 = vmatpush.msra.mxu0 0.0
      %2630 = vmatpush.msra.mxu0 0.0
      %2631 = vmatpush.msra.mxu0 0.0
      %2632 = vmatpush.msra.mxu0 0.0
      %2633 = vmatpush.msra.mxu0 0.0
      %2634 = vmatpush.msra.mxu0 0.0
      %2635 = vmatpush.msra.mxu0 0.0
      %2636 = vmatpush.msra.mxu0 0.0
      %2637 = vmatpush.msra.mxu0 0.0
      %2638 = vmatpush.msra.mxu0 0.0
      %2639 = vmatpush.msra.mxu0 0.0
      %2640 = vmatpush.msra.mxu0 %v2623
      %2641 = vmatmul.f32.gmra.mxu0 %v2527
      %v2642 = vpop.f32.mrf.mxu0
      %v2643 = vadd.f32 0.0, %v2642
      %2644 = vmatmul.f32.gmra.mxu0 %v2530
      %v2645 = vpop.f32.mrf.mxu0
      %v2646 = vadd.f32 0.0, %v2645
      %2647 = vmatmul.f32.gmra.mxu0 %v2533
      %v2648 = vpop.f32.mrf.mxu0
      %v2649 = vadd.f32 0.0, %v2648
      %2650 = vmatmul.f32.gmra.mxu0 %v2536
      %v2651 = vpop.f32.mrf.mxu0
      %v2652 = vadd.f32 0.0, %v2651
      %2653 = vmatmul.f32.gmra.mxu0 %v2539
      %v2654 = vpop.f32.mrf.mxu0
      %v2655 = vadd.f32 0.0, %v2654
      %2656 = vmatmul.f32.gmra.mxu0 %v2542
      %v2657 = vpop.f32.mrf.mxu0
      %v2658 = vadd.f32 0.0, %v2657
      %2659 = vmatmul.f32.gmra.mxu0 %v2545
      %v2660 = vpop.f32.mrf.mxu0
      %v2661 = vadd.f32 0.0, %v2660
      %2662 = vmatmul.f32.gmra.mxu0 %v2548
      %v2663 = vpop.f32.mrf.mxu0
      %v2664 = vadd.f32 0.0, %v2663
      %2665 = vmatmul.f32.gmra.mxu0 %v2551
      %v2666 = vpop.f32.mrf.mxu0
      %v2667 = vadd.f32 0.0, %v2666
      %2668 = vmatmul.f32.gmra.mxu0 %v2554
      %v2669 = vpop.f32.mrf.mxu0
      %v2670 = vadd.f32 0.0, %v2669
      %2671 = vmatmul.f32.gmra.mxu0 %v2557
      %v2672 = vpop.f32.mrf.mxu0
      %v2673 = vadd.f32 0.0, %v2672
      %2674 = vmatmul.f32.gmra.mxu0 %v2560
      %v2675 = vpop.f32.mrf.mxu0
      %v2676 = vadd.f32 0.0, %v2675
      %2677 = vmatmul.f32.gmra.mxu0 %v2563
      %v2678 = vpop.f32.mrf.mxu0
      %v2679 = vadd.f32 0.0, %v2678
      %2680 = vmatmul.f32.gmra.mxu0 %v2566
      %v2681 = vpop.f32.mrf.mxu0
      %v2682 = vadd.f32 0.0, %v2681
      %2683 = vmatmul.f32.gmra.mxu0 %v2569
      %v2684 = vpop.f32.mrf.mxu0
      %v2685 = vadd.f32 0.0, %v2684
      %2686 = vmatmul.f32.gmra.mxu0 %v2572
      %v2687 = vpop.f32.mrf.mxu0
      %v2688 = vadd.f32 0.0, %v2687
      %2689 = vmatmul.f32.gmra.mxu0 %v2575
      %v2690 = vpop.f32.mrf.mxu0
      %v2691 = vadd.f32 0.0, %v2690
      %2692 = vmatmul.f32.gmra.mxu0 %v2578
      %v2693 = vpop.f32.mrf.mxu0
      %v2694 = vadd.f32 0.0, %v2693
      %2695 = vmatmul.f32.gmra.mxu0 %v2581
      %v2696 = vpop.f32.mrf.mxu0
      %v2697 = vadd.f32 0.0, %v2696
      %2698 = vmatmul.f32.gmra.mxu0 %v2584
      %v2699 = vpop.f32.mrf.mxu0
      %v2700 = vadd.f32 0.0, %v2699
      %2701 = vmatmul.f32.gmra.mxu0 %v2587
      %v2702 = vpop.f32.mrf.mxu0
      %v2703 = vadd.f32 0.0, %v2702
      %2704 = vmatmul.f32.gmra.mxu0 %v2590
      %v2705 = vpop.f32.mrf.mxu0
      %v2706 = vadd.f32 0.0, %v2705
      %2707 = vmatmul.f32.gmra.mxu0 %v2593
      %v2708 = vpop.f32.mrf.mxu0
      %v2709 = vadd.f32 0.0, %v2708
      %2710 = vmatmul.f32.gmra.mxu0 %v2596
      %v2711 = vpop.f32.mrf.mxu0
      %v2712 = vadd.f32 0.0, %v2711
      %2713 = vmatmul.f32.gmra.mxu0 %v2599
      %v2714 = vpop.f32.mrf.mxu0
      %v2715 = vadd.f32 0.0, %v2714
      %2716 = vmatmul.f32.gmra.mxu0 %v2602
      %v2717 = vpop.f32.mrf.mxu0
      %v2718 = vadd.f32 0.0, %v2717
      %2719 = vmatmul.f32.gmra.mxu0 %v2605
      %v2720 = vpop.f32.mrf.mxu0
      %v2721 = vadd.f32 0.0, %v2720
      %2722 = vmatmul.f32.gmra.mxu0 %v2608
      %v2723 = vpop.f32.mrf.mxu0
      %v2724 = vadd.f32 0.0, %v2723
      %2725 = vmatmul.f32.gmra.mxu0 %v2611
      %v2726 = vpop.f32.mrf.mxu0
      %v2727 = vadd.f32 0.0, %v2726
      %2728 = vmatmul.f32.gmra.mxu0 %v2614
      %v2729 = vpop.f32.mrf.mxu0
      %v2730 = vadd.f32 0.0, %v2729
      %2731 = vmatmul.f32.gmra.mxu0 %v2617
      %v2732 = vpop.f32.mrf.mxu0
      %v2733 = vadd.f32 0.0, %v2732
      %2734 = vmatmul.f32.gmra.mxu0 %v2620
      %v2735 = vpop.f32.mrf.mxu0
      %v2736 = vadd.f32 0.0, %v2735
      %2737 = vdwg.mxu0
      %v2739 = vsel %vm461, %v2487, 0
      %v2742 = vsel %vm461, %v2488, 0
      %v2745 = vsel %vm703, %v2523, 0
      %2747 = vmatpush.msra.mxu0 0.0
      %2748 = vmatpush.msra.mxu0 0.0
      %2749 = vmatpush.msra.mxu0 0.0
      %2750 = vmatpush.msra.mxu0 0.0
      %2751 = vmatpush.msra.mxu0 0.0
      %2752 = vmatpush.msra.mxu0 0.0
      %2753 = vmatpush.msra.mxu0 0.0
      %2754 = vmatpush.msra.mxu0 0.0
      %2755 = vmatpush.msra.mxu0 0.0
      %2756 = vmatpush.msra.mxu0 0.0
      %2757 = vmatpush.msra.mxu0 0.0
      %2758 = vmatpush.msra.mxu0 0.0
      %2759 = vmatpush.msra.mxu0 0.0
      %2760 = vmatpush.msra.mxu0 0.0
      %2761 = vmatpush.msra.mxu0 0.0
      %2762 = vmatpush.msra.mxu0 %v2745
      %2763 = vmatmul.f32.gmra.mxu0 %v2739
      %v2764 = vpop.f32.mrf.mxu0
      %v2765 = vadd.f32 %v2643, %v2764
      %2766 = vmatmul.f32.gmra.mxu0 %v2742
      %v2767 = vpop.f32.mrf.mxu0
      %v2768 = vadd.f32 %v2646, %v2767
      %2769 = vmatmul.f32.gmra.mxu0 %v2527
      %v2770 = vpop.f32.mrf.mxu0
      %v2771 = vadd.f32 %v2649, %v2770
      %2772 = vmatmul.f32.gmra.mxu0 %v2530
      %v2773 = vpop.f32.mrf.mxu0
      %v2774 = vadd.f32 %v2652, %v2773
      %2775 = vmatmul.f32.gmra.mxu0 %v2533
      %v2776 = vpop.f32.mrf.mxu0
      %v2777 = vadd.f32 %v2655, %v2776
      %2778 = vmatmul.f32.gmra.mxu0 %v2536
      %v2779 = vpop.f32.mrf.mxu0
      %v2780 = vadd.f32 %v2658, %v2779
      %2781 = vmatmul.f32.gmra.mxu0 %v2539
      %v2782 = vpop.f32.mrf.mxu0
      %v2783 = vadd.f32 %v2661, %v2782
      %2784 = vmatmul.f32.gmra.mxu0 %v2542
      %v2785 = vpop.f32.mrf.mxu0
      %v2786 = vadd.f32 %v2664, %v2785
      %2787 = vmatmul.f32.gmra.mxu0 %v2545
      %v2788 = vpop.f32.mrf.mxu0
      %v2789 = vadd.f32 %v2667, %v2788
      %2790 = vmatmul.f32.gmra.mxu0 %v2548
      %v2791 = vpop.f32.mrf.mxu0
      %v2792 = vadd.f32 %v2670, %v2791
      %2793 = vmatmul.f32.gmra.mxu0 %v2551
      %v2794 = vpop.f32.mrf.mxu0
      %v2795 = vadd.f32 %v2673, %v2794
      %2796 = vmatmul.f32.gmra.mxu0 %v2554
      %v2797 = vpop.f32.mrf.mxu0
      %v2798 = vadd.f32 %v2676, %v2797
      %2799 = vmatmul.f32.gmra.mxu0 %v2557
      %v2800 = vpop.f32.mrf.mxu0
      %v2801 = vadd.f32 %v2679, %v2800
      %2802 = vmatmul.f32.gmra.mxu0 %v2560
      %v2803 = vpop.f32.mrf.mxu0
      %v2804 = vadd.f32 %v2682, %v2803
      %2805 = vmatmul.f32.gmra.mxu0 %v2563
      %v2806 = vpop.f32.mrf.mxu0
      %v2807 = vadd.f32 %v2685, %v2806
      %2808 = vmatmul.f32.gmra.mxu0 %v2566
      %v2809 = vpop.f32.mrf.mxu0
      %v2810 = vadd.f32 %v2688, %v2809
      %2811 = vmatmul.f32.gmra.mxu0 %v2569
      %v2812 = vpop.f32.mrf.mxu0
      %v2813 = vadd.f32 %v2691, %v2812
      %2814 = vmatmul.f32.gmra.mxu0 %v2572
      %v2815 = vpop.f32.mrf.mxu0
      %v2816 = vadd.f32 %v2694, %v2815
      %2817 = vmatmul.f32.gmra.mxu0 %v2575
      %v2818 = vpop.f32.mrf.mxu0
      %v2819 = vadd.f32 %v2697, %v2818
      %2820 = vmatmul.f32.gmra.mxu0 %v2578
      %v2821 = vpop.f32.mrf.mxu0
      %v2822 = vadd.f32 %v2700, %v2821
      %2823 = vmatmul.f32.gmra.mxu0 %v2581
      %v2824 = vpop.f32.mrf.mxu0
      %v2825 = vadd.f32 %v2703, %v2824
      %2826 = vmatmul.f32.gmra.mxu0 %v2584
      %v2827 = vpop.f32.mrf.mxu0
      %v2828 = vadd.f32 %v2706, %v2827
      %2829 = vmatmul.f32.gmra.mxu0 %v2587
      %v2830 = vpop.f32.mrf.mxu0
      %v2831 = vadd.f32 %v2709, %v2830
      %2832 = vmatmul.f32.gmra.mxu0 %v2590
      %v2833 = vpop.f32.mrf.mxu0
      %v2834 = vadd.f32 %v2712, %v2833
      %2835 = vmatmul.f32.gmra.mxu0 %v2593
      %v2836 = vpop.f32.mrf.mxu0
      %v2837 = vadd.f32 %v2715, %v2836
      %2838 = vmatmul.f32.gmra.mxu0 %v2596
      %v2839 = vpop.f32.mrf.mxu0
      %v2840 = vadd.f32 %v2718, %v2839
      %2841 = vmatmul.f32.gmra.mxu0 %v2599
      %v2842 = vpop.f32.mrf.mxu0
      %v2843 = vadd.f32 %v2721, %v2842
      %2844 = vmatmul.f32.gmra.mxu0 %v2602
      %v2845 = vpop.f32.mrf.mxu0
      %v2846 = vadd.f32 %v2724, %v2845
      %2847 = vmatmul.f32.gmra.mxu0 %v2605
      %v2848 = vpop.f32.mrf.mxu0
      %v2849 = vadd.f32 %v2727, %v2848
      %2850 = vmatmul.f32.gmra.mxu0 %v2608
      %v2851 = vpop.f32.mrf.mxu0
      %v2852 = vadd.f32 %v2730, %v2851
      %2853 = vmatmul.f32.gmra.mxu0 %v2611
      %v2854 = vpop.f32.mrf.mxu0
      %v2855 = vadd.f32 %v2733, %v2854
      %2856 = vmatmul.f32.gmra.mxu0 %v2614
      %v2857 = vpop.f32.mrf.mxu0
      %v2858 = vadd.f32 %v2736, %v2857
      %2859 = vdwg.mxu0
      %s2860 = scalar_lea.vmem %s5, 24
      %v2861 = vld [vmem:[%s2860] sm:$0xf]
      %v2863 = vsel %vm461, %v2521, 0
      %v2866 = vsel %vm461, %v2522, 0
      %v2869 = vsel %vm703, %v2861, 0
      %2871 = vmatpush.msra.mxu0 0.0
      %2872 = vmatpush.msra.mxu0 0.0
      %2873 = vmatpush.msra.mxu0 0.0
      %2874 = vmatpush.msra.mxu0 0.0
      %2875 = vmatpush.msra.mxu0 0.0
      %2876 = vmatpush.msra.mxu0 0.0
      %2877 = vmatpush.msra.mxu0 0.0
      %2878 = vmatpush.msra.mxu0 0.0
      %2879 = vmatpush.msra.mxu0 0.0
      %2880 = vmatpush.msra.mxu0 0.0
      %2881 = vmatpush.msra.mxu0 0.0
      %2882 = vmatpush.msra.mxu0 0.0
      %2883 = vmatpush.msra.mxu0 0.0
      %2884 = vmatpush.msra.mxu0 0.0
      %2885 = vmatpush.msra.mxu0 0.0
      %2886 = vmatpush.msra.mxu0 %v2869
      %2887 = vmatmul.f32.gmra.mxu0 %v2533
      %v2888 = vpop.f32.mrf.mxu0
      %v2889 = vadd.f32 0.0, %v2888
      %2890 = vmatmul.f32.gmra.mxu0 %v2536
      %v2891 = vpop.f32.mrf.mxu0
      %v2892 = vadd.f32 0.0, %v2891
      %2893 = vmatmul.f32.gmra.mxu0 %v2539
      %v2894 = vpop.f32.mrf.mxu0
      %v2895 = vadd.f32 0.0, %v2894
      %2896 = vmatmul.f32.gmra.mxu0 %v2542
      %v2897 = vpop.f32.mrf.mxu0
      %v2898 = vadd.f32 0.0, %v2897
      %2899 = vmatmul.f32.gmra.mxu0 %v2545
      %v2900 = vpop.f32.mrf.mxu0
      %v2901 = vadd.f32 0.0, %v2900
      %2902 = vmatmul.f32.gmra.mxu0 %v2548
      %v2903 = vpop.f32.mrf.mxu0
      %v2904 = vadd.f32 0.0, %v2903
      %2905 = vmatmul.f32.gmra.mxu0 %v2551
      %v2906 = vpop.f32.mrf.mxu0
      %v2907 = vadd.f32 0.0, %v2906
      %2908 = vmatmul.f32.gmra.mxu0 %v2554
      %v2909 = vpop.f32.mrf.mxu0
      %v2910 = vadd.f32 0.0, %v2909
      %2911 = vmatmul.f32.gmra.mxu0 %v2557
      %v2912 = vpop.f32.mrf.mxu0
      %v2913 = vadd.f32 0.0, %v2912
      %2914 = vmatmul.f32.gmra.mxu0 %v2560
      %v2915 = vpop.f32.mrf.mxu0
      %v2916 = vadd.f32 0.0, %v2915
      %2917 = vmatmul.f32.gmra.mxu0 %v2563
      %v2918 = vpop.f32.mrf.mxu0
      %v2919 = vadd.f32 0.0, %v2918
      %2920 = vmatmul.f32.gmra.mxu0 %v2566
      %v2921 = vpop.f32.mrf.mxu0
      %v2922 = vadd.f32 0.0, %v2921
      %2923 = vmatmul.f32.gmra.mxu0 %v2569
      %v2924 = vpop.f32.mrf.mxu0
      %v2925 = vadd.f32 0.0, %v2924
      %2926 = vmatmul.f32.gmra.mxu0 %v2572
      %v2927 = vpop.f32.mrf.mxu0
      %v2928 = vadd.f32 0.0, %v2927
      %2929 = vmatmul.f32.gmra.mxu0 %v2575
      %v2930 = vpop.f32.mrf.mxu0
      %v2931 = vadd.f32 0.0, %v2930
      %2932 = vmatmul.f32.gmra.mxu0 %v2578
      %v2933 = vpop.f32.mrf.mxu0
      %v2934 = vadd.f32 0.0, %v2933
      %2935 = vmatmul.f32.gmra.mxu0 %v2581
      %v2936 = vpop.f32.mrf.mxu0
      %v2937 = vadd.f32 0.0, %v2936
      %2938 = vmatmul.f32.gmra.mxu0 %v2584
      %v2939 = vpop.f32.mrf.mxu0
      %v2940 = vadd.f32 0.0, %v2939
      %2941 = vmatmul.f32.gmra.mxu0 %v2587
      %v2942 = vpop.f32.mrf.mxu0
      %v2943 = vadd.f32 0.0, %v2942
      %2944 = vmatmul.f32.gmra.mxu0 %v2590
      %v2945 = vpop.f32.mrf.mxu0
      %v2946 = vadd.f32 0.0, %v2945
      %2947 = vmatmul.f32.gmra.mxu0 %v2593
      %v2948 = vpop.f32.mrf.mxu0
      %v2949 = vadd.f32 0.0, %v2948
      %2950 = vmatmul.f32.gmra.mxu0 %v2596
      %v2951 = vpop.f32.mrf.mxu0
      %v2952 = vadd.f32 0.0, %v2951
      %2953 = vmatmul.f32.gmra.mxu0 %v2599
      %v2954 = vpop.f32.mrf.mxu0
      %v2955 = vadd.f32 0.0, %v2954
      %2956 = vmatmul.f32.gmra.mxu0 %v2602
      %v2957 = vpop.f32.mrf.mxu0
      %v2958 = vadd.f32 0.0, %v2957
      %2959 = vmatmul.f32.gmra.mxu0 %v2605
      %v2960 = vpop.f32.mrf.mxu0
      %v2961 = vadd.f32 0.0, %v2960
      %2962 = vmatmul.f32.gmra.mxu0 %v2608
      %v2963 = vpop.f32.mrf.mxu0
      %v2964 = vadd.f32 0.0, %v2963
      %2965 = vmatmul.f32.gmra.mxu0 %v2611
      %v2966 = vpop.f32.mrf.mxu0
      %v2967 = vadd.f32 0.0, %v2966
      %2968 = vmatmul.f32.gmra.mxu0 %v2614
      %v2969 = vpop.f32.mrf.mxu0
      %v2970 = vadd.f32 0.0, %v2969
      %2971 = vmatmul.f32.gmra.mxu0 %v2617
      %v2972 = vpop.f32.mrf.mxu0
      %v2973 = vadd.f32 0.0, %v2972
      %2974 = vmatmul.f32.gmra.mxu0 %v2620
      %v2975 = vpop.f32.mrf.mxu0
      %v2976 = vadd.f32 0.0, %v2975
      %2977 = vmatmul.f32.gmra.mxu0 %v2863
      %v2978 = vpop.f32.mrf.mxu0
      %v2979 = vadd.f32 0.0, %v2978
      %2980 = vmatmul.f32.gmra.mxu0 %v2866
      %v2981 = vpop.f32.mrf.mxu0
      %v2982 = vadd.f32 0.0, %v2981
      %2983 = vdwg.mxu0
      %v2984 = vadd.f32 %v2765, %v2889
      %v2985 = vadd.f32 %v2768, %v2892
      %v2986 = vadd.f32 %v2771, %v2895
      %v2987 = vadd.f32 %v2774, %v2898
      %v2988 = vadd.f32 %v2777, %v2901
      %v2989 = vadd.f32 %v2780, %v2904
      %v2990 = vadd.f32 %v2783, %v2907
      %v2991 = vadd.f32 %v2786, %v2910
      %v2992 = vadd.f32 %v2789, %v2913
      %v2993 = vadd.f32 %v2792, %v2916
      %v2994 = vadd.f32 %v2795, %v2919
      %v2995 = vadd.f32 %v2798, %v2922
      %v2996 = vadd.f32 %v2801, %v2925
      %v2997 = vadd.f32 %v2804, %v2928
      %v2998 = vadd.f32 %v2807, %v2931
      %v2999 = vadd.f32 %v2810, %v2934
      %v3000 = vadd.f32 %v2813, %v2937
      %v3001 = vadd.f32 %v2816, %v2940
      %v3002 = vadd.f32 %v2819, %v2943
      %v3003 = vadd.f32 %v2822, %v2946
      %v3004 = vadd.f32 %v2825, %v2949
      %v3005 = vadd.f32 %v2828, %v2952
      %v3006 = vadd.f32 %v2831, %v2955
      %v3007 = vadd.f32 %v2834, %v2958
      %v3008 = vadd.f32 %v2837, %v2961
      %v3009 = vadd.f32 %v2840, %v2964
      %v3010 = vadd.f32 %v2843, %v2967
      %v3011 = vadd.f32 %v2846, %v2970
      %v3012 = vadd.f32 %v2849, %v2973
      %v3013 = vadd.f32 %v2852, %v2976
      %v3014 = vadd.f32 %v2855, %v2979
      %v3015 = vadd.f32 %v2858, %v2982
      %s3016 = scalar_lea.vmem %s5, 4
      %v3017 = vld [vmem:[%s3016] sm:$0xf]
      %s3018 = scalar_lea.vmem %s5, 16
      %v3019 = vld [vmem:[%s3018] sm:$0xf]
      %v3021 = vsel %vm703, %v3019, 0
      %3023 = vmatpush.msra.mxu0 0.0
      %3024 = vmatpush.msra.mxu0 0.0
      %3025 = vmatpush.msra.mxu0 0.0
      %3026 = vmatpush.msra.mxu0 0.0
      %3027 = vmatpush.msra.mxu0 0.0
      %3028 = vmatpush.msra.mxu0 0.0
      %3029 = vmatpush.msra.mxu0 0.0
      %3030 = vmatpush.msra.mxu0 0.0
      %3031 = vmatpush.msra.mxu0 0.0
      %3032 = vmatpush.msra.mxu0 0.0
      %3033 = vmatpush.msra.mxu0 0.0
      %3034 = vmatpush.msra.mxu0 0.0
      %3035 = vmatpush.msra.mxu0 0.0
      %3036 = vmatpush.msra.mxu0 0.0
      %3037 = vmatpush.msra.mxu0 0.0
      %3038 = vmatpush.msra.mxu0 %v3021
      %3039 = vmatmul.f32.gmra.mxu0 %v2527
      %v3040 = vpop.f32.mrf.mxu0
      %v3041 = vadd.f32 0.0, %v3040
      %3042 = vmatmul.f32.gmra.mxu0 %v2530
      %v3043 = vpop.f32.mrf.mxu0
      %v3044 = vadd.f32 0.0, %v3043
      %3045 = vmatmul.f32.gmra.mxu0 %v2533
      %v3046 = vpop.f32.mrf.mxu0
      %v3047 = vadd.f32 0.0, %v3046
      %3048 = vmatmul.f32.gmra.mxu0 %v2536
      %v3049 = vpop.f32.mrf.mxu0
      %v3050 = vadd.f32 0.0, %v3049
      %3051 = vmatmul.f32.gmra.mxu0 %v2539
      %v3052 = vpop.f32.mrf.mxu0
      %v3053 = vadd.f32 0.0, %v3052
      %3054 = vmatmul.f32.gmra.mxu0 %v2542
      %v3055 = vpop.f32.mrf.mxu0
      %v3056 = vadd.f32 0.0, %v3055
      %3057 = vmatmul.f32.gmra.mxu0 %v2545
      %v3058 = vpop.f32.mrf.mxu0
      %v3059 = vadd.f32 0.0, %v3058
      %3060 = vmatmul.f32.gmra.mxu0 %v2548
      %v3061 = vpop.f32.mrf.mxu0
      %v3062 = vadd.f32 0.0, %v3061
      %3063 = vmatmul.f32.gmra.mxu0 %v2551
      %v3064 = vpop.f32.mrf.mxu0
      %v3065 = vadd.f32 0.0, %v3064
      %3066 = vmatmul.f32.gmra.mxu0 %v2554
      %v3067 = vpop.f32.mrf.mxu0
      %v3068 = vadd.f32 0.0, %v3067
      %3069 = vmatmul.f32.gmra.mxu0 %v2557
      %v3070 = vpop.f32.mrf.mxu0
      %v3071 = vadd.f32 0.0, %v3070
      %3072 = vmatmul.f32.gmra.mxu0 %v2560
      %v3073 = vpop.f32.mrf.mxu0
      %v3074 = vadd.f32 0.0, %v3073
      %3075 = vmatmul.f32.gmra.mxu0 %v2563
      %v3076 = vpop.f32.mrf.mxu0
      %v3077 = vadd.f32 0.0, %v3076
      %3078 = vmatmul.f32.gmra.mxu0 %v2566
      %v3079 = vpop.f32.mrf.mxu0
      %v3080 = vadd.f32 0.0, %v3079
      %3081 = vmatmul.f32.gmra.mxu0 %v2569
      %v3082 = vpop.f32.mrf.mxu0
      %v3083 = vadd.f32 0.0, %v3082
      %3084 = vmatmul.f32.gmra.mxu0 %v2572
      %v3085 = vpop.f32.mrf.mxu0
      %v3086 = vadd.f32 0.0, %v3085
      %3087 = vmatmul.f32.gmra.mxu0 %v2575
      %v3088 = vpop.f32.mrf.mxu0
      %v3089 = vadd.f32 0.0, %v3088
      %3090 = vmatmul.f32.gmra.mxu0 %v2578
      %v3091 = vpop.f32.mrf.mxu0
      %v3092 = vadd.f32 0.0, %v3091
      %3093 = vmatmul.f32.gmra.mxu0 %v2581
      %v3094 = vpop.f32.mrf.mxu0
      %v3095 = vadd.f32 0.0, %v3094
      %3096 = vmatmul.f32.gmra.mxu0 %v2584
      %v3097 = vpop.f32.mrf.mxu0
      %v3098 = vadd.f32 0.0, %v3097
      %3099 = vmatmul.f32.gmra.mxu0 %v2587
      %v3100 = vpop.f32.mrf.mxu0
      %v3101 = vadd.f32 0.0, %v3100
      %3102 = vmatmul.f32.gmra.mxu0 %v2590
      %v3103 = vpop.f32.mrf.mxu0
      %v3104 = vadd.f32 0.0, %v3103
      %3105 = vmatmul.f32.gmra.mxu0 %v2593
      %v3106 = vpop.f32.mrf.mxu0
      %v3107 = vadd.f32 0.0, %v3106
      %3108 = vmatmul.f32.gmra.mxu0 %v2596
      %v3109 = vpop.f32.mrf.mxu0
      %v3110 = vadd.f32 0.0, %v3109
      %3111 = vmatmul.f32.gmra.mxu0 %v2599
      %v3112 = vpop.f32.mrf.mxu0
      %v3113 = vadd.f32 0.0, %v3112
      %3114 = vmatmul.f32.gmra.mxu0 %v2602
      %v3115 = vpop.f32.mrf.mxu0
      %v3116 = vadd.f32 0.0, %v3115
      %3117 = vmatmul.f32.gmra.mxu0 %v2605
      %v3118 = vpop.f32.mrf.mxu0
      %v3119 = vadd.f32 0.0, %v3118
      %3120 = vmatmul.f32.gmra.mxu0 %v2608
      %v3121 = vpop.f32.mrf.mxu0
      %v3122 = vadd.f32 0.0, %v3121
      %3123 = vmatmul.f32.gmra.mxu0 %v2611
      %v3124 = vpop.f32.mrf.mxu0
      %v3125 = vadd.f32 0.0, %v3124
      %3126 = vmatmul.f32.gmra.mxu0 %v2614
      %v3127 = vpop.f32.mrf.mxu0
      %v3128 = vadd.f32 0.0, %v3127
      %3129 = vmatmul.f32.gmra.mxu0 %v2617
      %v3130 = vpop.f32.mrf.mxu0
      %v3131 = vadd.f32 0.0, %v3130
      %3132 = vmatmul.f32.gmra.mxu0 %v2620
      %v3133 = vpop.f32.mrf.mxu0
      %v3134 = vadd.f32 0.0, %v3133
      %3135 = vdwg.mxu0
      %v3137 = vsel %vm703, %v3017, 0
      %3139 = vmatpush.msra.mxu0 0.0
      %3140 = vmatpush.msra.mxu0 0.0
      %3141 = vmatpush.msra.mxu0 0.0
      %3142 = vmatpush.msra.mxu0 0.0
      %3143 = vmatpush.msra.mxu0 0.0
      %3144 = vmatpush.msra.mxu0 0.0
      %3145 = vmatpush.msra.mxu0 0.0
      %3146 = vmatpush.msra.mxu0 0.0
      %3147 = vmatpush.msra.mxu0 0.0
      %3148 = vmatpush.msra.mxu0 0.0
      %3149 = vmatpush.msra.mxu0 0.0
      %3150 = vmatpush.msra.mxu0 0.0
      %3151 = vmatpush.msra.mxu0 0.0
      %3152 = vmatpush.msra.mxu0 0.0
      %3153 = vmatpush.msra.mxu0 0.0
      %3154 = vmatpush.msra.mxu0 %v3137
      %3155 = vmatmul.f32.gmra.mxu0 %v2739
      %v3156 = vpop.f32.mrf.mxu0
      %v3157 = vadd.f32 %v3041, %v3156
      %3158 = vmatmul.f32.gmra.mxu0 %v2742
      %v3159 = vpop.f32.mrf.mxu0
      %v3160 = vadd.f32 %v3044, %v3159
      %3161 = vmatmul.f32.gmra.mxu0 %v2527
      %v3162 = vpop.f32.mrf.mxu0
      %v3163 = vadd.f32 %v3047, %v3162
      %3164 = vmatmul.f32.gmra.mxu0 %v2530
      %v3165 = vpop.f32.mrf.mxu0
      %v3166 = vadd.f32 %v3050, %v3165
      %3167 = vmatmul.f32.gmra.mxu0 %v2533
      %v3168 = vpop.f32.mrf.mxu0
      %v3169 = vadd.f32 %v3053, %v3168
      %3170 = vmatmul.f32.gmra.mxu0 %v2536
      %v3171 = vpop.f32.mrf.mxu0
      %v3172 = vadd.f32 %v3056, %v3171
      %3173 = vmatmul.f32.gmra.mxu0 %v2539
      %v3174 = vpop.f32.mrf.mxu0
      %v3175 = vadd.f32 %v3059, %v3174
      %3176 = vmatmul.f32.gmra.mxu0 %v2542
      %v3177 = vpop.f32.mrf.mxu0
      %v3178 = vadd.f32 %v3062, %v3177
      %3179 = vmatmul.f32.gmra.mxu0 %v2545
      %v3180 = vpop.f32.mrf.mxu0
      %v3181 = vadd.f32 %v3065, %v3180
      %3182 = vmatmul.f32.gmra.mxu0 %v2548
      %v3183 = vpop.f32.mrf.mxu0
      %v3184 = vadd.f32 %v3068, %v3183
      %3185 = vmatmul.f32.gmra.mxu0 %v2551
      %v3186 = vpop.f32.mrf.mxu0
      %v3187 = vadd.f32 %v3071, %v3186
      %3188 = vmatmul.f32.gmra.mxu0 %v2554
      %v3189 = vpop.f32.mrf.mxu0
      %v3190 = vadd.f32 %v3074, %v3189
      %3191 = vmatmul.f32.gmra.mxu0 %v2557
      %v3192 = vpop.f32.mrf.mxu0
      %v3193 = vadd.f32 %v3077, %v3192
      %3194 = vmatmul.f32.gmra.mxu0 %v2560
      %v3195 = vpop.f32.mrf.mxu0
      %v3196 = vadd.f32 %v3080, %v3195
      %3197 = vmatmul.f32.gmra.mxu0 %v2563
      %v3198 = vpop.f32.mrf.mxu0
      %v3199 = vadd.f32 %v3083, %v3198
      %3200 = vmatmul.f32.gmra.mxu0 %v2566
      %v3201 = vpop.f32.mrf.mxu0
      %v3202 = vadd.f32 %v3086, %v3201
      %3203 = vmatmul.f32.gmra.mxu0 %v2569
      %v3204 = vpop.f32.mrf.mxu0
      %v3205 = vadd.f32 %v3089, %v3204
      %3206 = vmatmul.f32.gmra.mxu0 %v2572
      %v3207 = vpop.f32.mrf.mxu0
      %v3208 = vadd.f32 %v3092, %v3207
      %3209 = vmatmul.f32.gmra.mxu0 %v2575
      %v3210 = vpop.f32.mrf.mxu0
      %v3211 = vadd.f32 %v3095, %v3210
      %3212 = vmatmul.f32.gmra.mxu0 %v2578
      %v3213 = vpop.f32.mrf.mxu0
      %v3214 = vadd.f32 %v3098, %v3213
      %3215 = vmatmul.f32.gmra.mxu0 %v2581
      %v3216 = vpop.f32.mrf.mxu0
      %v3217 = vadd.f32 %v3101, %v3216
      %3218 = vmatmul.f32.gmra.mxu0 %v2584
      %v3219 = vpop.f32.mrf.mxu0
      %v3220 = vadd.f32 %v3104, %v3219
      %3221 = vmatmul.f32.gmra.mxu0 %v2587
      %v3222 = vpop.f32.mrf.mxu0
      %v3223 = vadd.f32 %v3107, %v3222
      %3224 = vmatmul.f32.gmra.mxu0 %v2590
      %v3225 = vpop.f32.mrf.mxu0
      %v3226 = vadd.f32 %v3110, %v3225
      %3227 = vmatmul.f32.gmra.mxu0 %v2593
      %v3228 = vpop.f32.mrf.mxu0
      %v3229 = vadd.f32 %v3113, %v3228
      %3230 = vmatmul.f32.gmra.mxu0 %v2596
      %v3231 = vpop.f32.mrf.mxu0
      %v3232 = vadd.f32 %v3116, %v3231
      %3233 = vmatmul.f32.gmra.mxu0 %v2599
      %v3234 = vpop.f32.mrf.mxu0
      %v3235 = vadd.f32 %v3119, %v3234
      %3236 = vmatmul.f32.gmra.mxu0 %v2602
      %v3237 = vpop.f32.mrf.mxu0
      %v3238 = vadd.f32 %v3122, %v3237
      %3239 = vmatmul.f32.gmra.mxu0 %v2605
      %v3240 = vpop.f32.mrf.mxu0
      %v3241 = vadd.f32 %v3125, %v3240
      %3242 = vmatmul.f32.gmra.mxu0 %v2608
      %v3243 = vpop.f32.mrf.mxu0
      %v3244 = vadd.f32 %v3128, %v3243
      %3245 = vmatmul.f32.gmra.mxu0 %v2611
      %v3246 = vpop.f32.mrf.mxu0
      %v3247 = vadd.f32 %v3131, %v3246
      %3248 = vmatmul.f32.gmra.mxu0 %v2614
      %v3249 = vpop.f32.mrf.mxu0
      %v3250 = vadd.f32 %v3134, %v3249
      %3251 = vdwg.mxu0
      %s3252 = scalar_lea.vmem %s5, 28
      %v3253 = vld [vmem:[%s3252] sm:$0xf]
      %v3255 = vsel %vm703, %v3253, 0
      %3257 = vmatpush.msra.mxu0 0.0
      %3258 = vmatpush.msra.mxu0 0.0
      %3259 = vmatpush.msra.mxu0 0.0
      %3260 = vmatpush.msra.mxu0 0.0
      %3261 = vmatpush.msra.mxu0 0.0
      %3262 = vmatpush.msra.mxu0 0.0
      %3263 = vmatpush.msra.mxu0 0.0
      %3264 = vmatpush.msra.mxu0 0.0
      %3265 = vmatpush.msra.mxu0 0.0
      %3266 = vmatpush.msra.mxu0 0.0
      %3267 = vmatpush.msra.mxu0 0.0
      %3268 = vmatpush.msra.mxu0 0.0
      %3269 = vmatpush.msra.mxu0 0.0
      %3270 = vmatpush.msra.mxu0 0.0
      %3271 = vmatpush.msra.mxu0 0.0
      %3272 = vmatpush.msra.mxu0 %v3255
      %3273 = vmatmul.f32.gmra.mxu0 %v2533
      %v3274 = vpop.f32.mrf.mxu0
      %v3275 = vadd.f32 0.0, %v3274
      %3276 = vmatmul.f32.gmra.mxu0 %v2536
      %v3277 = vpop.f32.mrf.mxu0
      %v3278 = vadd.f32 0.0, %v3277
      %3279 = vmatmul.f32.gmra.mxu0 %v2539
      %v3280 = vpop.f32.mrf.mxu0
      %v3281 = vadd.f32 0.0, %v3280
      %3282 = vmatmul.f32.gmra.mxu0 %v2542
      %v3283 = vpop.f32.mrf.mxu0
      %v3284 = vadd.f32 0.0, %v3283
      %3285 = vmatmul.f32.gmra.mxu0 %v2545
      %v3286 = vpop.f32.mrf.mxu0
      %v3287 = vadd.f32 0.0, %v3286
      %3288 = vmatmul.f32.gmra.mxu0 %v2548
      %v3289 = vpop.f32.mrf.mxu0
      %v3290 = vadd.f32 0.0, %v3289
      %3291 = vmatmul.f32.gmra.mxu0 %v2551
      %v3292 = vpop.f32.mrf.mxu0
      %v3293 = vadd.f32 0.0, %v3292
      %3294 = vmatmul.f32.gmra.mxu0 %v2554
      %v3295 = vpop.f32.mrf.mxu0
      %v3296 = vadd.f32 0.0, %v3295
      %3297 = vmatmul.f32.gmra.mxu0 %v2557
      %v3298 = vpop.f32.mrf.mxu0
      %v3299 = vadd.f32 0.0, %v3298
      %3300 = vmatmul.f32.gmra.mxu0 %v2560
      %v3301 = vpop.f32.mrf.mxu0
      %v3302 = vadd.f32 0.0, %v3301
      %3303 = vmatmul.f32.gmra.mxu0 %v2563
      %v3304 = vpop.f32.mrf.mxu0
      %v3305 = vadd.f32 0.0, %v3304
      %3306 = vmatmul.f32.gmra.mxu0 %v2566
      %v3307 = vpop.f32.mrf.mxu0
      %v3308 = vadd.f32 0.0, %v3307
      %3309 = vmatmul.f32.gmra.mxu0 %v2569
      %v3310 = vpop.f32.mrf.mxu0
      %v3311 = vadd.f32 0.0, %v3310
      %3312 = vmatmul.f32.gmra.mxu0 %v2572
      %v3313 = vpop.f32.mrf.mxu0
      %v3314 = vadd.f32 0.0, %v3313
      %3315 = vmatmul.f32.gmra.mxu0 %v2575
      %v3316 = vpop.f32.mrf.mxu0
      %v3317 = vadd.f32 0.0, %v3316
      %3318 = vmatmul.f32.gmra.mxu0 %v2578
      %v3319 = vpop.f32.mrf.mxu0
      %v3320 = vadd.f32 0.0, %v3319
      %3321 = vmatmul.f32.gmra.mxu0 %v2581
      %v3322 = vpop.f32.mrf.mxu0
      %v3323 = vadd.f32 0.0, %v3322
      %3324 = vmatmul.f32.gmra.mxu0 %v2584
      %v3325 = vpop.f32.mrf.mxu0
      %v3326 = vadd.f32 0.0, %v3325
      %3327 = vmatmul.f32.gmra.mxu0 %v2587
      %v3328 = vpop.f32.mrf.mxu0
      %v3329 = vadd.f32 0.0, %v3328
      %3330 = vmatmul.f32.gmra.mxu0 %v2590
      %v3331 = vpop.f32.mrf.mxu0
      %v3332 = vadd.f32 0.0, %v3331
      %3333 = vmatmul.f32.gmra.mxu0 %v2593
      %v3334 = vpop.f32.mrf.mxu0
      %v3335 = vadd.f32 0.0, %v3334
      %3336 = vmatmul.f32.gmra.mxu0 %v2596
      %v3337 = vpop.f32.mrf.mxu0
      %v3338 = vadd.f32 0.0, %v3337
      %3339 = vmatmul.f32.gmra.mxu0 %v2599
      %v3340 = vpop.f32.mrf.mxu0
      %v3341 = vadd.f32 0.0, %v3340
      %3342 = vmatmul.f32.gmra.mxu0 %v2602
      %v3343 = vpop.f32.mrf.mxu0
      %v3344 = vadd.f32 0.0, %v3343
      %3345 = vmatmul.f32.gmra.mxu0 %v2605
      %v3346 = vpop.f32.mrf.mxu0
      %v3347 = vadd.f32 0.0, %v3346
      %3348 = vmatmul.f32.gmra.mxu0 %v2608
      %v3349 = vpop.f32.mrf.mxu0
      %v3350 = vadd.f32 0.0, %v3349
      %3351 = vmatmul.f32.gmra.mxu0 %v2611
      %v3352 = vpop.f32.mrf.mxu0
      %v3353 = vadd.f32 0.0, %v3352
      %3354 = vmatmul.f32.gmra.mxu0 %v2614
      %v3355 = vpop.f32.mrf.mxu0
      %v3356 = vadd.f32 0.0, %v3355
      %3357 = vmatmul.f32.gmra.mxu0 %v2617
      %v3358 = vpop.f32.mrf.mxu0
      %v3359 = vadd.f32 0.0, %v3358
      %3360 = vmatmul.f32.gmra.mxu0 %v2620
      %v3361 = vpop.f32.mrf.mxu0
      %v3362 = vadd.f32 0.0, %v3361
      %3363 = vmatmul.f32.gmra.mxu0 %v2863
      %v3364 = vpop.f32.mrf.mxu0
      %v3365 = vadd.f32 0.0, %v3364
      %3366 = vmatmul.f32.gmra.mxu0 %v2866
      %v3367 = vpop.f32.mrf.mxu0
      %v3368 = vadd.f32 0.0, %v3367
      %3369 = vdwg.mxu0
      %v3370 = vadd.f32 %v3157, %v3275
      %v3371 = vadd.f32 %v3160, %v3278
      %v3372 = vadd.f32 %v3163, %v3281
      %v3373 = vadd.f32 %v3166, %v3284
      %v3374 = vadd.f32 %v3169, %v3287
      %v3375 = vadd.f32 %v3172, %v3290
      %v3376 = vadd.f32 %v3175, %v3293
      %v3377 = vadd.f32 %v3178, %v3296
      %v3378 = vadd.f32 %v3181, %v3299
      %v3379 = vadd.f32 %v3184, %v3302
      %v3380 = vadd.f32 %v3187, %v3305
      %v3381 = vadd.f32 %v3190, %v3308
      %v3382 = vadd.f32 %v3193, %v3311
      %v3383 = vadd.f32 %v3196, %v3314
      %v3384 = vadd.f32 %v3199, %v3317
      %v3385 = vadd.f32 %v3202, %v3320
      %v3386 = vadd.f32 %v3205, %v3323
      %v3387 = vadd.f32 %v3208, %v3326
      %v3388 = vadd.f32 %v3211, %v3329
      %v3389 = vadd.f32 %v3214, %v3332
      %v3390 = vadd.f32 %v3217, %v3335
      %v3391 = vadd.f32 %v3220, %v3338
      %v3392 = vadd.f32 %v3223, %v3341
      %v3393 = vadd.f32 %v3226, %v3344
      %v3394 = vadd.f32 %v3229, %v3347
      %v3395 = vadd.f32 %v3232, %v3350
      %v3396 = vadd.f32 %v3235, %v3353
      %v3397 = vadd.f32 %v3238, %v3356
      %v3398 = vadd.f32 %v3241, %v3359
      %v3399 = vadd.f32 %v3244, %v3362
      %v3400 = vadd.f32 %v3247, %v3365
      %v3401 = vadd.f32 %v3250, %v3368
      %s3402 = scalar_lea.vmem %s5, 8
      %v3403 = vld [vmem:[%s3402] sm:$0xf]
      %s3404 = scalar_lea.vmem %s5, 20
      %v3405 = vld [vmem:[%s3404] sm:$0xf]
      %v3407 = vsel %vm703, %v3405, 0
      %3409 = vmatpush.msra.mxu0 0.0
      %3410 = vmatpush.msra.mxu0 0.0
      %3411 = vmatpush.msra.mxu0 0.0
      %3412 = vmatpush.msra.mxu0 0.0
      %3413 = vmatpush.msra.mxu0 0.0
      %3414 = vmatpush.msra.mxu0 0.0
      %3415 = vmatpush.msra.mxu0 0.0
      %3416 = vmatpush.msra.mxu0 0.0
      %3417 = vmatpush.msra.mxu0 0.0
      %3418 = vmatpush.msra.mxu0 0.0
      %3419 = vmatpush.msra.mxu0 0.0
      %3420 = vmatpush.msra.mxu0 0.0
      %3421 = vmatpush.msra.mxu0 0.0
      %3422 = vmatpush.msra.mxu0 0.0
      %3423 = vmatpush.msra.mxu0 0.0
      %3424 = vmatpush.msra.mxu0 %v3407
      %3425 = vmatmul.f32.gmra.mxu0 %v2527
      %v3426 = vpop.f32.mrf.mxu0
      %v3427 = vadd.f32 0.0, %v3426
      %3428 = vmatmul.f32.gmra.mxu0 %v2530
      %v3429 = vpop.f32.mrf.mxu0
      %v3430 = vadd.f32 0.0, %v3429
      %3431 = vmatmul.f32.gmra.mxu0 %v2533
      %v3432 = vpop.f32.mrf.mxu0
      %v3433 = vadd.f32 0.0, %v3432
      %3434 = vmatmul.f32.gmra.mxu0 %v2536
      %v3435 = vpop.f32.mrf.mxu0
      %v3436 = vadd.f32 0.0, %v3435
      %3437 = vmatmul.f32.gmra.mxu0 %v2539
      %v3438 = vpop.f32.mrf.mxu0
      %v3439 = vadd.f32 0.0, %v3438
      %3440 = vmatmul.f32.gmra.mxu0 %v2542
      %v3441 = vpop.f32.mrf.mxu0
      %v3442 = vadd.f32 0.0, %v3441
      %3443 = vmatmul.f32.gmra.mxu0 %v2545
      %v3444 = vpop.f32.mrf.mxu0
      %v3445 = vadd.f32 0.0, %v3444
      %3446 = vmatmul.f32.gmra.mxu0 %v2548
      %v3447 = vpop.f32.mrf.mxu0
      %v3448 = vadd.f32 0.0, %v3447
      %3449 = vmatmul.f32.gmra.mxu0 %v2551
      %v3450 = vpop.f32.mrf.mxu0
      %v3451 = vadd.f32 0.0, %v3450
      %3452 = vmatmul.f32.gmra.mxu0 %v2554
      %v3453 = vpop.f32.mrf.mxu0
      %v3454 = vadd.f32 0.0, %v3453
      %3455 = vmatmul.f32.gmra.mxu0 %v2557
      %v3456 = vpop.f32.mrf.mxu0
      %v3457 = vadd.f32 0.0, %v3456
      %3458 = vmatmul.f32.gmra.mxu0 %v2560
      %v3459 = vpop.f32.mrf.mxu0
      %v3460 = vadd.f32 0.0, %v3459
      %3461 = vmatmul.f32.gmra.mxu0 %v2563
      %v3462 = vpop.f32.mrf.mxu0
      %v3463 = vadd.f32 0.0, %v3462
      %3464 = vmatmul.f32.gmra.mxu0 %v2566
      %v3465 = vpop.f32.mrf.mxu0
      %v3466 = vadd.f32 0.0, %v3465
      %3467 = vmatmul.f32.gmra.mxu0 %v2569
      %v3468 = vpop.f32.mrf.mxu0
      %v3469 = vadd.f32 0.0, %v3468
      %3470 = vmatmul.f32.gmra.mxu0 %v2572
      %v3471 = vpop.f32.mrf.mxu0
      %v3472 = vadd.f32 0.0, %v3471
      %3473 = vmatmul.f32.gmra.mxu0 %v2575
      %v3474 = vpop.f32.mrf.mxu0
      %v3475 = vadd.f32 0.0, %v3474
      %3476 = vmatmul.f32.gmra.mxu0 %v2578
      %v3477 = vpop.f32.mrf.mxu0
      %v3478 = vadd.f32 0.0, %v3477
      %3479 = vmatmul.f32.gmra.mxu0 %v2581
      %v3480 = vpop.f32.mrf.mxu0
      %v3481 = vadd.f32 0.0, %v3480
      %3482 = vmatmul.f32.gmra.mxu0 %v2584
      %v3483 = vpop.f32.mrf.mxu0
      %v3484 = vadd.f32 0.0, %v3483
      %3485 = vmatmul.f32.gmra.mxu0 %v2587
      %v3486 = vpop.f32.mrf.mxu0
      %v3487 = vadd.f32 0.0, %v3486
      %3488 = vmatmul.f32.gmra.mxu0 %v2590
      %v3489 = vpop.f32.mrf.mxu0
      %v3490 = vadd.f32 0.0, %v3489
      %3491 = vmatmul.f32.gmra.mxu0 %v2593
      %v3492 = vpop.f32.mrf.mxu0
      %v3493 = vadd.f32 0.0, %v3492
      %3494 = vmatmul.f32.gmra.mxu0 %v2596
      %v3495 = vpop.f32.mrf.mxu0
      %v3496 = vadd.f32 0.0, %v3495
      %3497 = vmatmul.f32.gmra.mxu0 %v2599
      %v3498 = vpop.f32.mrf.mxu0
      %v3499 = vadd.f32 0.0, %v3498
      %3500 = vmatmul.f32.gmra.mxu0 %v2602
      %v3501 = vpop.f32.mrf.mxu0
      %v3502 = vadd.f32 0.0, %v3501
      %3503 = vmatmul.f32.gmra.mxu0 %v2605
      %v3504 = vpop.f32.mrf.mxu0
      %v3505 = vadd.f32 0.0, %v3504
      %3506 = vmatmul.f32.gmra.mxu0 %v2608
      %v3507 = vpop.f32.mrf.mxu0
      %v3508 = vadd.f32 0.0, %v3507
      %3509 = vmatmul.f32.gmra.mxu0 %v2611
      %v3510 = vpop.f32.mrf.mxu0
      %v3511 = vadd.f32 0.0, %v3510
      %3512 = vmatmul.f32.gmra.mxu0 %v2614
      %v3513 = vpop.f32.mrf.mxu0
      %v3514 = vadd.f32 0.0, %v3513
      %3515 = vmatmul.f32.gmra.mxu0 %v2617
      %v3516 = vpop.f32.mrf.mxu0
      %v3517 = vadd.f32 0.0, %v3516
      %3518 = vmatmul.f32.gmra.mxu0 %v2620
      %v3519 = vpop.f32.mrf.mxu0
      %v3520 = vadd.f32 0.0, %v3519
      %3521 = vdwg.mxu0
      %v3523 = vsel %vm703, %v3403, 0
      %3525 = vmatpush.msra.mxu0 0.0
      %3526 = vmatpush.msra.mxu0 0.0
      %3527 = vmatpush.msra.mxu0 0.0
      %3528 = vmatpush.msra.mxu0 0.0
      %3529 = vmatpush.msra.mxu0 0.0
      %3530 = vmatpush.msra.mxu0 0.0
      %3531 = vmatpush.msra.mxu0 0.0
      %3532 = vmatpush.msra.mxu0 0.0
      %3533 = vmatpush.msra.mxu0 0.0
      %3534 = vmatpush.msra.mxu0 0.0
      %3535 = vmatpush.msra.mxu0 0.0
      %3536 = vmatpush.msra.mxu0 0.0
      %3537 = vmatpush.msra.mxu0 0.0
      %3538 = vmatpush.msra.mxu0 0.0
      %3539 = vmatpush.msra.mxu0 0.0
      %3540 = vmatpush.msra.mxu0 %v3523
      %3541 = vmatmul.f32.gmra.mxu0 %v2739
      %v3542 = vpop.f32.mrf.mxu0
      %v3543 = vadd.f32 %v3427, %v3542
      %3544 = vmatmul.f32.gmra.mxu0 %v2742
      %v3545 = vpop.f32.mrf.mxu0
      %v3546 = vadd.f32 %v3430, %v3545
      %3547 = vmatmul.f32.gmra.mxu0 %v2527
      %v3548 = vpop.f32.mrf.mxu0
      %v3549 = vadd.f32 %v3433, %v3548
      %3550 = vmatmul.f32.gmra.mxu0 %v2530
      %v3551 = vpop.f32.mrf.mxu0
      %v3552 = vadd.f32 %v3436, %v3551
      %3553 = vmatmul.f32.gmra.mxu0 %v2533
      %v3554 = vpop.f32.mrf.mxu0
      %v3555 = vadd.f32 %v3439, %v3554
      %3556 = vmatmul.f32.gmra.mxu0 %v2536
      %v3557 = vpop.f32.mrf.mxu0
      %v3558 = vadd.f32 %v3442, %v3557
      %3559 = vmatmul.f32.gmra.mxu0 %v2539
      %v3560 = vpop.f32.mrf.mxu0
      %v3561 = vadd.f32 %v3445, %v3560
      %3562 = vmatmul.f32.gmra.mxu0 %v2542
      %v3563 = vpop.f32.mrf.mxu0
      %v3564 = vadd.f32 %v3448, %v3563
      %3565 = vmatmul.f32.gmra.mxu0 %v2545
      %v3566 = vpop.f32.mrf.mxu0
      %v3567 = vadd.f32 %v3451, %v3566
      %3568 = vmatmul.f32.gmra.mxu0 %v2548
      %v3569 = vpop.f32.mrf.mxu0
      %v3570 = vadd.f32 %v3454, %v3569
      %3571 = vmatmul.f32.gmra.mxu0 %v2551
      %v3572 = vpop.f32.mrf.mxu0
      %v3573 = vadd.f32 %v3457, %v3572
      %3574 = vmatmul.f32.gmra.mxu0 %v2554
      %v3575 = vpop.f32.mrf.mxu0
      %v3576 = vadd.f32 %v3460, %v3575
      %3577 = vmatmul.f32.gmra.mxu0 %v2557
      %v3578 = vpop.f32.mrf.mxu0
      %v3579 = vadd.f32 %v3463, %v3578
      %3580 = vmatmul.f32.gmra.mxu0 %v2560
      %v3581 = vpop.f32.mrf.mxu0
      %v3582 = vadd.f32 %v3466, %v3581
      %3583 = vmatmul.f32.gmra.mxu0 %v2563
      %v3584 = vpop.f32.mrf.mxu0
      %v3585 = vadd.f32 %v3469, %v3584
      %3586 = vmatmul.f32.gmra.mxu0 %v2566
      %v3587 = vpop.f32.mrf.mxu0
      %v3588 = vadd.f32 %v3472, %v3587
      %3589 = vmatmul.f32.gmra.mxu0 %v2569
      %v3590 = vpop.f32.mrf.mxu0
      %v3591 = vadd.f32 %v3475, %v3590
      %3592 = vmatmul.f32.gmra.mxu0 %v2572
      %v3593 = vpop.f32.mrf.mxu0
      %v3594 = vadd.f32 %v3478, %v3593
      %3595 = vmatmul.f32.gmra.mxu0 %v2575
      %v3596 = vpop.f32.mrf.mxu0
      %v3597 = vadd.f32 %v3481, %v3596
      %3598 = vmatmul.f32.gmra.mxu0 %v2578
      %v3599 = vpop.f32.mrf.mxu0
      %v3600 = vadd.f32 %v3484, %v3599
      %3601 = vmatmul.f32.gmra.mxu0 %v2581
      %v3602 = vpop.f32.mrf.mxu0
      %v3603 = vadd.f32 %v3487, %v3602
      %3604 = vmatmul.f32.gmra.mxu0 %v2584
      %v3605 = vpop.f32.mrf.mxu0
      %v3606 = vadd.f32 %v3490, %v3605
      %3607 = vmatmul.f32.gmra.mxu0 %v2587
      %v3608 = vpop.f32.mrf.mxu0
      %v3609 = vadd.f32 %v3493, %v3608
      %3610 = vmatmul.f32.gmra.mxu0 %v2590
      %v3611 = vpop.f32.mrf.mxu0
      %v3612 = vadd.f32 %v3496, %v3611
      %3613 = vmatmul.f32.gmra.mxu0 %v2593
      %v3614 = vpop.f32.mrf.mxu0
      %v3615 = vadd.f32 %v3499, %v3614
      %3616 = vmatmul.f32.gmra.mxu0 %v2596
      %v3617 = vpop.f32.mrf.mxu0
      %v3618 = vadd.f32 %v3502, %v3617
      %3619 = vmatmul.f32.gmra.mxu0 %v2599
      %v3620 = vpop.f32.mrf.mxu0
      %v3621 = vadd.f32 %v3505, %v3620
      %3622 = vmatmul.f32.gmra.mxu0 %v2602
      %v3623 = vpop.f32.mrf.mxu0
      %v3624 = vadd.f32 %v3508, %v3623
      %3625 = vmatmul.f32.gmra.mxu0 %v2605
      %v3626 = vpop.f32.mrf.mxu0
      %v3627 = vadd.f32 %v3511, %v3626
      %3628 = vmatmul.f32.gmra.mxu0 %v2608
      %v3629 = vpop.f32.mrf.mxu0
      %v3630 = vadd.f32 %v3514, %v3629
      %3631 = vmatmul.f32.gmra.mxu0 %v2611
      %v3632 = vpop.f32.mrf.mxu0
      %v3633 = vadd.f32 %v3517, %v3632
      %3634 = vmatmul.f32.gmra.mxu0 %v2614
      %v3635 = vpop.f32.mrf.mxu0
      %v3636 = vadd.f32 %v3520, %v3635
      %3637 = vdwg.mxu0
      %s3638 = scalar_lea.vmem %s5, 32
      %v3639 = vld [vmem:[%s3638] sm:$0xf]
      %v3641 = vsel %vm703, %v3639, 0
      %3643 = vmatpush.msra.mxu0 0.0
      %3644 = vmatpush.msra.mxu0 0.0
      %3645 = vmatpush.msra.mxu0 0.0
      %3646 = vmatpush.msra.mxu0 0.0
      %3647 = vmatpush.msra.mxu0 0.0
      %3648 = vmatpush.msra.mxu0 0.0
      %3649 = vmatpush.msra.mxu0 0.0
      %3650 = vmatpush.msra.mxu0 0.0
      %3651 = vmatpush.msra.mxu0 0.0
      %3652 = vmatpush.msra.mxu0 0.0
      %3653 = vmatpush.msra.mxu0 0.0
      %3654 = vmatpush.msra.mxu0 0.0
      %3655 = vmatpush.msra.mxu0 0.0
      %3656 = vmatpush.msra.mxu0 0.0
      %3657 = vmatpush.msra.mxu0 0.0
      %3658 = vmatpush.msra.mxu0 %v3641
      %3659 = vmatmul.f32.gmra.mxu0 %v2533
      %v3660 = vpop.f32.mrf.mxu0
      %v3661 = vadd.f32 0.0, %v3660
      %3662 = vmatmul.f32.gmra.mxu0 %v2536
      %v3663 = vpop.f32.mrf.mxu0
      %v3664 = vadd.f32 0.0, %v3663
      %3665 = vmatmul.f32.gmra.mxu0 %v2539
      %v3666 = vpop.f32.mrf.mxu0
      %v3667 = vadd.f32 0.0, %v3666
      %3668 = vmatmul.f32.gmra.mxu0 %v2542
      %v3669 = vpop.f32.mrf.mxu0
      %v3670 = vadd.f32 0.0, %v3669
      %3671 = vmatmul.f32.gmra.mxu0 %v2545
      %v3672 = vpop.f32.mrf.mxu0
      %v3673 = vadd.f32 0.0, %v3672
      %3674 = vmatmul.f32.gmra.mxu0 %v2548
      %v3675 = vpop.f32.mrf.mxu0
      %v3676 = vadd.f32 0.0, %v3675
      %3677 = vmatmul.f32.gmra.mxu0 %v2551
      %v3678 = vpop.f32.mrf.mxu0
      %v3679 = vadd.f32 0.0, %v3678
      %3680 = vmatmul.f32.gmra.mxu0 %v2554
      %v3681 = vpop.f32.mrf.mxu0
      %v3682 = vadd.f32 0.0, %v3681
      %3683 = vmatmul.f32.gmra.mxu0 %v2557
      %v3684 = vpop.f32.mrf.mxu0
      %v3685 = vadd.f32 0.0, %v3684
      %3686 = vmatmul.f32.gmra.mxu0 %v2560
      %v3687 = vpop.f32.mrf.mxu0
      %v3688 = vadd.f32 0.0, %v3687
      %3689 = vmatmul.f32.gmra.mxu0 %v2563
      %v3690 = vpop.f32.mrf.mxu0
      %v3691 = vadd.f32 0.0, %v3690
      %3692 = vmatmul.f32.gmra.mxu0 %v2566
      %v3693 = vpop.f32.mrf.mxu0
      %v3694 = vadd.f32 0.0, %v3693
      %3695 = vmatmul.f32.gmra.mxu0 %v2569
      %v3696 = vpop.f32.mrf.mxu0
      %v3697 = vadd.f32 0.0, %v3696
      %3698 = vmatmul.f32.gmra.mxu0 %v2572
      %v3699 = vpop.f32.mrf.mxu0
      %v3700 = vadd.f32 0.0, %v3699
      %3701 = vmatmul.f32.gmra.mxu0 %v2575
      %v3702 = vpop.f32.mrf.mxu0
      %v3703 = vadd.f32 0.0, %v3702
      %3704 = vmatmul.f32.gmra.mxu0 %v2578
      %v3705 = vpop.f32.mrf.mxu0
      %v3706 = vadd.f32 0.0, %v3705
      %3707 = vmatmul.f32.gmra.mxu0 %v2581
      %v3708 = vpop.f32.mrf.mxu0
      %v3709 = vadd.f32 0.0, %v3708
      %3710 = vmatmul.f32.gmra.mxu0 %v2584
      %v3711 = vpop.f32.mrf.mxu0
      %v3712 = vadd.f32 0.0, %v3711
      %3713 = vmatmul.f32.gmra.mxu0 %v2587
      %v3714 = vpop.f32.mrf.mxu0
      %v3715 = vadd.f32 0.0, %v3714
      %3716 = vmatmul.f32.gmra.mxu0 %v2590
      %v3717 = vpop.f32.mrf.mxu0
      %v3718 = vadd.f32 0.0, %v3717
      %3719 = vmatmul.f32.gmra.mxu0 %v2593
      %v3720 = vpop.f32.mrf.mxu0
      %v3721 = vadd.f32 0.0, %v3720
      %3722 = vmatmul.f32.gmra.mxu0 %v2596
      %v3723 = vpop.f32.mrf.mxu0
      %v3724 = vadd.f32 0.0, %v3723
      %3725 = vmatmul.f32.gmra.mxu0 %v2599
      %v3726 = vpop.f32.mrf.mxu0
      %v3727 = vadd.f32 0.0, %v3726
      %3728 = vmatmul.f32.gmra.mxu0 %v2602
      %v3729 = vpop.f32.mrf.mxu0
      %v3730 = vadd.f32 0.0, %v3729
      %3731 = vmatmul.f32.gmra.mxu0 %v2605
      %v3732 = vpop.f32.mrf.mxu0
      %v3733 = vadd.f32 0.0, %v3732
      %3734 = vmatmul.f32.gmra.mxu0 %v2608
      %v3735 = vpop.f32.mrf.mxu0
      %v3736 = vadd.f32 0.0, %v3735
      %3737 = vmatmul.f32.gmra.mxu0 %v2611
      %v3738 = vpop.f32.mrf.mxu0
      %v3739 = vadd.f32 0.0, %v3738
      %3740 = vmatmul.f32.gmra.mxu0 %v2614
      %v3741 = vpop.f32.mrf.mxu0
      %v3742 = vadd.f32 0.0, %v3741
      %3743 = vmatmul.f32.gmra.mxu0 %v2617
      %v3744 = vpop.f32.mrf.mxu0
      %v3745 = vadd.f32 0.0, %v3744
      %3746 = vmatmul.f32.gmra.mxu0 %v2620
      %v3747 = vpop.f32.mrf.mxu0
      %v3748 = vadd.f32 0.0, %v3747
      %3749 = vmatmul.f32.gmra.mxu0 %v2863
      %v3750 = vpop.f32.mrf.mxu0
      %v3751 = vadd.f32 0.0, %v3750
      %3752 = vmatmul.f32.gmra.mxu0 %v2866
      %v3753 = vpop.f32.mrf.mxu0
      %v3754 = vadd.f32 0.0, %v3753
      %3755 = vdwg.mxu0
      %v3756 = vadd.f32 %v3543, %v3661
      %v3757 = vadd.f32 %v3546, %v3664
      %v3758 = vadd.f32 %v3549, %v3667
      %v3759 = vadd.f32 %v3552, %v3670
      %v3760 = vadd.f32 %v3555, %v3673
      %v3761 = vadd.f32 %v3558, %v3676
      %v3762 = vadd.f32 %v3561, %v3679
      %v3763 = vadd.f32 %v3564, %v3682
      %v3764 = vadd.f32 %v3567, %v3685
      %v3765 = vadd.f32 %v3570, %v3688
      %v3766 = vadd.f32 %v3573, %v3691
      %v3767 = vadd.f32 %v3576, %v3694
      %v3768 = vadd.f32 %v3579, %v3697
      %v3769 = vadd.f32 %v3582, %v3700
      %v3770 = vadd.f32 %v3585, %v3703
      %v3771 = vadd.f32 %v3588, %v3706
      %v3772 = vadd.f32 %v3591, %v3709
      %v3773 = vadd.f32 %v3594, %v3712
      %v3774 = vadd.f32 %v3597, %v3715
      %v3775 = vadd.f32 %v3600, %v3718
      %v3776 = vadd.f32 %v3603, %v3721
      %v3777 = vadd.f32 %v3606, %v3724
      %v3778 = vadd.f32 %v3609, %v3727
      %v3779 = vadd.f32 %v3612, %v3730
      %v3780 = vadd.f32 %v3615, %v3733
      %v3781 = vadd.f32 %v3618, %v3736
      %v3782 = vadd.f32 %v3621, %v3739
      %v3783 = vadd.f32 %v3624, %v3742
      %v3784 = vadd.f32 %v3627, %v3745
      %v3785 = vadd.f32 %v3630, %v3748
      %v3786 = vadd.f32 %v3633, %v3751
      %v3787 = vadd.f32 %v3636, %v3754
      %v3788 = vrot.slane %v2984, 7
      %v3789 = vrot.slane %v2985, 7
      %v3790 = vrot.slane %v2986, 7
      %v3791 = vrot.slane %v2987, 7
      %v3792 = vrot.slane %v2988, 7
      %v3793 = vrot.slane %v2989, 7
      %v3794 = vrot.slane %v2990, 7
      %v3795 = vrot.slane %v2991, 7
      %v3796 = vrot.slane %v2992, 7
      %v3797 = vrot.slane %v2993, 7
      %v3798 = vrot.slane %v2994, 7
      %v3799 = vrot.slane %v2995, 7
      %v3800 = vrot.slane %v2996, 7
      %v3801 = vrot.slane %v2997, 7
      %v3802 = vrot.slane %v2998, 7
      %v3803 = vrot.slane %v2999, 7
      %v3804 = vrot.slane %v3000, 7
      %v3805 = vrot.slane %v3001, 7
      %v3806 = vrot.slane %v3002, 7
      %v3807 = vrot.slane %v3003, 7
      %v3808 = vrot.slane %v3004, 7
      %v3809 = vrot.slane %v3005, 7
      %v3810 = vrot.slane %v3006, 7
      %v3811 = vrot.slane %v3007, 7
      %v3812 = vrot.slane %v3008, 7
      %v3813 = vrot.slane %v3009, 7
      %v3814 = vrot.slane %v3010, 7
      %v3815 = vrot.slane %v3011, 7
      %v3816 = vrot.slane %v3012, 7
      %v3817 = vrot.slane %v3013, 7
      %v3818 = vrot.slane %v3014, 7
      %v3819 = vrot.slane %v3015, 7
      %v3820 = vsel %vm2031, %v3818, %v3819
      %v3821 = vsel %vm2031, %v3817, %v3818
      %v3822 = vsel %vm2031, %v3816, %v3817
      %v3823 = vsel %vm2031, %v3815, %v3816
      %v3824 = vsel %vm2031, %v3814, %v3815
      %v3825 = vsel %vm2031, %v3813, %v3814
      %v3826 = vsel %vm2031, %v3812, %v3813
      %v3827 = vsel %vm2031, %v3811, %v3812
      %v3828 = vsel %vm2031, %v3810, %v3811
      %v3829 = vsel %vm2031, %v3809, %v3810
      %v3830 = vsel %vm2031, %v3808, %v3809
      %v3831 = vsel %vm2031, %v3807, %v3808
      %v3832 = vsel %vm2031, %v3806, %v3807
      %v3833 = vsel %vm2031, %v3805, %v3806
      %v3834 = vsel %vm2031, %v3804, %v3805
      %v3835 = vsel %vm2031, %v3803, %v3804
      %v3836 = vsel %vm2031, %v3802, %v3803
      %v3837 = vsel %vm2031, %v3801, %v3802
      %v3838 = vsel %vm2031, %v3800, %v3801
      %v3839 = vsel %vm2031, %v3799, %v3800
      %v3840 = vsel %vm2031, %v3798, %v3799
      %v3841 = vsel %vm2031, %v3797, %v3798
      %v3842 = vsel %vm2031, %v3796, %v3797
      %v3843 = vsel %vm2031, %v3795, %v3796
      %v3844 = vsel %vm2031, %v3794, %v3795
      %v3845 = vsel %vm2031, %v3793, %v3794
      %v3846 = vsel %vm2031, %v3792, %v3793
      %v3847 = vsel %vm2031, %v3791, %v3792
      %v3848 = vsel %vm2031, %v3790, %v3791
      %v3849 = vsel %vm2031, %v3789, %v3790
      %v3850 = vsel %vm2031, %v3788, %v3789
      %v3851 = vsel %vm2031, %v3819, %v3788
      %v3852 = vsel %vm2070, %v3851, 0.0
      %v3853 = vsel %vm2071, %v3850, 0.0
      %v3854 = vsel %vm2070, %v3849, 0.0
      %v3855 = vsel %vm2071, %v3848, 0.0
      %v3856 = vsel %vm2070, %v3847, 0.0
      %v3857 = vsel %vm2071, %v3846, 0.0
      %v3858 = vsel %vm2070, %v3845, 0.0
      %v3859 = vsel %vm2071, %v3844, 0.0
      %v3860 = vsel %vm2070, %v3843, 0.0
      %v3861 = vsel %vm2071, %v3842, 0.0
      %v3862 = vsel %vm2070, %v3841, 0.0
      %v3863 = vsel %vm2071, %v3840, 0.0
      %v3864 = vsel %vm2070, %v3839, 0.0
      %v3865 = vsel %vm2071, %v3838, 0.0
      %v3866 = vsel %vm2070, %v3837, 0.0
      %v3867 = vsel %vm2071, %v3836, 0.0
      %v3868 = vsel %vm2070, %v3835, 0.0
      %v3869 = vsel %vm2071, %v3834, 0.0
      %v3870 = vsel %vm2070, %v3833, 0.0
      %v3871 = vsel %vm2071, %v3832, 0.0
      %v3872 = vsel %vm2070, %v3831, 0.0
      %v3873 = vsel %vm2071, %v3830, 0.0
      %v3874 = vsel %vm2070, %v3829, 0.0
      %v3875 = vsel %vm2071, %v3828, 0.0
      %v3876 = vsel %vm2070, %v3827, 0.0
      %v3877 = vsel %vm2071, %v3826, 0.0
      %v3878 = vsel %vm2070, %v3825, 0.0
      %v3879 = vsel %vm2071, %v3824, 0.0
      %v3880 = vsel %vm2070, %v3823, 0.0
      %v3881 = vsel %vm2071, %v3822, 0.0
      %v3882 = vsel %vm2070, %v3821, 0.0
      %v3883 = vsel %vm2071, %v3820, 0.0
      %v3884 = vrot.slane %v3756, 1
      %v3885 = vrot.slane %v3757, 1
      %v3886 = vrot.slane %v3758, 1
      %v3887 = vrot.slane %v3759, 1
      %v3888 = vrot.slane %v3760, 1
      %v3889 = vrot.slane %v3761, 1
      %v3890 = vrot.slane %v3762, 1
      %v3891 = vrot.slane %v3763, 1
      %v3892 = vrot.slane %v3764, 1
      %v3893 = vrot.slane %v3765, 1
      %v3894 = vrot.slane %v3766, 1
      %v3895 = vrot.slane %v3767, 1
      %v3896 = vrot.slane %v3768, 1
      %v3897 = vrot.slane %v3769, 1
      %v3898 = vrot.slane %v3770, 1
      %v3899 = vrot.slane %v3771, 1
      %v3900 = vrot.slane %v3772, 1
      %v3901 = vrot.slane %v3773, 1
      %v3902 = vrot.slane %v3774, 1
      %v3903 = vrot.slane %v3775, 1
      %v3904 = vrot.slane %v3776, 1
      %v3905 = vrot.slane %v3777, 1
      %v3906 = vrot.slane %v3778, 1
      %v3907 = vrot.slane %v3779, 1
      %v3908 = vrot.slane %v3780, 1
      %v3909 = vrot.slane %v3781, 1
      %v3910 = vrot.slane %v3782, 1
      %v3911 = vrot.slane %v3783, 1
      %v3912 = vrot.slane %v3784, 1
      %v3913 = vrot.slane %v3785, 1
      %v3914 = vrot.slane %v3786, 1
      %v3915 = vrot.slane %v3787, 1
      %v3916 = vsel %vm2146, %v3914, %v3915
      %v3917 = vsel %vm2146, %v3913, %v3914
      %v3918 = vsel %vm2146, %v3912, %v3913
      %v3919 = vsel %vm2146, %v3911, %v3912
      %v3920 = vsel %vm2146, %v3910, %v3911
      %v3921 = vsel %vm2146, %v3909, %v3910
      %v3922 = vsel %vm2146, %v3908, %v3909
      %v3923 = vsel %vm2146, %v3907, %v3908
      %v3924 = vsel %vm2146, %v3906, %v3907
      %v3925 = vsel %vm2146, %v3905, %v3906
      %v3926 = vsel %vm2146, %v3904, %v3905
      %v3927 = vsel %vm2146, %v3903, %v3904
      %v3928 = vsel %vm2146, %v3902, %v3903
      %v3929 = vsel %vm2146, %v3901, %v3902
      %v3930 = vsel %vm2146, %v3900, %v3901
      %v3931 = vsel %vm2146, %v3899, %v3900
      %v3932 = vsel %vm2146, %v3898, %v3899
      %v3933 = vsel %vm2146, %v3897, %v3898
      %v3934 = vsel %vm2146, %v3896, %v3897
      %v3935 = vsel %vm2146, %v3895, %v3896
      %v3936 = vsel %vm2146, %v3894, %v3895
      %v3937 = vsel %vm2146, %v3893, %v3894
      %v3938 = vsel %vm2146, %v3892, %v3893
      %v3939 = vsel %vm2146, %v3891, %v3892
      %v3940 = vsel %vm2146, %v3890, %v3891
      %v3941 = vsel %vm2146, %v3889, %v3890
      %v3942 = vsel %vm2146, %v3888, %v3889
      %v3943 = vsel %vm2146, %v3887, %v3888
      %v3944 = vsel %vm2146, %v3886, %v3887
      %v3945 = vsel %vm2146, %v3885, %v3886
      %v3946 = vsel %vm2146, %v3884, %v3885
      %v3947 = vsel %vm2146, %v3915, %v3884
      %v3948 = vsel %vm2185, %v3946, 0.0
      %v3949 = vsel %vm2186, %v3945, 0.0
      %v3950 = vsel %vm2185, %v3944, 0.0
      %v3951 = vsel %vm2186, %v3943, 0.0
      %v3952 = vsel %vm2185, %v3942, 0.0
      %v3953 = vsel %vm2186, %v3941, 0.0
      %v3954 = vsel %vm2185, %v3940, 0.0
      %v3955 = vsel %vm2186, %v3939, 0.0
      %v3956 = vsel %vm2185, %v3938, 0.0
      %v3957 = vsel %vm2186, %v3937, 0.0
      %v3958 = vsel %vm2185, %v3936, 0.0
      %v3959 = vsel %vm2186, %v3935, 0.0
      %v3960 = vsel %vm2185, %v3934, 0.0
      %v3961 = vsel %vm2186, %v3933, 0.0
      %v3962 = vsel %vm2185, %v3932, 0.0
      %v3963 = vsel %vm2186, %v3931, 0.0
      %v3964 = vsel %vm2185, %v3930, 0.0
      %v3965 = vsel %vm2186, %v3929, 0.0
      %v3966 = vsel %vm2185, %v3928, 0.0
      %v3967 = vsel %vm2186, %v3927, 0.0
      %v3968 = vsel %vm2185, %v3926, 0.0
      %v3969 = vsel %vm2186, %v3925, 0.0
      %v3970 = vsel %vm2185, %v3924, 0.0
      %v3971 = vsel %vm2186, %v3923, 0.0
      %v3972 = vsel %vm2185, %v3922, 0.0
      %v3973 = vsel %vm2186, %v3921, 0.0
      %v3974 = vsel %vm2185, %v3920, 0.0
      %v3975 = vsel %vm2186, %v3919, 0.0
      %v3976 = vsel %vm2185, %v3918, 0.0
      %v3977 = vsel %vm2186, %v3917, 0.0
      %v3978 = vsel %vm2185, %v3916, 0.0
      %v3979 = vsel %vm2186, %v3947, 0.0
      %v3980 = vadd.f32 %v3370, %v3852
      %v3981 = vadd.f32 %v3371, %v3853
      %v3982 = vadd.f32 %v3372, %v3854
      %v3983 = vadd.f32 %v3373, %v3855
      %v3984 = vadd.f32 %v3374, %v3856
      %v3985 = vadd.f32 %v3375, %v3857
      %v3986 = vadd.f32 %v3376, %v3858
      %v3987 = vadd.f32 %v3377, %v3859
      %v3988 = vadd.f32 %v3378, %v3860
      %v3989 = vadd.f32 %v3379, %v3861
      %v3990 = vadd.f32 %v3380, %v3862
      %v3991 = vadd.f32 %v3381, %v3863
      %v3992 = vadd.f32 %v3382, %v3864
      %v3993 = vadd.f32 %v3383, %v3865
      %v3994 = vadd.f32 %v3384, %v3866
      %v3995 = vadd.f32 %v3385, %v3867
      %v3996 = vadd.f32 %v3386, %v3868
      %v3997 = vadd.f32 %v3387, %v3869
      %v3998 = vadd.f32 %v3388, %v3870
      %v3999 = vadd.f32 %v3389, %v3871
      %v4000 = vadd.f32 %v3390, %v3872
      %v4001 = vadd.f32 %v3391, %v3873
      %v4002 = vadd.f32 %v3392, %v3874
      %v4003 = vadd.f32 %v3393, %v3875
      %v4004 = vadd.f32 %v3394, %v3876
      %v4005 = vadd.f32 %v3395, %v3877
      %v4006 = vadd.f32 %v3396, %v3878
      %v4007 = vadd.f32 %v3397, %v3879
      %v4008 = vadd.f32 %v3398, %v3880
      %v4009 = vadd.f32 %v3399, %v3881
      %v4010 = vadd.f32 %v3400, %v3882
      %v4011 = vadd.f32 %v3401, %v3883
      %v4012 = vadd.f32 %v3980, %v3948
      %v4013 = vadd.f32 %v3981, %v3949
      %v4014 = vadd.f32 %v3982, %v3950
      %v4015 = vadd.f32 %v3983, %v3951
      %v4016 = vadd.f32 %v3984, %v3952
      %v4017 = vadd.f32 %v3985, %v3953
      %v4018 = vadd.f32 %v3986, %v3954
      %v4019 = vadd.f32 %v3987, %v3955
      %v4020 = vadd.f32 %v3988, %v3956
      %v4021 = vadd.f32 %v3989, %v3957
      %v4022 = vadd.f32 %v3990, %v3958
      %v4023 = vadd.f32 %v3991, %v3959
      %v4024 = vadd.f32 %v3992, %v3960
      %v4025 = vadd.f32 %v3993, %v3961
      %v4026 = vadd.f32 %v3994, %v3962
      %v4027 = vadd.f32 %v3995, %v3963
      %v4028 = vadd.f32 %v3996, %v3964
      %v4029 = vadd.f32 %v3997, %v3965
      %v4030 = vadd.f32 %v3998, %v3966
      %v4031 = vadd.f32 %v3999, %v3967
      %v4032 = vadd.f32 %v4000, %v3968
      %v4033 = vadd.f32 %v4001, %v3969
      %v4034 = vadd.f32 %v4002, %v3970
      %v4035 = vadd.f32 %v4003, %v3971
      %v4036 = vadd.f32 %v4004, %v3972
      %v4037 = vadd.f32 %v4005, %v3973
      %v4038 = vadd.f32 %v4006, %v3974
      %v4039 = vadd.f32 %v4007, %v3975
      %v4040 = vadd.f32 %v4008, %v3976
      %v4041 = vadd.f32 %v4009, %v3977
      %v4042 = vadd.f32 %v4010, %v3978
      %v4043 = vadd.f32 %v4011, %v3979
      %v4044 = vld [vmem:[%s6] sm:$0x1]
      %v4046 = vperm.slane %v4044, 0
      %v4048 = vadd.f32 %v4012, %v4046
      %v4049 = vadd.f32 %v4013, %v4046
      %v4050 = vadd.f32 %v4014, %v4046
      %v4051 = vadd.f32 %v4015, %v4046
      %v4052 = vadd.f32 %v4016, %v4046
      %v4053 = vadd.f32 %v4017, %v4046
      %v4054 = vadd.f32 %v4018, %v4046
      %v4055 = vadd.f32 %v4019, %v4046
      %v4056 = vadd.f32 %v4020, %v4046
      %v4057 = vadd.f32 %v4021, %v4046
      %v4058 = vadd.f32 %v4022, %v4046
      %v4059 = vadd.f32 %v4023, %v4046
      %v4060 = vadd.f32 %v4024, %v4046
      %v4061 = vadd.f32 %v4025, %v4046
      %v4062 = vadd.f32 %v4026, %v4046
      %v4063 = vadd.f32 %v4027, %v4046
      %v4064 = vadd.f32 %v4028, %v4046
      %v4065 = vadd.f32 %v4029, %v4046
      %v4066 = vadd.f32 %v4030, %v4046
      %v4067 = vadd.f32 %v4031, %v4046
      %v4068 = vadd.f32 %v4032, %v4046
      %v4069 = vadd.f32 %v4033, %v4046
      %v4070 = vadd.f32 %v4034, %v4046
      %v4071 = vadd.f32 %v4035, %v4046
      %v4072 = vadd.f32 %v4036, %v4046
      %v4073 = vadd.f32 %v4037, %v4046
      %v4074 = vadd.f32 %v4038, %v4046
      %v4075 = vadd.f32 %v4039, %v4046
      %v4076 = vadd.f32 %v4040, %v4046
      %v4077 = vadd.f32 %v4041, %v4046
      %v4078 = vadd.f32 %v4042, %v4046
      %v4079 = vadd.f32 %v4043, %v4046
      %4080 = vst.msk [vmem:[%s455] sm:$0xff] %vm461, %v4048
      %4081 = vst.msk [vmem:[%s455 + $0x8] sm:$0xff] %vm461, %v4049
      %4082 = vst.msk [vmem:[%s455 + $0x10] sm:$0xff] %vm461, %v4050
      %4083 = vst.msk [vmem:[%s455 + $0x18] sm:$0xff] %vm461, %v4051
      %4084 = vst.msk [vmem:[%s455 + $0x20] sm:$0xff] %vm461, %v4052
      %4085 = vst.msk [vmem:[%s455 + $0x28] sm:$0xff] %vm461, %v4053
      %4086 = vst.msk [vmem:[%s455 + $0x30] sm:$0xff] %vm461, %v4054
      %4087 = vst.msk [vmem:[%s455 + $0x38] sm:$0xff] %vm461, %v4055
      %4088 = vst.msk [vmem:[%s455 + $0x40] sm:$0xff] %vm461, %v4056
      %4089 = vst.msk [vmem:[%s455 + $0x48] sm:$0xff] %vm461, %v4057
      %4090 = vst.msk [vmem:[%s455 + $0x50] sm:$0xff] %vm461, %v4058
      %4091 = vst.msk [vmem:[%s455 + $0x58] sm:$0xff] %vm461, %v4059
      %4092 = vst.msk [vmem:[%s455 + $0x60] sm:$0xff] %vm461, %v4060
      %4093 = vst.msk [vmem:[%s455 + $0x68] sm:$0xff] %vm461, %v4061
      %4094 = vst.msk [vmem:[%s455 + $0x70] sm:$0xff] %vm461, %v4062
      %4095 = vst.msk [vmem:[%s455 + $0x78] sm:$0xff] %vm461, %v4063
      %4096 = vst.msk [vmem:[%s455 + $0x80] sm:$0xff] %vm461, %v4064
      %4097 = vst.msk [vmem:[%s455 + $0x88] sm:$0xff] %vm461, %v4065
      %4098 = vst.msk [vmem:[%s455 + $0x90] sm:$0xff] %vm461, %v4066
      %4099 = vst.msk [vmem:[%s455 + $0x98] sm:$0xff] %vm461, %v4067
      %4100 = vst.msk [vmem:[%s455 + $0xa0] sm:$0xff] %vm461, %v4068
      %4101 = vst.msk [vmem:[%s455 + $0xa8] sm:$0xff] %vm461, %v4069
      %4102 = vst.msk [vmem:[%s455 + $0xb0] sm:$0xff] %vm461, %v4070
      %4103 = vst.msk [vmem:[%s455 + $0xb8] sm:$0xff] %vm461, %v4071
      %4104 = vst.msk [vmem:[%s455 + $0xc0] sm:$0xff] %vm461, %v4072
      %4105 = vst.msk [vmem:[%s455 + $0xc8] sm:$0xff] %vm461, %v4073
      %4106 = vst.msk [vmem:[%s455 + $0xd0] sm:$0xff] %vm461, %v4074
      %4107 = vst.msk [vmem:[%s455 + $0xd8] sm:$0xff] %vm461, %v4075
      %4108 = vst.msk [vmem:[%s455 + $0xe0] sm:$0xff] %vm461, %v4076
      %4109 = vst.msk [vmem:[%s455 + $0xe8] sm:$0xff] %vm461, %v4077
      %4110 = vst.msk [vmem:[%s455 + $0xf0] sm:$0xff] %vm461, %v4078
      %4111 = vst.msk [vmem:[%s455 + $0xf8] sm:$0xff] %vm461, %v4079
      %s4112 = smul.u32 16, %s23
      %p4113 = scmp.lt.s32.totalorder %s22, 1
      %s4114 = scalar_select %p4113, %s22, 1
      %p4115 = scmp.lt.s32.totalorder %s4112, 15
      %s4116 = scalar_select %p4115, %s4112, 15
      %s4117 = smul.addr %s4116, 2
      %s4118 = smul.addr %s4114, 32
      %s4119 = sadd.s32 %s4117, %s4118
      %s4120 = smul.addr %s4119, 8
      %s4121 = scalar_lea.vmem %s7, %s4120
      // Predicated region
      $region57: #{tpu_custom_call.1} parent=47 // pred_check
        %p4122 = pneg %p234
      $region58: #{tpu_custom_call.1} parent=47 // pred_check_branch
        %4124 = sbr.rel (%p4122) target = $region60
      $region59: #{tpu_custom_call.1} parent=47 // pred_region
        %s4125 = smul.u32 16, %s23
      $region60: #{tpu_custom_call.1} parent=47 // pred_fallthru
        _
    $region48: #{tpu_custom_call.1} parent=5 // pred_fallthru
      _
    %p4126 = scmp.le.s32.totalorder 2, %s13
    // Predicated region
    $region61: #{tpu_custom_call.1} parent=5 // pred_check
      %p4127 = pneg %p4126
    $region62: #{tpu_custom_call.1} parent=5 // pred_check_branch
      %4129 = sbr.rel (%p4127) target = $region64
    $region63: #{tpu_custom_call.1} parent=5 // pred_region
      %s4130 = ssub.s32 %s13, 2
      // Predicated region
      $region65: #{tpu_custom_call.1} parent=63 // pred_check
        %p4131 = pneg %p240
      $region66: #{tpu_custom_call.1} parent=63 // pred_check_branch
        %4133 = sbr.rel (%p4131) target = $region68
      $region67: #{tpu_custom_call.1} parent=63 // pred_region
        %s4134 = smul.u32 16, %s25
        %p4135 = scmp.lt.s32.totalorder %s24, 1
        %s4136 = scalar_select %p4135, %s24, 1
        %p4137 = scmp.lt.s32.totalorder %s4134, 15
        %s4138 = scalar_select %p4137, %s4134, 15
        %s4139 = smul.addr %s4138, 2
        %s4140 = smul.addr %s4136, 32
        %s4141 = sadd.s32 %s4139, %s4140
        %s4142 = smul.addr %s4141, 8
        %s4143 = scalar_lea.vmem %s7, %s4142
      $region68: #{tpu_custom_call.1} parent=63 // pred_fallthru
        _
    $region64: #{tpu_custom_call.1} parent=5 // pred_fallthru
      _
  $region6: #{tpu_custom_call.1} parent=0 // loop_footer
    %s17 = sadd.s32 1, %s13
  $region7: #{tpu_custom_call.1} parent=0 // loop_footer_branch
    %12 = sbr.rel target = $region3
  $region8: #{tpu_custom_call.1} parent=0 // loop_exit
    _

</llo_original>
